<compile_context>
chip_gen: v7x
topology: tpu7x:2x2x1
jax: 0.10.0
libtpu: 0.0.40
codegen_flags: <defaults>
</compile_context>

<pallas_src>
import functools

import jax
import jax.numpy as jnp
from jax.experimental import pallas as pl
from jax.experimental.pallas import tpu as pltpu

_EPS = 1e-5
_LANES = 128


def _round_up(x, m):
    return ((x + m - 1) // m) * m


def _default_vmem_limit():
    """Generation-aware scoped-VMEM limit (leave headroom for double buffers)."""
    try:
        cap = int(pltpu.get_tpu_info().vmem_capacity_bytes)
    except Exception:
        cap = 128 * 1024 * 1024
    return max(32 * 1024 * 1024, min((cap * 3) // 4, 100 * 1024 * 1024))


_VMEM_LIMIT = _default_vmem_limit()


# --------------------------------------------------------------------------
# Kernels
# --------------------------------------------------------------------------
def conv_stats_kernel(xp_ref, w_ref, y_ref, sum_ref, sq_ref, col_ref, *, H, W):
    """3x3 conv (pad=1, bias=False) as ONE bf16 matmul + BN partial stats.

    xp_ref : [1, H+2, W+2, Cin]  zero-padded NHWC input (one image), f32
    w_ref  : [9*Cin, CP]         bf16 conv weights, tap-major rows
    y_ref  : [1, H*W, CP]        raw conv output (pre-BN), bf16
    sum_ref: [1, 1, CP]          per-image sum of the bf16-rounded output, f32
    sq_ref : [1, 1, CP]          per-image sum of squares, f32
    col_ref: [H*W, 9*Cin]        bf16 im2col VMEM scratch
    """
    cin = xp_ref.shape[-1]
    xp = xp_ref[0].astype(jnp.bfloat16)           # cast once, hoisted out of taps
    for dy in range(3):
        for dx in range(3):
            t = dy * 3 + dx
            col_ref[:, t * cin:(t + 1) * cin] = (
                xp[dy:dy + H, dx:dx + W, :].reshape(H * W, cin))
    # Single K = 9*Cin contraction: accumulation stays inside the MXU.
    acc = jnp.dot(col_ref[...], w_ref[...], preferred_element_type=jnp.float32)
    yb = acc.astype(y_ref.dtype)
    y_ref[0] = yb
    # BN stats from the same (bf16-rounded) values that get normalised later.
    yf = yb.astype(jnp.float32)
    sum_ref[0] = jnp.sum(yf, axis=0, keepdims=True)
    sq_ref[0] = jnp.sum(yf * yf, axis=0, keepdims=True)


def bnrelu_conv_stats_kernel(y1_ref, scale_ref, shift_ref, w_ref,
                             y2_ref, sum_ref, sq_ref,
                             pad_ref, col_ref, *, H, W):
    """Fused BN1(affine)+ReLU -> zero-pad in VMEM -> 3x3 conv (ONE matmul) -> BN2 stats.

    y1_ref   : [1, H*W, CP]   block-1 raw conv output, bf16
    scale_ref: [1, CP]        gamma1 * rsqrt(var1 + eps), f32
    shift_ref: [1, CP]        beta1 - mean1 * scale1, f32
    w_ref    : [9*CP, CP]     bf16 conv-2 weights, tap-major rows
    y2_ref   : [1, H*W, CP]   block-2 raw conv output, bf16
    sum_ref  : [1, 1, CP]     per-image sum of the bf16-rounded output, f32
    sq_ref   : [1, 1, CP]     per-image sum of squares, f32
    pad_ref  : [H+2, W+2, CP] bf16 VMEM scratch (spatially padded activation)
    col_ref  : [H*W, 9*CP]    bf16 im2col VMEM scratch
    """
    cp = y2_ref.shape[-1]
    # BN1 affine + ReLU entirely in VMEM (no padded f32 intermediate in HBM).
    a = jnp.maximum(
        y1_ref[0].astype(jnp.float32) * scale_ref[...] + shift_ref[...], 0.0)
    z = a.reshape(H, W, cp).astype(pad_ref.dtype)

    # Zero only the four 1-pixel halo strips (every image), store interior once.
    zrow = jnp.zeros((1, W + 2, cp), pad_ref.dtype)
    zcol = jnp.zeros((H, 1, cp), pad_ref.dtype)
    pad_ref[0:1, :, :] = zrow
    pad_ref[H + 1:H + 2, :, :] = zrow
    pad_ref[1:H + 1, 0:1, :] = zcol
    pad_ref[1:H + 1, W + 1:W + 2, :] = zcol
    pad_ref[1:H + 1, 1:W + 1, :] = z

    xp = pad_ref[...]                              # already bf16, cast-free taps
    for dy in range(3):
        for dx in range(3):
            t = dy * 3 + dx
            col_ref[:, t * cp:(t + 1) * cp] = (
                xp[dy:dy + H, dx:dx + W, :].reshape(H * W, cp))
    acc = jnp.dot(col_ref[...], w_ref[...], preferred_element_type=jnp.float32)
    yb = acc.astype(y2_ref.dtype)
    y2_ref[0] = yb
    yf = yb.astype(jnp.float32)
    sum_ref[0] = jnp.sum(yf, axis=0, keepdims=True)
    sq_ref[0] = jnp.sum(yf * yf, axis=0, keepdims=True)


def bn_relu_kernel(y_ref, scale_ref, shift_ref, o_ref):
    """Final folded BatchNorm affine + ReLU (lane-dense stores).

    y_ref    : [1, H*W, CP]  raw conv output, bf16
    scale_ref: [1, CP]       f32
    shift_ref: [1, CP]       f32
    o_ref    : [1, H*W, CP]  f32
    """
    y = y_ref[0].astype(jnp.float32)
    o_ref[0] = jnp.maximum(y * scale_ref[...] + shift_ref[...],
                           0.0).astype(o_ref.dtype)


# --------------------------------------------------------------------------
# Wrapper glue
# --------------------------------------------------------------------------
def _fold_bn_params(ssum, ssq, gamma_p, beta_p, count):
    """Reduce per-image partial stats and fold BN into (scale, shift)."""
    s = jnp.sum(ssum, axis=0)[0]                     # [CP]
    q = jnp.sum(ssq, axis=0)[0]                      # [CP]
    mean = s / count
    var = jnp.maximum(q / count - mean * mean, 0.0)  # biased variance (train mode)
    inv = jax.lax.rsqrt(var + _EPS)
    scale = gamma_p.reshape(-1) * inv
    shift = beta_p.reshape(-1) - mean * scale
    return scale.reshape(1, -1), shift.reshape(1, -1)


def _double_conv(x_nchw, w1, g1, b1, w2, g2, b2):
    """DoubleConv forward. x_nchw: [N, Cin, H, W] (PyTorch layout)."""
    N, Cin, H, W = x_nchw.shape
    Cout = w1.shape[-1]
    CP = _round_up(Cout, _LANES)
    HW = H * W
    Hp, Wp = H + 2, W + 2

    # Lane-pad channels to 128; padded channels stay exactly zero end-to-end.
    w1p = jnp.pad(w1, ((0, 0), (0, 0), (0, 0), (0, CP - Cout)))
    w2p = jnp.pad(w2, ((0, 0), (0, 0), (0, CP - w2.shape[2]), (0, CP - Cout)))
    g1p = jnp.pad(g1.reshape(1, -1), ((0, 0), (0, CP - Cout)))
    b1p = jnp.pad(b1.reshape(1, -1), ((0, 0), (0, CP - Cout)))
    g2p = jnp.pad(g2.reshape(1, -1), ((0, 0), (0, CP - Cout)))
    b2p = jnp.pad(b2.reshape(1, -1), ((0, 0), (0, CP - Cout)))

    # Tap-major [9*Cin, CP] bf16 weight slabs for the single-matmul contraction.
    w1t = w1p.reshape(9 * Cin, CP).astype(jnp.bfloat16)
    w2t = w2p.reshape(9 * CP, CP).astype(jnp.bfloat16)

    x = jnp.transpose(x_nchw, (0, 2, 3, 1))                    # NCHW -> NHWC
    xp = jnp.pad(x, ((0, 0), (1, 1), (1, 1), (0, 0)))          # spatial pad=1

    cparams = pltpu.CompilerParams(
        dimension_semantics=("parallel",), vmem_limit_bytes=_VMEM_LIMIT)

    # ---- Pass 1: conv1 (one matmul) + BN1 partial stats --------------------
    y1, s1, q1 = pl.pallas_call(
        functools.partial(conv_stats_kernel, H=H, W=W),
        out_shape=(
            jax.ShapeDtypeStruct((N, HW, CP), jnp.bfloat16),
            jax.ShapeDtypeStruct((N, 1, CP), jnp.float32),
            jax.ShapeDtypeStruct((N, 1, CP), jnp.float32),
        ),
        grid=(N,),
        in_specs=[
            pl.BlockSpec((1, Hp, Wp, Cin), lambda n: (n, 0, 0, 0)),
            # TODO(synk): mark this constant-index weight spec single-buffered
            # via pipeline_mode=pl.Buffered(1) for a little VMEM headroom.
            pl.BlockSpec((9 * Cin, CP), lambda n: (0, 0)),
        ],
        out_specs=(
            pl.BlockSpec((1, HW, CP), lambda n: (n, 0, 0)),
            pl.BlockSpec((1, 1, CP), lambda n: (n, 0, 0)),
            pl.BlockSpec((1, 1, CP), lambda n: (n, 0, 0)),
        ),
        scratch_shapes=[pltpu.VMEM((HW, 9 * Cin), jnp.bfloat16)],
        compiler_params=cparams,
    )(xp, w1t)

    # Tiny [CP]-sized reduction + fold (glue, not worth a kernel).
    scale1, shift1 = _fold_bn_params(s1, q1, g1p, b1p, N * HW)

    # ---- Pass 2: fused BN1+ReLU -> conv2 (one matmul) + BN2 partial stats ---
    y2, s2, q2 = pl.pallas_call(
        functools.partial(bnrelu_conv_stats_kernel, H=H, W=W),
        out_shape=(
            jax.ShapeDtypeStruct((N, HW, CP), jnp.bfloat16),
            jax.ShapeDtypeStruct((N, 1, CP), jnp.float32),
            jax.ShapeDtypeStruct((N, 1, CP), jnp.float32),
        ),
        grid=(N,),
        in_specs=[
            pl.BlockSpec((1, HW, CP), lambda n: (n, 0, 0)),
            pl.BlockSpec((1, CP), lambda n: (0, 0)),
            pl.BlockSpec((1, CP), lambda n: (0, 0)),
            pl.BlockSpec((9 * CP, CP), lambda n: (0, 0)),
        ],
        out_specs=(
            pl.BlockSpec((1, HW, CP), lambda n: (n, 0, 0)),
            pl.BlockSpec((1, 1, CP), lambda n: (n, 0, 0)),
            pl.BlockSpec((1, 1, CP), lambda n: (n, 0, 0)),
        ),
        scratch_shapes=[
            pltpu.VMEM((Hp, Wp, CP), jnp.bfloat16),     # padded activation
            pltpu.VMEM((HW, 9 * CP), jnp.bfloat16),     # im2col slab
        ],
        compiler_params=cparams,
    )(y1, scale1, shift1, w2t)

    scale2, shift2 = _fold_bn_params(s2, q2, g2p, b2p, N * HW)

    # ---- Pass 3: BN2 affine + ReLU (lane-dense f32 stores) ------------------
    out = pl.pallas_call(
        bn_relu_kernel,
        out_shape=jax.ShapeDtypeStruct((N, HW, CP), jnp.float32),
        grid=(N,),
        in_specs=[
            pl.BlockSpec((1, HW, CP), lambda n: (n, 0, 0)),
            pl.BlockSpec((1, CP), lambda n: (0, 0)),
            pl.BlockSpec((1, CP), lambda n: (0, 0)),
        ],
        out_specs=pl.BlockSpec((1, HW, CP), lambda n: (n, 0, 0)),
        compiler_params=cparams,
    )(y2, scale2, shift2)

    out = out.reshape(N, H, W, CP)[..., :Cout]
    return jnp.transpose(out, (0, 3, 1, 2))                    # NHWC -> NCHW


double_conv = jax.jit(_double_conv)


# --------------------------------------------------------------------------
# Pure-JAX reference (f32 lax conv + train-mode BN + ReLU)
# --------------------------------------------------------------------------
def _reference(x_nchw, w1, g1, b1, w2, g2, b2):
    def block(x, w_hwio, g, b):
        y = jax.lax.conv_general_dilated(
            x, w_hwio, window_strides=(1, 1), padding="SAME",
            dimension_numbers=("NCHW", "HWIO", "NCHW"))
        mean = jnp.mean(y, axis=(0, 2, 3), keepdims=True)
        var = jnp.mean(jnp.square(y - mean), axis=(0, 2, 3), keepdims=True)
        y = (y - mean) * jax.lax.rsqrt(var + _EPS)
        y = y * g.reshape(1, -1, 1, 1) + b.reshape(1, -1, 1, 1)
        return jnp.maximum(y, 0.0)
    return block(block(x_nchw, w1, g1, b1), w2, g2, b2)


if __name__ == "__main__":
    N, Cin, Cout, H, W = 2, 4, 8, 16, 16

    key = jax.random.PRNGKey(0)
    kx, kw1, kw2 = jax.random.split(key, 3)

    # Input in PyTorch NCHW layout.
    x = jax.random.normal(kx, (N, Cin, H, W), jnp.float32)

    # Conv weights stored as [3, 3, Cin, Cout] (HWIO); equivalent to a
    # transposed torch [Cout, Cin, 3, 3] tensor. bias=False per the module.
    w1 = jax.random.normal(kw1, (3, 3, Cin, Cout), jnp.float32) * 0.1
    w2 = jax.random.normal(kw2, (3, 3, Cout, Cout), jnp.float32) * 0.1

    # BatchNorm2d affine params at PyTorch default init (weight=1, bias=0).
    g1 = jnp.ones((1, Cout), jnp.float32)
    b1 = jnp.zeros((1, Cout), jnp.float32)
    g2 = jnp.ones((1, Cout), jnp.float32)
    b2 = jnp.zeros((1, Cout), jnp.float32)

    y = double_conv(x, w1, g1, b1, w2, g2, b2)
    y = jax.block_until_ready(y)

    y_ref = _reference(x, w1, g1, b1, w2, g2, b2)
    assert y.shape == (N, Cout, H, W)
    # Tolerance accounts for bf16 MXU operands (f32 accumulation & BN math).
    assert jnp.allclose(y, y_ref, atol=3e-2, rtol=3e-2), float(
        jnp.max(jnp.abs(y - y_ref)))

    print("KERNEL_OK")
</pallas_src>

<mosaic_0001>
module attributes {stable_mosaic.version = 11 : i64} {
  func.func @conv_stats_kernel(%arg0: i32, %arg1: memref<1x18x18x4xf32, #tpu.memory_space<vmem>>, %arg2: memref<36x128xbf16, #tpu.memory_space<vmem>>, %arg3: memref<1x256x128xbf16, #tpu.memory_space<vmem>>, %arg4: memref<1x1x128xf32, #tpu.memory_space<vmem>>, %arg5: memref<1x1x128xf32, #tpu.memory_space<vmem>>, %arg6: memref<256x36xbf16, #tpu.memory_space<vmem>>) attributes {dimension_semantics = [#tpu.dimension_semantics<parallel>], iteration_bounds = array<i64: 2>, scalar_prefetch = 0 : i64, scratch_operands = 1 : i64, tpu.core_type = #tpu.core_type<tc>, window_params = [{transform_indices = @transform_0, window_bounds = array<i64: 1, 18, 18, 4>}, {pipeline_mode = #tpu.pipeline_mode<synchronous>, transform_indices = @transform_1, window_bounds = array<i64: 36, 128>}, {transform_indices = @transform_2, window_bounds = array<i64: 1, 256, 128>}, {transform_indices = @transform_3, window_bounds = array<i64: 1, 1, 128>}, {transform_indices = @transform_4, window_bounds = array<i64: 1, 1, 128>}]} {
    %c0 = arith.constant 0 : index
    %c0_0 = arith.constant 0 : index
    %c0_1 = arith.constant 0 : index
    %c0_2 = arith.constant 0 : index
    %0 = vector.load %arg1[%c0, %c0_0, %c0_1, %c0_2] : memref<1x18x18x4xf32, #tpu.memory_space<vmem>>, vector<1x18x18x4xf32>
    %1 = vector.shape_cast %0 : vector<1x18x18x4xf32> to vector<18x18x4xf32>
    %2 = arith.truncf %1 : vector<18x18x4xf32> to vector<18x18x4xbf16>
    %3 = vector.extract_strided_slice %2 {offsets = [0, 0, 0], sizes = [16, 16, 4], strides = [1, 1, 1]} : vector<18x18x4xbf16> to vector<16x16x4xbf16>
    %4 = vector.shape_cast %3 : vector<16x16x4xbf16> to vector<256x4xbf16>
    %c0_3 = arith.constant 0 : index
    %c0_4 = arith.constant 0 : index
    %5 = vector.load %arg6[%c0_3, %c0_4] : memref<256x36xbf16, #tpu.memory_space<vmem>>, vector<256x4xbf16>
    tpu.vector_store %arg6[%c0_3, %c0_4], %4 {strides = array<i32>} : memref<256x36xbf16, #tpu.memory_space<vmem>>, vector<256x4xbf16>,
    %6 = vector.extract_strided_slice %2 {offsets = [0, 1, 0], sizes = [16, 16, 4], strides = [1, 1, 1]} : vector<18x18x4xbf16> to vector<16x16x4xbf16>
    %7 = vector.shape_cast %6 : vector<16x16x4xbf16> to vector<256x4xbf16>
    %c0_5 = arith.constant 0 : index
    %c4 = arith.constant 4 : index
    %8 = vector.load %arg6[%c0_5, %c4] : memref<256x36xbf16, #tpu.memory_space<vmem>>, vector<256x4xbf16>
    tpu.vector_store %arg6[%c0_5, %c4], %7 {strides = array<i32>} : memref<256x36xbf16, #tpu.memory_space<vmem>>, vector<256x4xbf16>,
    %9 = vector.extract_strided_slice %2 {offsets = [0, 2, 0], sizes = [16, 16, 4], strides = [1, 1, 1]} : vector<18x18x4xbf16> to vector<16x16x4xbf16>
    %10 = vector.shape_cast %9 : vector<16x16x4xbf16> to vector<256x4xbf16>
    %c0_6 = arith.constant 0 : index
    %c8 = arith.constant 8 : index
    %11 = vector.load %arg6[%c0_6, %c8] : memref<256x36xbf16, #tpu.memory_space<vmem>>, vector<256x4xbf16>
    tpu.vector_store %arg6[%c0_6, %c8], %10 {strides = array<i32>} : memref<256x36xbf16, #tpu.memory_space<vmem>>, vector<256x4xbf16>,
    %12 = vector.extract_strided_slice %2 {offsets = [1, 0, 0], sizes = [16, 16, 4], strides = [1, 1, 1]} : vector<18x18x4xbf16> to vector<16x16x4xbf16>
    %13 = vector.shape_cast %12 : vector<16x16x4xbf16> to vector<256x4xbf16>
    %c0_7 = arith.constant 0 : index
    %c12 = arith.constant 12 : index
    %14 = vector.load %arg6[%c0_7, %c12] : memref<256x36xbf16, #tpu.memory_space<vmem>>, vector<256x4xbf16>
    tpu.vector_store %arg6[%c0_7, %c12], %13 {strides = array<i32>} : memref<256x36xbf16, #tpu.memory_space<vmem>>, vector<256x4xbf16>,
    %15 = vector.extract_strided_slice %2 {offsets = [1, 1, 0], sizes = [16, 16, 4], strides = [1, 1, 1]} : vector<18x18x4xbf16> to vector<16x16x4xbf16>
    %16 = vector.shape_cast %15 : vector<16x16x4xbf16> to vector<256x4xbf16>
    %c0_8 = arith.constant 0 : index
    %c16 = arith.constant 16 : index
    %17 = vector.load %arg6[%c0_8, %c16] : memref<256x36xbf16, #tpu.memory_space<vmem>>, vector<256x4xbf16>
    tpu.vector_store %arg6[%c0_8, %c16], %16 {strides = array<i32>} : memref<256x36xbf16, #tpu.memory_space<vmem>>, vector<256x4xbf16>,
    %18 = vector.extract_strided_slice %2 {offsets = [1, 2, 0], sizes = [16, 16, 4], strides = [1, 1, 1]} : vector<18x18x4xbf16> to vector<16x16x4xbf16>
    %19 = vector.shape_cast %18 : vector<16x16x4xbf16> to vector<256x4xbf16>
    %c0_9 = arith.constant 0 : index
    %c20 = arith.constant 20 : index
    %20 = vector.load %arg6[%c0_9, %c20] : memref<256x36xbf16, #tpu.memory_space<vmem>>, vector<256x4xbf16>
    tpu.vector_store %arg6[%c0_9, %c20], %19 {strides = array<i32>} : memref<256x36xbf16, #tpu.memory_space<vmem>>, vector<256x4xbf16>,
    %21 = vector.extract_strided_slice %2 {offsets = [2, 0, 0], sizes = [16, 16, 4], strides = [1, 1, 1]} : vector<18x18x4xbf16> to vector<16x16x4xbf16>
    %22 = vector.shape_cast %21 : vector<16x16x4xbf16> to vector<256x4xbf16>
    %c0_10 = arith.constant 0 : index
    %c24 = arith.constant 24 : index
    %23 = vector.load %arg6[%c0_10, %c24] : memref<256x36xbf16, #tpu.memory_space<vmem>>, vector<256x4xbf16>
    tpu.vector_store %arg6[%c0_10, %c24], %22 {strides = array<i32>} : memref<256x36xbf16, #tpu.memory_space<vmem>>, vector<256x4xbf16>,
    %24 = vector.extract_strided_slice %2 {offsets = [2, 1, 0], sizes = [16, 16, 4], strides = [1, 1, 1]} : vector<18x18x4xbf16> to vector<16x16x4xbf16>
    %25 = vector.shape_cast %24 : vector<16x16x4xbf16> to vector<256x4xbf16>
    %c0_11 = arith.constant 0 : index
    %c28 = arith.constant 28 : index
    %26 = vector.load %arg6[%c0_11, %c28] : memref<256x36xbf16, #tpu.memory_space<vmem>>, vector<256x4xbf16>
    tpu.vector_store %arg6[%c0_11, %c28], %25 {strides = array<i32>} : memref<256x36xbf16, #tpu.memory_space<vmem>>, vector<256x4xbf16>,
    %27 = vector.extract_strided_slice %2 {offsets = [2, 2, 0], sizes = [16, 16, 4], strides = [1, 1, 1]} : vector<18x18x4xbf16> to vector<16x16x4xbf16>
    %28 = vector.shape_cast %27 : vector<16x16x4xbf16> to vector<256x4xbf16>
    %c0_12 = arith.constant 0 : index
    %c32 = arith.constant 32 : index
    %29 = vector.load %arg6[%c0_12, %c32] : memref<256x36xbf16, #tpu.memory_space<vmem>>, vector<256x4xbf16>
    tpu.vector_store %arg6[%c0_12, %c32], %28 {strides = array<i32>} : memref<256x36xbf16, #tpu.memory_space<vmem>>, vector<256x4xbf16>,
    %c0_13 = arith.constant 0 : index
    %c0_14 = arith.constant 0 : index
    %30 = vector.load %arg6[%c0_13, %c0_14] : memref<256x36xbf16, #tpu.memory_space<vmem>>, vector<256x36xbf16>
    %c0_15 = arith.constant 0 : index
    %c0_16 = arith.constant 0 : index
    %31 = vector.load %arg2[%c0_15, %c0_16] : memref<36x128xbf16, #tpu.memory_space<vmem>>, vector<36x128xbf16>
    %cst = arith.constant dense<0.000000e+00> : vector<256x128xf32>
    %32 = tpu.matmul %30, %31, %cst {dimension_numbers = #tpu.dot_dimension_numbers<[1], [0], [0], [1], [0, 0, 1, 1], [], []>} : vector<256x36xbf16>, vector<36x128xbf16>, vector<256x128xf32> -> vector<256x128xf32>
    %33 = arith.truncf %32 : vector<256x128xf32> to vector<256x128xbf16>
    %c0_17 = arith.constant 0 : index
    %c0_18 = arith.constant 0 : index
    %c0_19 = arith.constant 0 : index
    %34 = vector.load %arg3[%c0_17, %c0_18, %c0_19] : memref<1x256x128xbf16, #tpu.memory_space<vmem>>, vector<1x256x128xbf16>
    %35 = vector.shape_cast %34 : vector<1x256x128xbf16> to vector<256x128xbf16>
    %36 = vector.shape_cast %33 : vector<256x128xbf16> to vector<1x256x128xbf16>
    tpu.vector_store %arg3[%c0_17, %c0_18, %c0_19], %36 {strides = array<i32>} : memref<1x256x128xbf16, #tpu.memory_space<vmem>>, vector<1x256x128xbf16>,
    %37 = arith.extf %33 : vector<256x128xbf16> to vector<256x128xf32>
    %cst_20 = arith.constant dense<0.000000e+00> : vector<128xf32>
    %38 = vector.multi_reduction <add>, %37, %cst_20 [0] : vector<256x128xf32> to vector<128xf32>
    %39 = vector.shape_cast %38 : vector<128xf32> to vector<1x128xf32>
    %c0_21 = arith.constant 0 : index
    %c0_22 = arith.constant 0 : index
    %c0_23 = arith.constant 0 : index
    %40 = vector.load %arg4[%c0_21, %c0_22, %c0_23] : memref<1x1x128xf32, #tpu.memory_space<vmem>>, vector<1x1x128xf32>
    %41 = vector.shape_cast %40 : vector<1x1x128xf32> to vector<1x128xf32>
    %42 = vector.shape_cast %39 : vector<1x128xf32> to vector<1x1x128xf32>
    tpu.vector_store %arg4[%c0_21, %c0_22, %c0_23], %42 {strides = array<i32>} : memref<1x1x128xf32, #tpu.memory_space<vmem>>, vector<1x1x128xf32>,
    %43 = arith.mulf %37, %37 : vector<256x128xf32>
    %cst_24 = arith.constant dense<0.000000e+00> : vector<128xf32>
    %44 = vector.multi_reduction <add>, %43, %cst_24 [0] : vector<256x128xf32> to vector<128xf32>
    %45 = vector.shape_cast %44 : vector<128xf32> to vector<1x128xf32>
    %c0_25 = arith.constant 0 : index
    %c0_26 = arith.constant 0 : index
    %c0_27 = arith.constant 0 : index
    %46 = vector.load %arg5[%c0_25, %c0_26, %c0_27] : memref<1x1x128xf32, #tpu.memory_space<vmem>>, vector<1x1x128xf32>
    %47 = vector.shape_cast %46 : vector<1x1x128xf32> to vector<1x128xf32>
    %48 = vector.shape_cast %45 : vector<1x128xf32> to vector<1x1x128xf32>
    tpu.vector_store %arg5[%c0_25, %c0_26, %c0_27], %48 {strides = array<i32>} : memref<1x1x128xf32, #tpu.memory_space<vmem>>, vector<1x1x128xf32>,
    return
  }
  func.func @transform_0(%arg0: i32) -> (i32, i32, i32, i32) {
    %c0_i32 = arith.constant 0 : i32
    %c0_i32_0 = arith.constant 0 : i32
    %c0_i32_1 = arith.constant 0 : i32
    %c0_i32_2 = arith.constant 0 : i32
    return %arg0, %c0_i32, %c0_i32_0, %c0_i32_1 : i32, i32, i32, i32
  }
  func.func @transform_1(%arg0: i32) -> (i32, i32) {
    %c0_i32 = arith.constant 0 : i32
    %c0_i32_0 = arith.constant 0 : i32
    %c0_i32_1 = arith.constant 0 : i32
    return %c0_i32, %c0_i32_0 : i32, i32
  }
  func.func @transform_2(%arg0: i32) -> (i32, i32, i32) {
    %c0_i32 = arith.constant 0 : i32
    %c0_i32_0 = arith.constant 0 : i32
    %c0_i32_1 = arith.constant 0 : i32
    return %arg0, %c0_i32, %c0_i32_0 : i32, i32, i32
  }
  func.func @transform_3(%arg0: i32) -> (i32, i32, i32) {
    %c0_i32 = arith.constant 0 : i32
    %c0_i32_0 = arith.constant 0 : i32
    %c0_i32_1 = arith.constant 0 : i32
    return %arg0, %c0_i32, %c0_i32_0 : i32, i32, i32
  }
  func.func @transform_4(%arg0: i32) -> (i32, i32, i32) {
    %c0_i32 = arith.constant 0 : i32
    %c0_i32_0 = arith.constant 0 : i32
    %c0_i32_1 = arith.constant 0 : i32
    return %arg0, %c0_i32, %c0_i32_0 : i32, i32, i32
  }
}

module attributes {stable_mosaic.version = 11 : i64} {
  func.func @bn_relu_kernel(%arg0: i32, %arg1: memref<1x256x128xbf16, #tpu.memory_space<vmem>>, %arg2: memref<1x128xf32, #tpu.memory_space<vmem>>, %arg3: memref<1x128xf32, #tpu.memory_space<vmem>>, %arg4: memref<1x256x128xf32, #tpu.memory_space<vmem>>) attributes {dimension_semantics = [#tpu.dimension_semantics<parallel>], iteration_bounds = array<i64: 2>, scalar_prefetch = 0 : i64, scratch_operands = 0 : i64, tpu.core_type = #tpu.core_type<tc>, window_params = [{transform_indices = @transform_0, window_bounds = array<i64: 1, 256, 128>}, {pipeline_mode = #tpu.pipeline_mode<synchronous>, transform_indices = @transform_1, window_bounds = array<i64: 1, 128>}, {pipeline_mode = #tpu.pipeline_mode<synchronous>, transform_indices = @transform_2, window_bounds = array<i64: 1, 128>}, {transform_indices = @transform_3, window_bounds = array<i64: 1, 256, 128>}]} {
    %c0 = arith.constant 0 : index
    %c0_0 = arith.constant 0 : index
    %c0_1 = arith.constant 0 : index
    %0 = vector.load %arg1[%c0, %c0_0, %c0_1] : memref<1x256x128xbf16, #tpu.memory_space<vmem>>, vector<1x256x128xbf16>
    %1 = vector.shape_cast %0 : vector<1x256x128xbf16> to vector<256x128xbf16>
    %2 = arith.extf %1 : vector<256x128xbf16> to vector<256x128xf32>
    %c0_2 = arith.constant 0 : index
    %c0_3 = arith.constant 0 : index
    %3 = vector.load %arg2[%c0_2, %c0_3] : memref<1x128xf32, #tpu.memory_space<vmem>>, vector<1x128xf32>
    %4 = vector.broadcast %3 : vector<1x128xf32> to vector<256x128xf32>
    %5 = arith.mulf %2, %4 : vector<256x128xf32>
    %c0_4 = arith.constant 0 : index
    %c0_5 = arith.constant 0 : index
    %6 = vector.load %arg3[%c0_4, %c0_5] : memref<1x128xf32, #tpu.memory_space<vmem>>, vector<1x128xf32>
    %7 = vector.broadcast %6 : vector<1x128xf32> to vector<256x128xf32>
    %8 = arith.addf %5, %7 : vector<256x128xf32>
    %cst = arith.constant 0.000000e+00 : f32
    %9 = vector.broadcast %cst : f32 to vector<256x128xf32>
    %10 = arith.maximumf %8, %9 : vector<256x128xf32>
    %c0_6 = arith.constant 0 : index
    %c0_7 = arith.constant 0 : index
    %c0_8 = arith.constant 0 : index
    %11 = vector.load %arg4[%c0_6, %c0_7, %c0_8] : memref<1x256x128xf32, #tpu.memory_space<vmem>>, vector<1x256x128xf32>
    %12 = vector.shape_cast %11 : vector<1x256x128xf32> to vector<256x128xf32>
    %13 = vector.shape_cast %10 : vector<256x128xf32> to vector<1x256x128xf32>
    tpu.vector_store %arg4[%c0_6, %c0_7, %c0_8], %13 {strides = array<i32>} : memref<1x256x128xf32, #tpu.memory_space<vmem>>, vector<1x256x128xf32>,
    return
  }
  func.func @transform_0(%arg0: i32) -> (i32, i32, i32) {
    %c0_i32 = arith.constant 0 : i32
    %c0_i32_0 = arith.constant 0 : i32
    %c0_i32_1 = arith.constant 0 : i32
    return %arg0, %c0_i32, %c0_i32_0 : i32, i32, i32
  }
  func.func @transform_1(%arg0: i32) -> (i32, i32) {
    %c0_i32 = arith.constant 0 : i32
    %c0_i32_0 = arith.constant 0 : i32
    %c0_i32_1 = arith.constant 0 : i32
    return %c0_i32, %c0_i32_0 : i32, i32
  }
  func.func @transform_2(%arg0: i32) -> (i32, i32) {
    %c0_i32 = arith.constant 0 : i32
    %c0_i32_0 = arith.constant 0 : i32
    %c0_i32_1 = arith.constant 0 : i32
    return %c0_i32, %c0_i32_0 : i32, i32
  }
  func.func @transform_3(%arg0: i32) -> (i32, i32, i32) {
    %c0_i32 = arith.constant 0 : i32
    %c0_i32_0 = arith.constant 0 : i32
    %c0_i32_1 = arith.constant 0 : i32
    return %arg0, %c0_i32, %c0_i32_0 : i32, i32, i32
  }
}

module attributes {stable_mosaic.version = 11 : i64} {
  func.func @bnrelu_conv_stats_kernel(%arg0: i32, %arg1: memref<1x256x128xbf16, #tpu.memory_space<vmem>>, %arg2: memref<1x128xf32, #tpu.memory_space<vmem>>, %arg3: memref<1x128xf32, #tpu.memory_space<vmem>>, %arg4: memref<1152x128xbf16, #tpu.memory_space<vmem>>, %arg5: memref<1x256x128xbf16, #tpu.memory_space<vmem>>, %arg6: memref<1x1x128xf32, #tpu.memory_space<vmem>>, %arg7: memref<1x1x128xf32, #tpu.memory_space<vmem>>, %arg8: memref<18x18x128xbf16, #tpu.memory_space<vmem>>, %arg9: memref<256x1152xbf16, #tpu.memory_space<vmem>>) attributes {dimension_semantics = [#tpu.dimension_semantics<parallel>], iteration_bounds = array<i64: 2>, scalar_prefetch = 0 : i64, scratch_operands = 2 : i64, tpu.core_type = #tpu.core_type<tc>, window_params = [{transform_indices = @transform_0, window_bounds = array<i64: 1, 256, 128>}, {pipeline_mode = #tpu.pipeline_mode<synchronous>, transform_indices = @transform_1, window_bounds = array<i64: 1, 128>}, {pipeline_mode = #tpu.pipeline_mode<synchronous>, transform_indices = @transform_2, window_bounds = array<i64: 1, 128>}, {pipeline_mode = #tpu.pipeline_mode<synchronous>, transform_indices = @transform_3, window_bounds = array<i64: 1152, 128>}, {transform_indices = @transform_4, window_bounds = array<i64: 1, 256, 128>}, {transform_indices = @transform_5, window_bounds = array<i64: 1, 1, 128>}, {transform_indices = @transform_6, window_bounds = array<i64: 1, 1, 128>}]} {
    %c0 = arith.constant 0 : index
    %c0_0 = arith.constant 0 : index
    %c0_1 = arith.constant 0 : index
    %0 = vector.load %arg1[%c0, %c0_0, %c0_1] : memref<1x256x128xbf16, #tpu.memory_space<vmem>>, vector<1x256x128xbf16>
    %1 = vector.shape_cast %0 : vector<1x256x128xbf16> to vector<256x128xbf16>
    %2 = arith.extf %1 : vector<256x128xbf16> to vector<256x128xf32>
    %c0_2 = arith.constant 0 : index
    %c0_3 = arith.constant 0 : index
    %3 = vector.load %arg2[%c0_2, %c0_3] : memref<1x128xf32, #tpu.memory_space<vmem>>, vector<1x128xf32>
    %4 = vector.broadcast %3 : vector<1x128xf32> to vector<256x128xf32>
    %5 = arith.mulf %2, %4 : vector<256x128xf32>
    %c0_4 = arith.constant 0 : index
    %c0_5 = arith.constant 0 : index
    %6 = vector.load %arg3[%c0_4, %c0_5] : memref<1x128xf32, #tpu.memory_space<vmem>>, vector<1x128xf32>
    %7 = vector.broadcast %6 : vector<1x128xf32> to vector<256x128xf32>
    %8 = arith.addf %5, %7 : vector<256x128xf32>
    %cst = arith.constant 0.000000e+00 : f32
    %9 = vector.broadcast %cst : f32 to vector<256x128xf32>
    %10 = arith.maximumf %8, %9 : vector<256x128xf32>
    %11 = vector.shape_cast %10 : vector<256x128xf32> to vector<16x16x128xf32>
    %12 = arith.truncf %11 : vector<16x16x128xf32> to vector<16x16x128xbf16>
    %cst_6 = arith.constant 0.000000e+00 : bf16
    %13 = vector.broadcast %cst_6 : bf16 to vector<1x18x128xbf16>
    %cst_7 = arith.constant 0.000000e+00 : bf16
    %14 = vector.broadcast %cst_7 : bf16 to vector<16x1x128xbf16>
    %c0_8 = arith.constant 0 : index
    %c0_9 = arith.constant 0 : index
    %c0_10 = arith.constant 0 : index
    %15 = vector.load %arg8[%c0_8, %c0_9, %c0_10] : memref<18x18x128xbf16, #tpu.memory_space<vmem>>, vector<1x18x128xbf16>
    tpu.vector_store %arg8[%c0_8, %c0_9, %c0_10], %13 {strides = array<i32>} : memref<18x18x128xbf16, #tpu.memory_space<vmem>>, vector<1x18x128xbf16>,
    %c17 = arith.constant 17 : index
    %c0_11 = arith.constant 0 : index
    %c0_12 = arith.constant 0 : index
    %16 = vector.load %arg8[%c17, %c0_11, %c0_12] : memref<18x18x128xbf16, #tpu.memory_space<vmem>>, vector<1x18x128xbf16>
    tpu.vector_store %arg8[%c17, %c0_11, %c0_12], %13 {strides = array<i32>} : memref<18x18x128xbf16, #tpu.memory_space<vmem>>, vector<1x18x128xbf16>,
    %c1 = arith.constant 1 : index
    %c0_13 = arith.constant 0 : index
    %c0_14 = arith.constant 0 : index
    %17 = vector.load %arg8[%c1, %c0_13, %c0_14] : memref<18x18x128xbf16, #tpu.memory_space<vmem>>, vector<16x1x128xbf16>
    tpu.vector_store %arg8[%c1, %c0_13, %c0_14], %14 {strides = array<i32>} : memref<18x18x128xbf16, #tpu.memory_space<vmem>>, vector<16x1x128xbf16>,
    %c1_15 = arith.constant 1 : index
    %c17_16 = arith.constant 17 : index
    %c0_17 = arith.constant 0 : index
    %18 = vector.load %arg8[%c1_15, %c17_16, %c0_17] : memref<18x18x128xbf16, #tpu.memory_space<vmem>>, vector<16x1x128xbf16>
    tpu.vector_store %arg8[%c1_15, %c17_16, %c0_17], %14 {strides = array<i32>} : memref<18x18x128xbf16, #tpu.memory_space<vmem>>, vector<16x1x128xbf16>,
    %c1_18 = arith.constant 1 : index
    %c1_19 = arith.constant 1 : index
    %c0_20 = arith.constant 0 : index
    %19 = vector.load %arg8[%c1_18, %c1_19, %c0_20] : memref<18x18x128xbf16, #tpu.memory_space<vmem>>, vector<16x16x128xbf16>
    tpu.vector_store %arg8[%c1_18, %c1_19, %c0_20], %12 {strides = array<i32>} : memref<18x18x128xbf16, #tpu.memory_space<vmem>>, vector<16x16x128xbf16>,
    %c0_21 = arith.constant 0 : index
    %c0_22 = arith.constant 0 : index
    %c0_23 = arith.constant 0 : index
    %20 = vector.load %arg8[%c0_21, %c0_22, %c0_23] : memref<18x18x128xbf16, #tpu.memory_space<vmem>>, vector<18x18x128xbf16>
    %21 = vector.extract_strided_slice %20 {offsets = [0, 0, 0], sizes = [16, 16, 128], strides = [1, 1, 1]} : vector<18x18x128xbf16> to vector<16x16x128xbf16>
    %22 = vector.shape_cast %21 : vector<16x16x128xbf16> to vector<256x128xbf16>
    %c0_24 = arith.constant 0 : index
    %c0_25 = arith.constant 0 : index
    %23 = vector.load %arg9[%c0_24, %c0_25] : memref<256x1152xbf16, #tpu.memory_space<vmem>>, vector<256x128xbf16>
    tpu.vector_store %arg9[%c0_24, %c0_25], %22 {strides = array<i32>} : memref<256x1152xbf16, #tpu.memory_space<vmem>>, vector<256x128xbf16>,
    %24 = vector.extract_strided_slice %20 {offsets = [0, 1, 0], sizes = [16, 16, 128], strides = [1, 1, 1]} : vector<18x18x128xbf16> to vector<16x16x128xbf16>
    %25 = vector.shape_cast %24 : vector<16x16x128xbf16> to vector<256x128xbf16>
    %c0_26 = arith.constant 0 : index
    %c128 = arith.constant 128 : index
    %26 = vector.load %arg9[%c0_26, %c128] : memref<256x1152xbf16, #tpu.memory_space<vmem>>, vector<256x128xbf16>
    tpu.vector_store %arg9[%c0_26, %c128], %25 {strides = array<i32>} : memref<256x1152xbf16, #tpu.memory_space<vmem>>, vector<256x128xbf16>,
    %27 = vector.extract_strided_slice %20 {offsets = [0, 2, 0], sizes = [16, 16, 128], strides = [1, 1, 1]} : vector<18x18x128xbf16> to vector<16x16x128xbf16>
    %28 = vector.shape_cast %27 : vector<16x16x128xbf16> to vector<256x128xbf16>
    %c0_27 = arith.constant 0 : index
    %c256 = arith.constant 256 : index
    %29 = vector.load %arg9[%c0_27, %c256] : memref<256x1152xbf16, #tpu.memory_space<vmem>>, vector<256x128xbf16>
    tpu.vector_store %arg9[%c0_27, %c256], %28 {strides = array<i32>} : memref<256x1152xbf16, #tpu.memory_space<vmem>>, vector<256x128xbf16>,
    %30 = vector.extract_strided_slice %20 {offsets = [1, 0, 0], sizes = [16, 16, 128], strides = [1, 1, 1]} : vector<18x18x128xbf16> to vector<16x16x128xbf16>
    %31 = vector.shape_cast %30 : vector<16x16x128xbf16> to vector<256x128xbf16>
    %c0_28 = arith.constant 0 : index
    %c384 = arith.constant 384 : index
    %32 = vector.load %arg9[%c0_28, %c384] : memref<256x1152xbf16, #tpu.memory_space<vmem>>, vector<256x128xbf16>
    tpu.vector_store %arg9[%c0_28, %c384], %31 {strides = array<i32>} : memref<256x1152xbf16, #tpu.memory_space<vmem>>, vector<256x128xbf16>,
    %33 = vector.extract_strided_slice %20 {offsets = [1, 1, 0], sizes = [16, 16, 128], strides = [1, 1, 1]} : vector<18x18x128xbf16> to vector<16x16x128xbf16>
    %34 = vector.shape_cast %33 : vector<16x16x128xbf16> to vector<256x128xbf16>
    %c0_29 = arith.constant 0 : index
    %c512 = arith.constant 512 : index
    %35 = vector.load %arg9[%c0_29, %c512] : memref<256x1152xbf16, #tpu.memory_space<vmem>>, vector<256x128xbf16>
    tpu.vector_store %arg9[%c0_29, %c512], %34 {strides = array<i32>} : memref<256x1152xbf16, #tpu.memory_space<vmem>>, vector<256x128xbf16>,
    %36 = vector.extract_strided_slice %20 {offsets = [1, 2, 0], sizes = [16, 16, 128], strides = [1, 1, 1]} : vector<18x18x128xbf16> to vector<16x16x128xbf16>
    %37 = vector.shape_cast %36 : vector<16x16x128xbf16> to vector<256x128xbf16>
    %c0_30 = arith.constant 0 : index
    %c640 = arith.constant 640 : index
    %38 = vector.load %arg9[%c0_30, %c640] : memref<256x1152xbf16, #tpu.memory_space<vmem>>, vector<256x128xbf16>
    tpu.vector_store %arg9[%c0_30, %c640], %37 {strides = array<i32>} : memref<256x1152xbf16, #tpu.memory_space<vmem>>, vector<256x128xbf16>,
    %39 = vector.extract_strided_slice %20 {offsets = [2, 0, 0], sizes = [16, 16, 128], strides = [1, 1, 1]} : vector<18x18x128xbf16> to vector<16x16x128xbf16>
    %40 = vector.shape_cast %39 : vector<16x16x128xbf16> to vector<256x128xbf16>
    %c0_31 = arith.constant 0 : index
    %c768 = arith.constant 768 : index
    %41 = vector.load %arg9[%c0_31, %c768] : memref<256x1152xbf16, #tpu.memory_space<vmem>>, vector<256x128xbf16>
    tpu.vector_store %arg9[%c0_31, %c768], %40 {strides = array<i32>} : memref<256x1152xbf16, #tpu.memory_space<vmem>>, vector<256x128xbf16>,
    %42 = vector.extract_strided_slice %20 {offsets = [2, 1, 0], sizes = [16, 16, 128], strides = [1, 1, 1]} : vector<18x18x128xbf16> to vector<16x16x128xbf16>
    %43 = vector.shape_cast %42 : vector<16x16x128xbf16> to vector<256x128xbf16>
    %c0_32 = arith.constant 0 : index
    %c896 = arith.constant 896 : index
    %44 = vector.load %arg9[%c0_32, %c896] : memref<256x1152xbf16, #tpu.memory_space<vmem>>, vector<256x128xbf16>
    tpu.vector_store %arg9[%c0_32, %c896], %43 {strides = array<i32>} : memref<256x1152xbf16, #tpu.memory_space<vmem>>, vector<256x128xbf16>,
    %45 = vector.extract_strided_slice %20 {offsets = [2, 2, 0], sizes = [16, 16, 128], strides = [1, 1, 1]} : vector<18x18x128xbf16> to vector<16x16x128xbf16>
    %46 = vector.shape_cast %45 : vector<16x16x128xbf16> to vector<256x128xbf16>
    %c0_33 = arith.constant 0 : index
    %c1024 = arith.constant 1024 : index
    %47 = vector.load %arg9[%c0_33, %c1024] : memref<256x1152xbf16, #tpu.memory_space<vmem>>, vector<256x128xbf16>
    tpu.vector_store %arg9[%c0_33, %c1024], %46 {strides = array<i32>} : memref<256x1152xbf16, #tpu.memory_space<vmem>>, vector<256x128xbf16>,
    %c0_34 = arith.constant 0 : index
    %c0_35 = arith.constant 0 : index
    %48 = vector.load %arg9[%c0_34, %c0_35] : memref<256x1152xbf16, #tpu.memory_space<vmem>>, vector<256x1152xbf16>
    %c0_36 = arith.constant 0 : index
    %c0_37 = arith.constant 0 : index
    %49 = vector.load %arg4[%c0_36, %c0_37] : memref<1152x128xbf16, #tpu.memory_space<vmem>>, vector<1152x128xbf16>
    %cst_38 = arith.constant dense<0.000000e+00> : vector<256x128xf32>
    %50 = tpu.matmul %48, %49, %cst_38 {dimension_numbers = #tpu.dot_dimension_numbers<[1], [0], [0], [1], [0, 0, 1, 1], [], []>} : vector<256x1152xbf16>, vector<1152x128xbf16>, vector<256x128xf32> -> vector<256x128xf32>
    %51 = arith.truncf %50 : vector<256x128xf32> to vector<256x128xbf16>
    %c0_39 = arith.constant 0 : index
    %c0_40 = arith.constant 0 : index
    %c0_41 = arith.constant 0 : index
    %52 = vector.load %arg5[%c0_39, %c0_40, %c0_41] : memref<1x256x128xbf16, #tpu.memory_space<vmem>>, vector<1x256x128xbf16>
    %53 = vector.shape_cast %52 : vector<1x256x128xbf16> to vector<256x128xbf16>
    %54 = vector.shape_cast %51 : vector<256x128xbf16> to vector<1x256x128xbf16>
    tpu.vector_store %arg5[%c0_39, %c0_40, %c0_41], %54 {strides = array<i32>} : memref<1x256x128xbf16, #tpu.memory_space<vmem>>, vector<1x256x128xbf16>,
    %55 = arith.extf %51 : vector<256x128xbf16> to vector<256x128xf32>
    %cst_42 = arith.constant dense<0.000000e+00> : vector<128xf32>
    %56 = vector.multi_reduction <add>, %55, %cst_42 [0] : vector<256x128xf32> to vector<128xf32>
    %57 = vector.shape_cast %56 : vector<128xf32> to vector<1x128xf32>
    %c0_43 = arith.constant 0 : index
    %c0_44 = arith.constant 0 : index
    %c0_45 = arith.constant 0 : index
    %58 = vector.load %arg6[%c0_43, %c0_44, %c0_45] : memref<1x1x128xf32, #tpu.memory_space<vmem>>, vector<1x1x128xf32>
    %59 = vector.shape_cast %58 : vector<1x1x128xf32> to vector<1x128xf32>
    %60 = vector.shape_cast %57 : vector<1x128xf32> to vector<1x1x128xf32>
    tpu.vector_store %arg6[%c0_43, %c0_44, %c0_45], %60 {strides = array<i32>} : memref<1x1x128xf32, #tpu.memory_space<vmem>>, vector<1x1x128xf32>,
    %61 = arith.mulf %55, %55 : vector<256x128xf32>
    %cst_46 = arith.constant dense<0.000000e+00> : vector<128xf32>
    %62 = vector.multi_reduction <add>, %61, %cst_46 [0] : vector<256x128xf32> to vector<128xf32>
    %63 = vector.shape_cast %62 : vector<128xf32> to vector<1x128xf32>
    %c0_47 = arith.constant 0 : index
    %c0_48 = arith.constant 0 : index
    %c0_49 = arith.constant 0 : index
    %64 = vector.load %arg7[%c0_47, %c0_48, %c0_49] : memref<1x1x128xf32, #tpu.memory_space<vmem>>, vector<1x1x128xf32>
    %65 = vector.shape_cast %64 : vector<1x1x128xf32> to vector<1x128xf32>
    %66 = vector.shape_cast %63 : vector<1x128xf32> to vector<1x1x128xf32>
    tpu.vector_store %arg7[%c0_47, %c0_48, %c0_49], %66 {strides = array<i32>} : memref<1x1x128xf32, #tpu.memory_space<vmem>>, vector<1x1x128xf32>,
    return
  }
  func.func @transform_0(%arg0: i32) -> (i32, i32, i32) {
    %c0_i32 = arith.constant 0 : i32
    %c0_i32_0 = arith.constant 0 : i32
    %c0_i32_1 = arith.constant 0 : i32
    return %arg0, %c0_i32, %c0_i32_0 : i32, i32, i32
  }
  func.func @transform_1(%arg0: i32) -> (i32, i32) {
    %c0_i32 = arith.constant 0 : i32
    %c0_i32_0 = arith.constant 0 : i32
    %c0_i32_1 = arith.constant 0 : i32
    return %c0_i32, %c0_i32_0 : i32, i32
  }
  func.func @transform_2(%arg0: i32) -> (i32, i32) {
    %c0_i32 = arith.constant 0 : i32
    %c0_i32_0 = arith.constant 0 : i32
    %c0_i32_1 = arith.constant 0 : i32
    return %c0_i32, %c0_i32_0 : i32, i32
  }
  func.func @transform_3(%arg0: i32) -> (i32, i32) {
    %c0_i32 = arith.constant 0 : i32
    %c0_i32_0 = arith.constant 0 : i32
    %c0_i32_1 = arith.constant 0 : i32
    return %c0_i32, %c0_i32_0 : i32, i32
  }
  func.func @transform_4(%arg0: i32) -> (i32, i32, i32) {
    %c0_i32 = arith.constant 0 : i32
    %c0_i32_0 = arith.constant 0 : i32
    %c0_i32_1 = arith.constant 0 : i32
    return %arg0, %c0_i32, %c0_i32_0 : i32, i32, i32
  }
  func.func @transform_5(%arg0: i32) -> (i32, i32, i32) {
    %c0_i32 = arith.constant 0 : i32
    %c0_i32_0 = arith.constant 0 : i32
    %c0_i32_1 = arith.constant 0 : i32
    return %arg0, %c0_i32, %c0_i32_0 : i32, i32, i32
  }
  func.func @transform_6(%arg0: i32) -> (i32, i32, i32) {
    %c0_i32 = arith.constant 0 : i32
    %c0_i32_0 = arith.constant 0 : i32
    %c0_i32_1 = arith.constant 0 : i32
    return %arg0, %c0_i32, %c0_i32_0 : i32, i32, i32
  }
}

</mosaic_0001>

<llo_original>
// kernel: _double_conv.5
$region0: #{_double_conv.5}
  #allocation0 [shape = 'u32[]', space=smem, size = 0x4, offset = 0x4, fixed_abs, tag = 'smem constant byte address 0x4 - core index']
  #allocation1 [shape = 'u32[144,128]{1,0:T(1,128)}', space=vmem, size = 0x12000, scoped, tag = 'internal scratch']
  %s0 = inlined_call_operand.hbm [shape: bf16[2,256,128], index: 0, kind: input, shape index: {}]
  %s1 = inlined_call_operand.hbm [shape: f32[1,128], index: 1, kind: input, shape index: {}]
  %s2 = inlined_call_operand.hbm [shape: f32[1,128], index: 2, kind: input, shape index: {}]
  %s3 = inlined_call_operand.hbm [shape: f32[2,256,128], index: 3, kind: output, shape index: {}]
  %s4 = sld [smem:[#allocation0]]
  $region57: #{_double_conv.5} parent=0
    _
  %s6 = ssub.s32 1, %s4
  %s7 = scalar_select 0, %s6, %s4
  $region1: #{_double_conv.5} parent=0
    #allocation2 [shape = 'u8[131072]{0}', space=vmem, size = 0x20000, scoped, tag = 'input window, operand 0']
    #allocation3 [shape = 's32[2]{0}', space=sflag, size = 0x8, scoped, tag = 'scoped memory for _double_conv.5']
    #allocation4 [shape = 's32[2]{0}', space=sflag, size = 0x8, scoped, tag = 'scoped memory for _double_conv.5']
    #allocation5 [shape = 'u8[512]{0}', space=vmem, size = 0x400, scoped, tag = 'input window, operand 1, single buffered']
    #allocation6 [shape = 's32[1]{0}', space=sflag, size = 0x4, scoped, tag = 'scoped memory for _double_conv.5']
    #allocation7 [shape = 'u8[512]{0}', space=vmem, size = 0x400, scoped, tag = 'input window, operand 2, single buffered']
    #allocation8 [shape = 'u8[262144]{0}', space=vmem, size = 0x40000, scoped, tag = 'output window, operand 0']
    %8 = vsyncpa [#allocation3], 0
    %s9 = scalar_lea.sflag [#allocation3], 1
    %10 = vsyncpa %s9, 0
    %11 = vsyncpa [#allocation6], 0
    %12 = vsyncpa [#allocation4], 0
    %s13 = scalar_lea.sflag [#allocation4], 1
    %14 = vsyncpa %s13, 0
    loop: start=0, step=1, limit=4
    $region2: #{_double_conv.5} parent=1 // loop_pre_header
      _
    $region3: #{_double_conv.5} parent=1 // loop_header
      %s16 = sphi 0, %s20
      %p17 = scmp.ge.s32.totalorder %s16, 4
      %s26 = sphi 0, %s28
      %s29 = sphi 0, %s26
      %s30 = sphi 0, %s29
      %s46 = sphi 0, %s30
      %s50 = sphi 0, %s50
      %s52 = sphi 0, %s50
      %s53 = sphi 0, %s52
      %s67 = sphi 0, %s53
      %s71 = sphi 0, %s71
      %s73 = sphi 0, %s71
      %s74 = sphi 0, %s73
      %s88 = sphi 0, %s74
      %s94 = sphi 0, %s96
      %s97 = sphi 0, %s94
      %s98 = sphi 0, %s97
      %s114 = sphi 0, %s98
    $region4: #{_double_conv.5} parent=1 // loop_header_branch
      %19 = sbr.rel (%p17) target = $region8
    $region5: #{_double_conv.5} parent=1 // loop_body
      %s21 = ssub.s32 %s16, 1
      %s22 = ssub.s32 %s16, 2
      %s23 = sadd.s32 %s16, 1
      %s24 = ssub.s32 %s16, %s23
      %p25 = scmp.eq.s32.totalorder %s24, 0
      %s27 = sadd.s32 %s26, 1
      %s28 = scalar_select %p25, %s26, %s27
      %p31 = pneg %p25
      %p32 = scmp.eq.s32.totalorder %s16, 1
      %p33 = por %p31, %p32
      %p34 = scmp.ne.s32.totalorder %s26, %s29
      %p35 = scmp.eq.s32.totalorder %s16, 0
      %p36 = por %p34, %p35
      %p37 = scmp.ne.s32.totalorder %s26, %s29
      %p38 = scmp.eq.s32.totalorder %s21, 1
      %p39 = por %p37, %p38
      %p40 = scmp.ne.s32.totalorder %s29, %s30
      %p41 = scmp.eq.s32.totalorder %s21, 0
      %p42 = por %p40, %p41
      %p43 = scmp.ne.s32.totalorder %s29, %s30
      %p44 = scmp.eq.s32.totalorder %s22, 1
      %p45 = por %p43, %p44
      %p47 = scmp.ne.s32.totalorder %s30, %s46
      %p48 = scmp.eq.s32.totalorder %s22, 0
      %p49 = por %p47, %p48
      %s51 = sadd.s32 %s50, 1
      %p54 = scmp.eq.s32.totalorder %s16, 1
      %p55 = scmp.ne.s32.totalorder %s50, %s52
      %p56 = scmp.eq.s32.totalorder %s16, 0
      %p57 = por %p55, %p56
      %p58 = scmp.ne.s32.totalorder %s50, %s52
      %p59 = scmp.eq.s32.totalorder %s21, 1
      %p60 = por %p58, %p59
      %p61 = scmp.ne.s32.totalorder %s52, %s53
      %p62 = scmp.eq.s32.totalorder %s21, 0
      %p63 = por %p61, %p62
      %p64 = scmp.ne.s32.totalorder %s52, %s53
      %p65 = scmp.eq.s32.totalorder %s22, 1
      %p66 = por %p64, %p65
      %p68 = scmp.ne.s32.totalorder %s53, %s67
      %p69 = scmp.eq.s32.totalorder %s22, 0
      %p70 = por %p68, %p69
      %s72 = sadd.s32 %s71, 1
      %p75 = scmp.eq.s32.totalorder %s16, 1
      %p76 = scmp.ne.s32.totalorder %s71, %s73
      %p77 = scmp.eq.s32.totalorder %s16, 0
      %p78 = por %p76, %p77
      %p79 = scmp.ne.s32.totalorder %s71, %s73
      %p80 = scmp.eq.s32.totalorder %s21, 1
      %p81 = por %p79, %p80
      %p82 = scmp.ne.s32.totalorder %s73, %s74
      %p83 = scmp.eq.s32.totalorder %s21, 0
      %p84 = por %p82, %p83
      %p85 = scmp.ne.s32.totalorder %s73, %s74
      %p86 = scmp.eq.s32.totalorder %s22, 1
      %p87 = por %p85, %p86
      %p89 = scmp.ne.s32.totalorder %s74, %s88
      %p90 = scmp.eq.s32.totalorder %s22, 0
      %p91 = por %p89, %p90
      %s92 = ssub.s32 %s16, %s23
      %p93 = scmp.eq.s32.totalorder %s92, 0
      %s95 = sadd.s32 %s94, 1
      %s96 = scalar_select %p93, %s94, %s95
      %p99 = pneg %p93
      %p100 = scmp.eq.s32.totalorder %s16, 1
      %p101 = por %p99, %p100
      %p102 = scmp.ne.s32.totalorder %s94, %s97
      %p103 = scmp.eq.s32.totalorder %s16, 0
      %p104 = por %p102, %p103
      %p105 = scmp.ne.s32.totalorder %s94, %s97
      %p106 = scmp.eq.s32.totalorder %s21, 1
      %p107 = por %p105, %p106
      %p108 = scmp.ne.s32.totalorder %s97, %s98
      %p109 = scmp.eq.s32.totalorder %s21, 0
      %p110 = por %p108, %p109
      %p111 = scmp.ne.s32.totalorder %s97, %s98
      %p112 = scmp.eq.s32.totalorder %s22, 1
      %p113 = por %p111, %p112
      %p115 = scmp.ne.s32.totalorder %s98, %s114
      %p116 = scmp.eq.s32.totalorder %s22, 0
      %p117 = por %p115, %p116
      %p118 = scmp.le.s32.totalorder 1, %s16
      %p119 = scmp.lt.s32.totalorder %s16, 3
      %p120 = pnand %p118, %p119
      %p121 = pneg %p120
      // Predicated region
      $region9: #{_double_conv.5} parent=5 // pred_check
        _
      $region10: #{_double_conv.5} parent=5 // pred_check_branch
        %123 = sbr.rel (%p120) target = $region12
      $region11: #{_double_conv.5} parent=5 // pred_region
        %s124 = ssub.s32 %s16, 1
        // Predicated region
        $region13: #{_double_conv.5} parent=11 // pred_check
          %p125 = pneg %p63
        $region14: #{_double_conv.5} parent=11 // pred_check_branch
          %127 = sbr.rel (%p125) target = $region16
        $region15: #{_double_conv.5} parent=11 // pred_region
          %s129 = ssub.s32 16, 16
          %130 = vsyncadd [#allocation6], %s129
          %s132 = sshll.u32 [#allocation5], 4
          %s133 = int_to_ptr.vmem [resolvable:$true] %s132
          %135 = dma.hbm_to_vmem [thread:$0]  %s1, 16, %s133, [#allocation6]
        $region16: #{_double_conv.5} parent=11 // pred_fallthru
          _
        // Predicated region
        $region17: #{_double_conv.5} parent=11 // pred_check
          %p136 = pneg %p84
        $region18: #{_double_conv.5} parent=11 // pred_check_branch
          %138 = sbr.rel (%p136) target = $region20
        $region19: #{_double_conv.5} parent=11 // pred_region
          %s140 = ssub.s32 16, 16
          %141 = vsyncadd [#allocation6], %s140
          %s143 = sshll.u32 [#allocation7], 4
          %s144 = int_to_ptr.vmem [resolvable:$true] %s143
          %146 = dma.hbm_to_vmem [thread:$0]  %s2, 16, %s144, [#allocation6]
        $region20: #{_double_conv.5} parent=11 // pred_fallthru
          _
      $region12: #{_double_conv.5} parent=5 // pred_fallthru
        _
      %p147 = scmp.lt.s32.totalorder %s16, 2
      // Predicated region
      $region21: #{_double_conv.5} parent=5 // pred_check
        %p148 = pneg %p147
      $region22: #{_double_conv.5} parent=5 // pred_check_branch
        %150 = sbr.rel (%p148) target = $region24
      $region23: #{_double_conv.5} parent=5 // pred_region
        // Predicated region
        $region25: #{_double_conv.5} parent=23 // pred_check
          %p151 = pneg %p36
        $region26: #{_double_conv.5} parent=23 // pred_check_branch
          %153 = sbr.rel (%p151) target = $region28
        $region27: #{_double_conv.5} parent=23 // pred_region
          %s154 = sand.u32 %s26, 1
          %s155 = scalar_lea.sflag [#allocation3], %s154
          %s156 = sand.u32 %s26, 1
          %s157 = smul.addr %s156, 128
          %s158 = scalar_lea.vmem [#allocation2], %s157
          %s160 = ssub.s32 2048, 2048
          %161 = vsyncadd %s155, %s160
          %s162 = smul.addr %s16, 32
          %s163 = smul.addr %s162, 64
          %s164 = scalar_lea.hbm %s0, %s163
          %s165 = sshll.u32 %s158, 4
          %s166 = int_to_ptr.vmem [resolvable:$true] %s165
          %171 = dma.hbm_to_vmem [thread:$0]  %s164, 2048, %s166, %s155, 64, 64, 4
        $region28: #{_double_conv.5} parent=23 // pred_fallthru
          _
      $region24: #{_double_conv.5} parent=5 // pred_fallthru
        _
      %p172 = scmp.le.s32.totalorder 1, %s16
      %p173 = scmp.lt.s32.totalorder %s16, 3
      %p174 = pnand %p172, %p173
      %p175 = pneg %p174
      // Predicated region
      $region29: #{_double_conv.5} parent=5 // pred_check
        _
      $region30: #{_double_conv.5} parent=5 // pred_check_branch
        %177 = sbr.rel (%p174) target = $region32
      $region31: #{_double_conv.5} parent=5 // pred_region
        %s178 = ssub.s32 %s16, 1
        %s179 = sand.u32 %s29, 1
        %s180 = scalar_lea.sflag [#allocation3], %s179
        %s181 = sand.u32 %s29, 1
        %s182 = smul.addr %s181, 128
        %s183 = scalar_lea.vmem [#allocation2], %s182
        // Predicated region
        $region33: #{_double_conv.5} parent=31 // pred_check
          %p184 = pneg %p42
        $region34: #{_double_conv.5} parent=31 // pred_check_branch
          %186 = sbr.rel (%p184) target = $region36
        $region35: #{_double_conv.5} parent=31 // pred_region
          %187 = dma.done %s180, 2048
        $region36: #{_double_conv.5} parent=31 // pred_fallthru
          _
        // Predicated region
        $region37: #{_double_conv.5} parent=31 // pred_check
          %p188 = pneg %p63
        $region38: #{_double_conv.5} parent=31 // pred_check_branch
          %190 = sbr.rel (%p188) target = $region40
        $region39: #{_double_conv.5} parent=31 // pred_region
          %191 = dma.done [#allocation6], 16
        $region40: #{_double_conv.5} parent=31 // pred_fallthru
          _
        // Predicated region
        $region41: #{_double_conv.5} parent=31 // pred_check
          %p192 = pneg %p84
        $region42: #{_double_conv.5} parent=31 // pred_check_branch
          %194 = sbr.rel (%p192) target = $region44
        $region43: #{_double_conv.5} parent=31 // pred_region
          %195 = dma.done [#allocation6], 16
        $region44: #{_double_conv.5} parent=31 // pred_fallthru
          _
        %s196 = sand.u32 %s29, 1
        %s197 = scalar_lea.sflag [#allocation3], %s196
        %s198 = sand.u32 %s29, 1
        %s199 = smul.addr %s198, 128
        %s200 = scalar_lea.vmem [#allocation2], %s199
        %p201 = pneg %p42
        %p202 = pneg %p39
        %p203 = pneg %p63
        %p204 = pneg %p60
        %p205 = pneg %p84
        %p206 = pneg %p81
        %p207 = pneg %p110
        %p208 = pneg %p107
        %s209 = sand.u32 %s97, 1
        %s210 = scalar_lea.sflag [#allocation4], %s209
        %s211 = sand.u32 %s97, 1
        %s212 = smul.addr %s211, 256
        %s213 = scalar_lea.vmem [#allocation8], %s212
        %v214 = vld [vmem:[%s183] sm:$0xf]
        %v215 = vld [vmem:[%s183 + $0x4] sm:$0xf]
        %v216 = vld [vmem:[%s183 + $0x8] sm:$0xf]
        %v217 = vld [vmem:[%s183 + $0xc] sm:$0xf]
        %v218 = vld [vmem:[%s183 + $0x10] sm:$0xf]
        %v219 = vld [vmem:[%s183 + $0x14] sm:$0xf]
        %v220 = vld [vmem:[%s183 + $0x18] sm:$0xf]
        %v221 = vld [vmem:[%s183 + $0x1c] sm:$0xf]
        %v222 = vld [vmem:[%s183 + $0x20] sm:$0xf]
        %v223 = vld [vmem:[%s183 + $0x24] sm:$0xf]
        %v224 = vld [vmem:[%s183 + $0x28] sm:$0xf]
        %v225 = vld [vmem:[%s183 + $0x2c] sm:$0xf]
        %v226 = vld [vmem:[%s183 + $0x30] sm:$0xf]
        %v227 = vld [vmem:[%s183 + $0x34] sm:$0xf]
        %v228 = vld [vmem:[%s183 + $0x38] sm:$0xf]
        %v229 = vld [vmem:[%s183 + $0x3c] sm:$0xf]
        %v230 = vld [vmem:[%s183 + $0x40] sm:$0xf]
        %v231 = vld [vmem:[%s183 + $0x44] sm:$0xf]
        %v232 = vld [vmem:[%s183 + $0x48] sm:$0xf]
        %v233 = vld [vmem:[%s183 + $0x4c] sm:$0xf]
        %v234 = vld [vmem:[%s183 + $0x50] sm:$0xf]
        %v235 = vld [vmem:[%s183 + $0x54] sm:$0xf]
        %v236 = vld [vmem:[%s183 + $0x58] sm:$0xf]
        %v237 = vld [vmem:[%s183 + $0x5c] sm:$0xf]
        %v238 = vld [vmem:[%s183 + $0x60] sm:$0xf]
        %v239 = vld [vmem:[%s183 + $0x64] sm:$0xf]
        %v240 = vld [vmem:[%s183 + $0x68] sm:$0xf]
        %v241 = vld [vmem:[%s183 + $0x6c] sm:$0xf]
        %v242 = vld [vmem:[%s183 + $0x70] sm:$0xf]
        %v243 = vld [vmem:[%s183 + $0x74] sm:$0xf]
        %v244 = vld [vmem:[%s183 + $0x78] sm:$0xf]
        %v245 = vld [vmem:[%s183 + $0x7c] sm:$0xf]
        %v246 = vunpack.c.l.bf16 %v214
        %v247 = vunpack.c.l.bf16 %v215
        %v248 = vunpack.c.l.bf16 %v216
        %v249 = vunpack.c.l.bf16 %v217
        %v250 = vunpack.c.l.bf16 %v218
        %v251 = vunpack.c.l.bf16 %v219
        %v252 = vunpack.c.l.bf16 %v220
        %v253 = vunpack.c.l.bf16 %v221
        %v254 = vunpack.c.l.bf16 %v222
        %v255 = vunpack.c.l.bf16 %v223
        %v256 = vunpack.c.l.bf16 %v224
        %v257 = vunpack.c.l.bf16 %v225
        %v258 = vunpack.c.l.bf16 %v226
        %v259 = vunpack.c.l.bf16 %v227
        %v260 = vunpack.c.l.bf16 %v228
        %v261 = vunpack.c.l.bf16 %v229
        %v262 = vunpack.c.l.bf16 %v230
        %v263 = vunpack.c.l.bf16 %v231
        %v264 = vunpack.c.l.bf16 %v232
        %v265 = vunpack.c.l.bf16 %v233
        %v266 = vunpack.c.l.bf16 %v234
        %v267 = vunpack.c.l.bf16 %v235
        %v268 = vunpack.c.l.bf16 %v236
        %v269 = vunpack.c.l.bf16 %v237
        %v270 = vunpack.c.l.bf16 %v238
        %v271 = vunpack.c.l.bf16 %v239
        %v272 = vunpack.c.l.bf16 %v240
        %v273 = vunpack.c.l.bf16 %v241
        %v274 = vunpack.c.l.bf16 %v242
        %v275 = vunpack.c.l.bf16 %v243
        %v276 = vunpack.c.l.bf16 %v244
        %v277 = vunpack.c.l.bf16 %v245
        %v278 = vld [vmem:[#allocation5] sm:$0x1]
        %v280 = vlaneseq
        %v281 = vshrl.u32 %v280, 7
        %v282 = vsub.s32 0, %v281
        %v283 = vrot.slane %v278, %v282
        %v285 = vmul.f32 %v246, %v283
        %v286 = vmul.f32 %v247, %v283
        %v287 = vmul.f32 %v248, %v283
        %v288 = vmul.f32 %v249, %v283
        %v289 = vmul.f32 %v250, %v283
        %v290 = vmul.f32 %v251, %v283
        %v291 = vmul.f32 %v252, %v283
        %v292 = vmul.f32 %v253, %v283
        %v293 = vmul.f32 %v254, %v283
        %v294 = vmul.f32 %v255, %v283
        %v295 = vmul.f32 %v256, %v283
        %v296 = vmul.f32 %v257, %v283
        %v297 = vmul.f32 %v258, %v283
        %v298 = vmul.f32 %v259, %v283
        %v299 = vmul.f32 %v260, %v283
        %v300 = vmul.f32 %v261, %v283
        %v301 = vmul.f32 %v262, %v283
        %v302 = vmul.f32 %v263, %v283
        %v303 = vmul.f32 %v264, %v283
        %v304 = vmul.f32 %v265, %v283
        %v305 = vmul.f32 %v266, %v283
        %v306 = vmul.f32 %v267, %v283
        %v307 = vmul.f32 %v268, %v283
        %v308 = vmul.f32 %v269, %v283
        %v309 = vmul.f32 %v270, %v283
        %v310 = vmul.f32 %v271, %v283
        %v311 = vmul.f32 %v272, %v283
        %v312 = vmul.f32 %v273, %v283
        %v313 = vmul.f32 %v274, %v283
        %v314 = vmul.f32 %v275, %v283
        %v315 = vmul.f32 %v276, %v283
        %v316 = vmul.f32 %v277, %v283
        %v317 = vld [vmem:[#allocation7] sm:$0x1]
        %v319 = vlaneseq
        %v320 = vshrl.u32 %v319, 7
        %v321 = vsub.s32 0, %v320
        %v322 = vrot.slane %v317, %v321
        %v324 = vadd.f32 %v285, %v322
        %v325 = vadd.f32 %v286, %v322
        %v326 = vadd.f32 %v287, %v322
        %v327 = vadd.f32 %v288, %v322
        %v328 = vadd.f32 %v289, %v322
        %v329 = vadd.f32 %v290, %v322
        %v330 = vadd.f32 %v291, %v322
        %v331 = vadd.f32 %v292, %v322
        %v332 = vadd.f32 %v293, %v322
        %v333 = vadd.f32 %v294, %v322
        %v334 = vadd.f32 %v295, %v322
        %v335 = vadd.f32 %v296, %v322
        %v336 = vadd.f32 %v297, %v322
        %v337 = vadd.f32 %v298, %v322
        %v338 = vadd.f32 %v299, %v322
        %v339 = vadd.f32 %v300, %v322
        %v340 = vadd.f32 %v301, %v322
        %v341 = vadd.f32 %v302, %v322
        %v342 = vadd.f32 %v303, %v322
        %v343 = vadd.f32 %v304, %v322
        %v344 = vadd.f32 %v305, %v322
        %v345 = vadd.f32 %v306, %v322
        %v346 = vadd.f32 %v307, %v322
        %v347 = vadd.f32 %v308, %v322
        %v348 = vadd.f32 %v309, %v322
        %v349 = vadd.f32 %v310, %v322
        %v350 = vadd.f32 %v311, %v322
        %v351 = vadd.f32 %v312, %v322
        %v352 = vadd.f32 %v313, %v322
        %v353 = vadd.f32 %v314, %v322
        %v354 = vadd.f32 %v315, %v322
        %v355 = vadd.f32 %v316, %v322
        %v356 = vmax.f32 %v324, 0.0
        %v357 = vmax.f32 %v325, 0.0
        %v358 = vmax.f32 %v326, 0.0
        %v359 = vmax.f32 %v327, 0.0
        %v360 = vmax.f32 %v328, 0.0
        %v361 = vmax.f32 %v329, 0.0
        %v362 = vmax.f32 %v330, 0.0
        %v363 = vmax.f32 %v331, 0.0
        %v364 = vmax.f32 %v332, 0.0
        %v365 = vmax.f32 %v333, 0.0
        %v366 = vmax.f32 %v334, 0.0
        %v367 = vmax.f32 %v335, 0.0
        %v368 = vmax.f32 %v336, 0.0
        %v369 = vmax.f32 %v337, 0.0
        %v370 = vmax.f32 %v338, 0.0
        %v371 = vmax.f32 %v339, 0.0
        %v372 = vmax.f32 %v340, 0.0
        %v373 = vmax.f32 %v341, 0.0
        %v374 = vmax.f32 %v342, 0.0
        %v375 = vmax.f32 %v343, 0.0
        %v376 = vmax.f32 %v344, 0.0
        %v377 = vmax.f32 %v345, 0.0
        %v378 = vmax.f32 %v346, 0.0
        %v379 = vmax.f32 %v347, 0.0
        %v380 = vmax.f32 %v348, 0.0
        %v381 = vmax.f32 %v349, 0.0
        %v382 = vmax.f32 %v350, 0.0
        %v383 = vmax.f32 %v351, 0.0
        %v384 = vmax.f32 %v352, 0.0
        %v385 = vmax.f32 %v353, 0.0
        %v386 = vmax.f32 %v354, 0.0
        %v387 = vmax.f32 %v355, 0.0
        %388 = vst [vmem:[%s213] sm:$0xff] %v356
        %389 = vst [vmem:[%s213 + $0x8] sm:$0xff] %v357
        %390 = vst [vmem:[%s213 + $0x10] sm:$0xff] %v358
        %391 = vst [vmem:[%s213 + $0x18] sm:$0xff] %v359
        %392 = vst [vmem:[%s213 + $0x20] sm:$0xff] %v360
        %393 = vst [vmem:[%s213 + $0x28] sm:$0xff] %v361
        %394 = vst [vmem:[%s213 + $0x30] sm:$0xff] %v362
        %395 = vst [vmem:[%s213 + $0x38] sm:$0xff] %v363
        %396 = vst [vmem:[%s213 + $0x40] sm:$0xff] %v364
        %397 = vst [vmem:[%s213 + $0x48] sm:$0xff] %v365
        %398 = vst [vmem:[%s213 + $0x50] sm:$0xff] %v366
        %399 = vst [vmem:[%s213 + $0x58] sm:$0xff] %v367
        %400 = vst [vmem:[%s213 + $0x60] sm:$0xff] %v368
        %401 = vst [vmem:[%s213 + $0x68] sm:$0xff] %v369
        %402 = vst [vmem:[%s213 + $0x70] sm:$0xff] %v370
        %403 = vst [vmem:[%s213 + $0x78] sm:$0xff] %v371
        %404 = vst [vmem:[%s213 + $0x80] sm:$0xff] %v372
        %405 = vst [vmem:[%s213 + $0x88] sm:$0xff] %v373
        %406 = vst [vmem:[%s213 + $0x90] sm:$0xff] %v374
        %407 = vst [vmem:[%s213 + $0x98] sm:$0xff] %v375
        %408 = vst [vmem:[%s213 + $0xa0] sm:$0xff] %v376
        %409 = vst [vmem:[%s213 + $0xa8] sm:$0xff] %v377
        %410 = vst [vmem:[%s213 + $0xb0] sm:$0xff] %v378
        %411 = vst [vmem:[%s213 + $0xb8] sm:$0xff] %v379
        %412 = vst [vmem:[%s213 + $0xc0] sm:$0xff] %v380
        %413 = vst [vmem:[%s213 + $0xc8] sm:$0xff] %v381
        %414 = vst [vmem:[%s213 + $0xd0] sm:$0xff] %v382
        %415 = vst [vmem:[%s213 + $0xd8] sm:$0xff] %v383
        %416 = vst [vmem:[%s213 + $0xe0] sm:$0xff] %v384
        %417 = vst [vmem:[%s213 + $0xe8] sm:$0xff] %v385
        %418 = vst [vmem:[%s213 + $0xf0] sm:$0xff] %v386
        %419 = vst [vmem:[%s213 + $0xf8] sm:$0xff] %v387
        %s420 = sand.u32 %s97, 1
        %s421 = scalar_lea.sflag [#allocation4], %s420
        %s422 = sand.u32 %s97, 1
        %s423 = smul.addr %s422, 256
        %s424 = scalar_lea.vmem [#allocation8], %s423
        // Predicated region
        $region45: #{_double_conv.5} parent=31 // pred_check
          %p425 = pneg %p107
        $region46: #{_double_conv.5} parent=31 // pred_check_branch
          %427 = sbr.rel (%p425) target = $region48
        $region47: #{_double_conv.5} parent=31 // pred_region
          %s429 = ssub.s32 4096, 4096
          %430 = vsyncadd %s421, %s429
          %s431 = smul.addr %s21, 32
          %s432 = smul.addr %s431, 128
          %s433 = scalar_lea.hbm %s3, %s432
          %s434 = sshll.u32 %s424, 4
          %s435 = int_to_ptr.vmem [resolvable:$true] %s434
          %440 = dma.vmem_to_hbm [thread:$0]  %s435, 4096, %s433, %s421, 128, 128, 8
        $region48: #{_double_conv.5} parent=31 // pred_fallthru
          _
      $region32: #{_double_conv.5} parent=5 // pred_fallthru
        _
      %p441 = scmp.le.s32.totalorder 2, %s16
      // Predicated region
      $region49: #{_double_conv.5} parent=5 // pred_check
        %p442 = pneg %p441
      $region50: #{_double_conv.5} parent=5 // pred_check_branch
        %444 = sbr.rel (%p442) target = $region52
      $region51: #{_double_conv.5} parent=5 // pred_region
        %s445 = ssub.s32 %s16, 2
        // Predicated region
        $region53: #{_double_conv.5} parent=51 // pred_check
          %p446 = pneg %p113
        $region54: #{_double_conv.5} parent=51 // pred_check_branch
          %448 = sbr.rel (%p446) target = $region56
        $region55: #{_double_conv.5} parent=51 // pred_region
          %s449 = sand.u32 %s98, 1
          %s450 = scalar_lea.sflag [#allocation4], %s449
          %s451 = sand.u32 %s98, 1
          %s452 = smul.addr %s451, 256
          %s453 = scalar_lea.vmem [#allocation8], %s452
          %454 = dma.done %s450, 4096
        $region56: #{_double_conv.5} parent=51 // pred_fallthru
          _
      $region52: #{_double_conv.5} parent=5 // pred_fallthru
        _
    $region6: #{_double_conv.5} parent=1 // loop_footer
      %s20 = sadd.s32 1, %s16
    $region7: #{_double_conv.5} parent=1 // loop_footer_branch
      %15 = sbr.rel target = $region3
    $region8: #{_double_conv.5} parent=1 // loop_exit
      _
    %455 = vsyncpa [#allocation3], 1
    %s456 = scalar_lea.sflag [#allocation3], 1
    %457 = vsyncpa %s456, 1
    %458 = vsyncpa [#allocation6], 1
    %459 = vsyncpa [#allocation4], 1
    %s460 = scalar_lea.sflag [#allocation4], 1
    %461 = vsyncpa %s460, 1

// kernel: _double_conv.3
$region0: #{_double_conv.3}
  #allocation0 [shape = 'u32[]', space=smem, size = 0x4, offset = 0x4, fixed_abs, tag = 'smem constant byte address 0x4 - core index']
  #allocation1 [shape = 'u32[144,128]{1,0:T(1,128)}', space=vmem, size = 0x12000, scoped, tag = 'internal scratch']
  #allocation2 [shape = 'bf16[256,36]{1,0:T(16,128)(2,1)}', space=vmem, size = 0x10000, scoped, tag = 'scratch operand']
  %s0 = inlined_call_operand.hbm [shape: f32[2,18,18,4], index: 0, kind: input, shape index: {}]
  %s1 = inlined_call_operand.hbm [shape: bf16[36,128], index: 1, kind: input, shape index: {}]
  %s2 = inlined_call_operand.hbm [shape: bf16[2,256,128], index: 2, kind: output, shape index: {0}]
  %s3 = inlined_call_operand.hbm [shape: f32[2,1,128], index: 3, kind: output, shape index: {1}]
  %s4 = inlined_call_operand.hbm [shape: f32[2,1,128], index: 4, kind: output, shape index: {2}]
  %5 = xla_tuple %s2, %s3, %s4
  %s6 = sld [smem:[#allocation0]]
  $region65: #{_double_conv.3} parent=0
    _
  %s8 = ssub.s32 1, %s6
  %s9 = scalar_select 0, %s8, %s6
  $region1: #{_double_conv.3} parent=0
    #allocation3 [shape = 'u8[442368]{0}', space=vmem, size = 0x6c000, scoped, tag = 'input window, operand 0']
    #allocation4 [shape = 's32[2]{0}', space=sflag, size = 0x8, scoped, tag = 'scoped memory for _double_conv.3']
    #allocation5 [shape = 's32[2]{0}', space=sflag, size = 0x8, scoped, tag = 'scoped memory for _double_conv.3']
    #allocation6 [shape = 'u8[10240]{0}', space=vmem, size = 0x2800, scoped, tag = 'input window, operand 1, single buffered']
    #allocation7 [shape = 's32[1]{0}', space=sflag, size = 0x4, scoped, tag = 'scoped memory for _double_conv.3']
    #allocation8 [shape = 'u8[131072]{0}', space=vmem, size = 0x20000, scoped, tag = 'output window, operand 0']
    #allocation9 [shape = 'u8[1024]{0}', space=vmem, size = 0x400, scoped, tag = 'output window, operand 1']
    #allocation10 [shape = 's32[2]{0}', space=sflag, size = 0x8, scoped, tag = 'scoped memory for _double_conv.3']
    #allocation11 [shape = 'u8[1024]{0}', space=vmem, size = 0x400, scoped, tag = 'output window, operand 2']
    %10 = vsyncpa [#allocation4], 0
    %s11 = scalar_lea.sflag [#allocation4], 1
    %12 = vsyncpa %s11, 0
    %13 = vsyncpa [#allocation7], 0
    %14 = vsyncpa [#allocation5], 0
    %s15 = scalar_lea.sflag [#allocation5], 1
    %16 = vsyncpa %s15, 0
    %17 = vsyncpa [#allocation10], 0
    %s18 = scalar_lea.sflag [#allocation10], 1
    %19 = vsyncpa %s18, 0
    loop: start=0, step=1, limit=4
    $region2: #{_double_conv.3} parent=1 // loop_pre_header
      _
    $region3: #{_double_conv.3} parent=1 // loop_header
      %s21 = sphi 0, %s25
      %p22 = scmp.ge.s32.totalorder %s21, 4
      %s31 = sphi 0, %s33
      %s34 = sphi 0, %s31
      %s35 = sphi 0, %s34
      %s51 = sphi 0, %s35
      %s55 = sphi 0, %s55
      %s57 = sphi 0, %s55
      %s58 = sphi 0, %s57
      %s72 = sphi 0, %s58
      %s78 = sphi 0, %s80
      %s81 = sphi 0, %s78
      %s82 = sphi 0, %s81
      %s98 = sphi 0, %s82
      %s104 = sphi 0, %s106
      %s107 = sphi 0, %s104
      %s108 = sphi 0, %s107
      %s124 = sphi 0, %s108
      %s130 = sphi 0, %s132
      %s133 = sphi 0, %s130
      %s134 = sphi 0, %s133
      %s150 = sphi 0, %s134
    $region4: #{_double_conv.3} parent=1 // loop_header_branch
      %24 = sbr.rel (%p22) target = $region8
    $region5: #{_double_conv.3} parent=1 // loop_body
      %s26 = ssub.s32 %s21, 1
      %s27 = ssub.s32 %s21, 2
      %s28 = sadd.s32 %s21, 1
      %s29 = ssub.s32 %s21, %s28
      %p30 = scmp.eq.s32.totalorder %s29, 0
      %s32 = sadd.s32 %s31, 1
      %s33 = scalar_select %p30, %s31, %s32
      %p36 = pneg %p30
      %p37 = scmp.eq.s32.totalorder %s21, 1
      %p38 = por %p36, %p37
      %p39 = scmp.ne.s32.totalorder %s31, %s34
      %p40 = scmp.eq.s32.totalorder %s21, 0
      %p41 = por %p39, %p40
      %p42 = scmp.ne.s32.totalorder %s31, %s34
      %p43 = scmp.eq.s32.totalorder %s26, 1
      %p44 = por %p42, %p43
      %p45 = scmp.ne.s32.totalorder %s34, %s35
      %p46 = scmp.eq.s32.totalorder %s26, 0
      %p47 = por %p45, %p46
      %p48 = scmp.ne.s32.totalorder %s34, %s35
      %p49 = scmp.eq.s32.totalorder %s27, 1
      %p50 = por %p48, %p49
      %p52 = scmp.ne.s32.totalorder %s35, %s51
      %p53 = scmp.eq.s32.totalorder %s27, 0
      %p54 = por %p52, %p53
      %s56 = sadd.s32 %s55, 1
      %p59 = scmp.eq.s32.totalorder %s21, 1
      %p60 = scmp.ne.s32.totalorder %s55, %s57
      %p61 = scmp.eq.s32.totalorder %s21, 0
      %p62 = por %p60, %p61
      %p63 = scmp.ne.s32.totalorder %s55, %s57
      %p64 = scmp.eq.s32.totalorder %s26, 1
      %p65 = por %p63, %p64
      %p66 = scmp.ne.s32.totalorder %s57, %s58
      %p67 = scmp.eq.s32.totalorder %s26, 0
      %p68 = por %p66, %p67
      %p69 = scmp.ne.s32.totalorder %s57, %s58
      %p70 = scmp.eq.s32.totalorder %s27, 1
      %p71 = por %p69, %p70
      %p73 = scmp.ne.s32.totalorder %s58, %s72
      %p74 = scmp.eq.s32.totalorder %s27, 0
      %p75 = por %p73, %p74
      %s76 = ssub.s32 %s21, %s28
      %p77 = scmp.eq.s32.totalorder %s76, 0
      %s79 = sadd.s32 %s78, 1
      %s80 = scalar_select %p77, %s78, %s79
      %p83 = pneg %p77
      %p84 = scmp.eq.s32.totalorder %s21, 1
      %p85 = por %p83, %p84
      %p86 = scmp.ne.s32.totalorder %s78, %s81
      %p87 = scmp.eq.s32.totalorder %s21, 0
      %p88 = por %p86, %p87
      %p89 = scmp.ne.s32.totalorder %s78, %s81
      %p90 = scmp.eq.s32.totalorder %s26, 1
      %p91 = por %p89, %p90
      %p92 = scmp.ne.s32.totalorder %s81, %s82
      %p93 = scmp.eq.s32.totalorder %s26, 0
      %p94 = por %p92, %p93
      %p95 = scmp.ne.s32.totalorder %s81, %s82
      %p96 = scmp.eq.s32.totalorder %s27, 1
      %p97 = por %p95, %p96
      %p99 = scmp.ne.s32.totalorder %s82, %s98
      %p100 = scmp.eq.s32.totalorder %s27, 0
      %p101 = por %p99, %p100
      %s102 = ssub.s32 %s21, %s28
      %p103 = scmp.eq.s32.totalorder %s102, 0
      %s105 = sadd.s32 %s104, 1
      %s106 = scalar_select %p103, %s104, %s105
      %p109 = pneg %p103
      %p110 = scmp.eq.s32.totalorder %s21, 1
      %p111 = por %p109, %p110
      %p112 = scmp.ne.s32.totalorder %s104, %s107
      %p113 = scmp.eq.s32.totalorder %s21, 0
      %p114 = por %p112, %p113
      %p115 = scmp.ne.s32.totalorder %s104, %s107
      %p116 = scmp.eq.s32.totalorder %s26, 1
      %p117 = por %p115, %p116
      %p118 = scmp.ne.s32.totalorder %s107, %s108
      %p119 = scmp.eq.s32.totalorder %s26, 0
      %p120 = por %p118, %p119
      %p121 = scmp.ne.s32.totalorder %s107, %s108
      %p122 = scmp.eq.s32.totalorder %s27, 1
      %p123 = por %p121, %p122
      %p125 = scmp.ne.s32.totalorder %s108, %s124
      %p126 = scmp.eq.s32.totalorder %s27, 0
      %p127 = por %p125, %p126
      %s128 = ssub.s32 %s21, %s28
      %p129 = scmp.eq.s32.totalorder %s128, 0
      %s131 = sadd.s32 %s130, 1
      %s132 = scalar_select %p129, %s130, %s131
      %p135 = pneg %p129
      %p136 = scmp.eq.s32.totalorder %s21, 1
      %p137 = por %p135, %p136
      %p138 = scmp.ne.s32.totalorder %s130, %s133
      %p139 = scmp.eq.s32.totalorder %s21, 0
      %p140 = por %p138, %p139
      %p141 = scmp.ne.s32.totalorder %s130, %s133
      %p142 = scmp.eq.s32.totalorder %s26, 1
      %p143 = por %p141, %p142
      %p144 = scmp.ne.s32.totalorder %s133, %s134
      %p145 = scmp.eq.s32.totalorder %s26, 0
      %p146 = por %p144, %p145
      %p147 = scmp.ne.s32.totalorder %s133, %s134
      %p148 = scmp.eq.s32.totalorder %s27, 1
      %p149 = por %p147, %p148
      %p151 = scmp.ne.s32.totalorder %s134, %s150
      %p152 = scmp.eq.s32.totalorder %s27, 0
      %p153 = por %p151, %p152
      %p154 = scmp.le.s32.totalorder 1, %s21
      %p155 = scmp.lt.s32.totalorder %s21, 3
      %p156 = pnand %p154, %p155
      %p157 = pneg %p156
      // Predicated region
      $region9: #{_double_conv.3} parent=5 // pred_check
        _
      $region10: #{_double_conv.3} parent=5 // pred_check_branch
        %159 = sbr.rel (%p156) target = $region12
      $region11: #{_double_conv.3} parent=5 // pred_region
        %s160 = ssub.s32 %s21, 1
        // Predicated region
        $region13: #{_double_conv.3} parent=11 // pred_check
          %p161 = pneg %p68
        $region14: #{_double_conv.3} parent=11 // pred_check_branch
          %163 = sbr.rel (%p161) target = $region16
        $region15: #{_double_conv.3} parent=11 // pred_region
          %s165 = ssub.s32 320, 320
          %166 = vsyncadd [#allocation7], %s165
          %s167 = sshll.u32 [#allocation6], 4
          %s168 = int_to_ptr.vmem [resolvable:$true] %s167
          %173 = dma.hbm_to_vmem [thread:$0]  %s1, 320, %s168, [#allocation7], 64, 64, 4
        $region16: #{_double_conv.3} parent=11 // pred_fallthru
          _
      $region12: #{_double_conv.3} parent=5 // pred_fallthru
        _
      %p174 = scmp.lt.s32.totalorder %s21, 2
      // Predicated region
      $region17: #{_double_conv.3} parent=5 // pred_check
        %p175 = pneg %p174
      $region18: #{_double_conv.3} parent=5 // pred_check_branch
        %177 = sbr.rel (%p175) target = $region20
      $region19: #{_double_conv.3} parent=5 // pred_region
        // Predicated region
        $region21: #{_double_conv.3} parent=19 // pred_check
          %p178 = pneg %p41
        $region22: #{_double_conv.3} parent=19 // pred_check_branch
          %180 = sbr.rel (%p178) target = $region24
        $region23: #{_double_conv.3} parent=19 // pred_region
          %s181 = sand.u32 %s31, 1
          %s182 = scalar_lea.sflag [#allocation4], %s181
          %s183 = sand.u32 %s31, 1
          %s184 = smul.addr %s183, 432
          %s185 = scalar_lea.vmem [#allocation3], %s184
          %s187 = ssub.s32 6912, 6912
          %188 = vsyncadd %s182, %s187
          %s189 = smul.addr %s21, 54
          %s190 = smul.addr %s189, 128
          %s191 = scalar_lea.hbm %s0, %s190
          %s192 = sshll.u32 %s185, 4
          %s193 = int_to_ptr.vmem [resolvable:$true] %s192
          %198 = dma.hbm_to_vmem [thread:$0]  %s191, 6912, %s193, %s182, 128, 128, 8
        $region24: #{_double_conv.3} parent=19 // pred_fallthru
          _
      $region20: #{_double_conv.3} parent=5 // pred_fallthru
        _
      %p199 = scmp.le.s32.totalorder 1, %s21
      %p200 = scmp.lt.s32.totalorder %s21, 3
      %p201 = pnand %p199, %p200
      %p202 = pneg %p201
      // Predicated region
      $region25: #{_double_conv.3} parent=5 // pred_check
        _
      $region26: #{_double_conv.3} parent=5 // pred_check_branch
        %204 = sbr.rel (%p201) target = $region28
      $region27: #{_double_conv.3} parent=5 // pred_region
        %s205 = ssub.s32 %s21, 1
        %s206 = sand.u32 %s34, 1
        %s207 = scalar_lea.sflag [#allocation4], %s206
        %s208 = sand.u32 %s34, 1
        %s209 = smul.addr %s208, 432
        %s210 = scalar_lea.vmem [#allocation3], %s209
        // Predicated region
        $region29: #{_double_conv.3} parent=27 // pred_check
          %p211 = pneg %p47
        $region30: #{_double_conv.3} parent=27 // pred_check_branch
          %213 = sbr.rel (%p211) target = $region32
        $region31: #{_double_conv.3} parent=27 // pred_region
          %214 = dma.done %s207, 6912
        $region32: #{_double_conv.3} parent=27 // pred_fallthru
          _
        // Predicated region
        $region33: #{_double_conv.3} parent=27 // pred_check
          %p215 = pneg %p68
        $region34: #{_double_conv.3} parent=27 // pred_check_branch
          %217 = sbr.rel (%p215) target = $region36
        $region35: #{_double_conv.3} parent=27 // pred_region
          %218 = dma.done [#allocation7], 320
        $region36: #{_double_conv.3} parent=27 // pred_fallthru
          _
        %s219 = sand.u32 %s34, 1
        %s220 = scalar_lea.sflag [#allocation4], %s219
        %s221 = sand.u32 %s34, 1
        %s222 = smul.addr %s221, 432
        %s223 = scalar_lea.vmem [#allocation3], %s222
        %p224 = pneg %p47
        %p225 = pneg %p44
        %p226 = pneg %p68
        %p227 = pneg %p65
        %p228 = pneg %p94
        %p229 = pneg %p91
        %s230 = sand.u32 %s81, 1
        %s231 = scalar_lea.sflag [#allocation5], %s230
        %s232 = sand.u32 %s81, 1
        %s233 = smul.addr %s232, 128
        %s234 = scalar_lea.vmem [#allocation8], %s233
        %p235 = pneg %p120
        %p236 = pneg %p117
        %s237 = sand.u32 %s26, 1
        %s238 = scalar_lea.sflag [#allocation10], %s237
        %s239 = sand.u32 %s107, 1
        %s240 = scalar_lea.vmem [#allocation9], %s239
        %p241 = pneg %p146
        %p242 = pneg %p143
        %s243 = sand.u32 %s26, 1
        %s244 = scalar_lea.sflag [#allocation10], %s243
        %s245 = sand.u32 %s133, 1
        %s246 = scalar_lea.vmem [#allocation11], %s245
        %v248 = vld [vmem:[%s210] sm:$0xff]
        %v249 = vld [vmem:[%s210 + $0x8] sm:$0xff]
        %v250 = vld [vmem:[%s210 + $0x10] sm:$0x3]
        %v251 = vld [vmem:[%s210 + $0x18] sm:$0xff]
        %v252 = vld [vmem:[%s210 + $0x20] sm:$0xff]
        %v253 = vld [vmem:[%s210 + $0x28] sm:$0x3]
        %v254 = vld [vmem:[%s210 + $0x30] sm:$0xff]
        %v255 = vld [vmem:[%s210 + $0x38] sm:$0xff]
        %v256 = vld [vmem:[%s210 + $0x40] sm:$0x3]
        %v257 = vld [vmem:[%s210 + $0x48] sm:$0xff]
        %v258 = vld [vmem:[%s210 + $0x50] sm:$0xff]
        %v259 = vld [vmem:[%s210 + $0x58] sm:$0x3]
        %v260 = vld [vmem:[%s210 + $0x60] sm:$0xff]
        %v261 = vld [vmem:[%s210 + $0x68] sm:$0xff]
        %v262 = vld [vmem:[%s210 + $0x70] sm:$0x3]
        %v263 = vld [vmem:[%s210 + $0x78] sm:$0xff]
        %v264 = vld [vmem:[%s210 + $0x80] sm:$0xff]
        %v265 = vld [vmem:[%s210 + $0x88] sm:$0x3]
        %v266 = vld [vmem:[%s210 + $0x90] sm:$0xff]
        %v267 = vld [vmem:[%s210 + $0x98] sm:$0xff]
        %v268 = vld [vmem:[%s210 + $0xa0] sm:$0x3]
        %v269 = vld [vmem:[%s210 + $0xa8] sm:$0xff]
        %v270 = vld [vmem:[%s210 + $0xb0] sm:$0xff]
        %v271 = vld [vmem:[%s210 + $0xb8] sm:$0x3]
        %v272 = vld [vmem:[%s210 + $0xc0] sm:$0xff]
        %v273 = vld [vmem:[%s210 + $0xc8] sm:$0xff]
        %v274 = vld [vmem:[%s210 + $0xd0] sm:$0x3]
        %v275 = vld [vmem:[%s210 + $0xd8] sm:$0xff]
        %v276 = vld [vmem:[%s210 + $0xe0] sm:$0xff]
        %v277 = vld [vmem:[%s210 + $0xe8] sm:$0x3]
        %v278 = vld [vmem:[%s210 + $0xf0] sm:$0xff]
        %v279 = vld [vmem:[%s210 + $0xf8] sm:$0xff]
        %v280 = vld [vmem:[%s210 + $0x100] sm:$0x3]
        %v281 = vld [vmem:[%s210 + $0x108] sm:$0xff]
        %v282 = vld [vmem:[%s210 + $0x110] sm:$0xff]
        %v283 = vld [vmem:[%s210 + $0x118] sm:$0x3]
        %v284 = vld [vmem:[%s210 + $0x120] sm:$0xff]
        %v285 = vld [vmem:[%s210 + $0x128] sm:$0xff]
        %v286 = vld [vmem:[%s210 + $0x130] sm:$0x3]
        %v287 = vld [vmem:[%s210 + $0x138] sm:$0xff]
        %v288 = vld [vmem:[%s210 + $0x140] sm:$0xff]
        %v289 = vld [vmem:[%s210 + $0x148] sm:$0x3]
        %v290 = vld [vmem:[%s210 + $0x150] sm:$0xff]
        %v291 = vld [vmem:[%s210 + $0x158] sm:$0xff]
        %v292 = vld [vmem:[%s210 + $0x160] sm:$0x3]
        %v293 = vld [vmem:[%s210 + $0x168] sm:$0xff]
        %v294 = vld [vmem:[%s210 + $0x170] sm:$0xff]
        %v295 = vld [vmem:[%s210 + $0x178] sm:$0x3]
        %v296 = vld [vmem:[%s210 + $0x180] sm:$0xff]
        %v297 = vld [vmem:[%s210 + $0x188] sm:$0xff]
        %v298 = vld [vmem:[%s210 + $0x190] sm:$0x3]
        %v299 = vld [vmem:[%s210 + $0x198] sm:$0xff]
        %v300 = vld [vmem:[%s210 + $0x1a0] sm:$0xff]
        %v301 = vld [vmem:[%s210 + $0x1a8] sm:$0x3]
        %v302 = vpack.c.bf16 %v249, %v248
        %v303 = vpack.c.bf16 %v250, %v250
        %v304 = vpack.c.bf16 %v252, %v251
        %v305 = vpack.c.bf16 %v253, %v253
        %v306 = vpack.c.bf16 %v255, %v254
        %v307 = vpack.c.bf16 %v256, %v256
        %v308 = vpack.c.bf16 %v258, %v257
        %v309 = vpack.c.bf16 %v259, %v259
        %v310 = vpack.c.bf16 %v261, %v260
        %v311 = vpack.c.bf16 %v262, %v262
        %v312 = vpack.c.bf16 %v264, %v263
        %v313 = vpack.c.bf16 %v265, %v265
        %v314 = vpack.c.bf16 %v267, %v266
        %v315 = vpack.c.bf16 %v268, %v268
        %v316 = vpack.c.bf16 %v270, %v269
        %v317 = vpack.c.bf16 %v271, %v271
        %v318 = vpack.c.bf16 %v273, %v272
        %v319 = vpack.c.bf16 %v274, %v274
        %v320 = vpack.c.bf16 %v276, %v275
        %v321 = vpack.c.bf16 %v277, %v277
        %v322 = vpack.c.bf16 %v279, %v278
        %v323 = vpack.c.bf16 %v280, %v280
        %v324 = vpack.c.bf16 %v282, %v281
        %v325 = vpack.c.bf16 %v283, %v283
        %v326 = vpack.c.bf16 %v285, %v284
        %v327 = vpack.c.bf16 %v286, %v286
        %v328 = vpack.c.bf16 %v288, %v287
        %v329 = vpack.c.bf16 %v289, %v289
        %v330 = vpack.c.bf16 %v291, %v290
        %v331 = vpack.c.bf16 %v292, %v292
        %v332 = vpack.c.bf16 %v294, %v293
        %v333 = vpack.c.bf16 %v295, %v295
        %v334 = vpack.c.bf16 %v297, %v296
        %v335 = vpack.c.bf16 %v298, %v298
        %v336 = vpack.c.bf16 %v300, %v299
        %v337 = vpack.c.bf16 %v301, %v301
        %vm338 = vcmask 31744
        %339 = vst.msk [vmem:[#allocation2] sm:$0xff] %vm338, %v302
        %340 = vst.msk [vmem:[#allocation2 + $0x8] sm:$0xff] %vm338, %v304
        %341 = vst.msk [vmem:[#allocation2 + $0x10] sm:$0xff] %vm338, %v306
        %342 = vst.msk [vmem:[#allocation2 + $0x18] sm:$0xff] %vm338, %v308
        %343 = vst.msk [vmem:[#allocation2 + $0x20] sm:$0xff] %vm338, %v310
        %344 = vst.msk [vmem:[#allocation2 + $0x28] sm:$0xff] %vm338, %v312
        %345 = vst.msk [vmem:[#allocation2 + $0x30] sm:$0xff] %vm338, %v314
        %346 = vst.msk [vmem:[#allocation2 + $0x38] sm:$0xff] %vm338, %v316
        %347 = vst.msk [vmem:[#allocation2 + $0x40] sm:$0xff] %vm338, %v318
        %348 = vst.msk [vmem:[#allocation2 + $0x48] sm:$0xff] %vm338, %v320
        %349 = vst.msk [vmem:[#allocation2 + $0x50] sm:$0xff] %vm338, %v322
        %350 = vst.msk [vmem:[#allocation2 + $0x58] sm:$0xff] %vm338, %v324
        %351 = vst.msk [vmem:[#allocation2 + $0x60] sm:$0xff] %vm338, %v326
        %352 = vst.msk [vmem:[#allocation2 + $0x68] sm:$0xff] %vm338, %v328
        %353 = vst.msk [vmem:[#allocation2 + $0x70] sm:$0xff] %vm338, %v330
        %354 = vst.msk [vmem:[#allocation2 + $0x78] sm:$0xff] %vm338, %v332
        %vm355 = vsmask.f32 7424
        %v357 = vshrl.u32 %v302, 16
        %v359 = vshll.u32 %v302, 16
        %v361 = vrot.slane %v359, 1
        %v362 = vor.u32 %v357, %v361
        %v364 = vshll.u32 %v303, 16
        %v366 = vrot.slane %v364, 1
        %v367 = vsel %vm355, %v362, %v366
        %v369 = vshrl.u32 %v304, 16
        %v371 = vshll.u32 %v304, 16
        %v373 = vrot.slane %v371, 1
        %v374 = vor.u32 %v369, %v373
        %v376 = vshll.u32 %v305, 16
        %v378 = vrot.slane %v376, 1
        %v379 = vsel %vm355, %v374, %v378
        %v381 = vshrl.u32 %v306, 16
        %v383 = vshll.u32 %v306, 16
        %v385 = vrot.slane %v383, 1
        %v386 = vor.u32 %v381, %v385
        %v388 = vshll.u32 %v307, 16
        %v390 = vrot.slane %v388, 1
        %v391 = vsel %vm355, %v386, %v390
        %v393 = vshrl.u32 %v308, 16
        %v395 = vshll.u32 %v308, 16
        %v397 = vrot.slane %v395, 1
        %v398 = vor.u32 %v393, %v397
        %v400 = vshll.u32 %v309, 16
        %v402 = vrot.slane %v400, 1
        %v403 = vsel %vm355, %v398, %v402
        %v405 = vshrl.u32 %v310, 16
        %v407 = vshll.u32 %v310, 16
        %v409 = vrot.slane %v407, 1
        %v410 = vor.u32 %v405, %v409
        %v412 = vshll.u32 %v311, 16
        %v414 = vrot.slane %v412, 1
        %v415 = vsel %vm355, %v410, %v414
        %v417 = vshrl.u32 %v312, 16
        %v419 = vshll.u32 %v312, 16
        %v421 = vrot.slane %v419, 1
        %v422 = vor.u32 %v417, %v421
        %v424 = vshll.u32 %v313, 16
        %v426 = vrot.slane %v424, 1
        %v427 = vsel %vm355, %v422, %v426
        %v429 = vshrl.u32 %v314, 16
        %v431 = vshll.u32 %v314, 16
        %v433 = vrot.slane %v431, 1
        %v434 = vor.u32 %v429, %v433
        %v436 = vshll.u32 %v315, 16
        %v438 = vrot.slane %v436, 1
        %v439 = vsel %vm355, %v434, %v438
        %v441 = vshrl.u32 %v316, 16
        %v443 = vshll.u32 %v316, 16
        %v445 = vrot.slane %v443, 1
        %v446 = vor.u32 %v441, %v445
        %v448 = vshll.u32 %v317, 16
        %v450 = vrot.slane %v448, 1
        %v451 = vsel %vm355, %v446, %v450
        %v453 = vshrl.u32 %v318, 16
        %v455 = vshll.u32 %v318, 16
        %v457 = vrot.slane %v455, 1
        %v458 = vor.u32 %v453, %v457
        %v460 = vshll.u32 %v319, 16
        %v462 = vrot.slane %v460, 1
        %v463 = vsel %vm355, %v458, %v462
        %v465 = vshrl.u32 %v320, 16
        %v467 = vshll.u32 %v320, 16
        %v469 = vrot.slane %v467, 1
        %v470 = vor.u32 %v465, %v469
        %v472 = vshll.u32 %v321, 16
        %v474 = vrot.slane %v472, 1
        %v475 = vsel %vm355, %v470, %v474
        %v477 = vshrl.u32 %v322, 16
        %v479 = vshll.u32 %v322, 16
        %v481 = vrot.slane %v479, 1
        %v482 = vor.u32 %v477, %v481
        %v484 = vshll.u32 %v323, 16
        %v486 = vrot.slane %v484, 1
        %v487 = vsel %vm355, %v482, %v486
        %v489 = vshrl.u32 %v324, 16
        %v491 = vshll.u32 %v324, 16
        %v493 = vrot.slane %v491, 1
        %v494 = vor.u32 %v489, %v493
        %v496 = vshll.u32 %v325, 16
        %v498 = vrot.slane %v496, 1
        %v499 = vsel %vm355, %v494, %v498
        %v501 = vshrl.u32 %v326, 16
        %v503 = vshll.u32 %v326, 16
        %v505 = vrot.slane %v503, 1
        %v506 = vor.u32 %v501, %v505
        %v508 = vshll.u32 %v327, 16
        %v510 = vrot.slane %v508, 1
        %v511 = vsel %vm355, %v506, %v510
        %v513 = vshrl.u32 %v328, 16
        %v515 = vshll.u32 %v328, 16
        %v517 = vrot.slane %v515, 1
        %v518 = vor.u32 %v513, %v517
        %v520 = vshll.u32 %v329, 16
        %v522 = vrot.slane %v520, 1
        %v523 = vsel %vm355, %v518, %v522
        %v525 = vshrl.u32 %v330, 16
        %v527 = vshll.u32 %v330, 16
        %v529 = vrot.slane %v527, 1
        %v530 = vor.u32 %v525, %v529
        %v532 = vshll.u32 %v331, 16
        %v534 = vrot.slane %v532, 1
        %v535 = vsel %vm355, %v530, %v534
        %v537 = vshrl.u32 %v332, 16
        %v539 = vshll.u32 %v332, 16
        %v541 = vrot.slane %v539, 1
        %v542 = vor.u32 %v537, %v541
        %v544 = vshll.u32 %v333, 16
        %v546 = vrot.slane %v544, 1
        %v547 = vsel %vm355, %v542, %v546
        %548 = vrot.lane.b32.xlu0 %v367, 4
        %v549 = vpop.permute.xlu0 %548
        %550 = vrot.lane.b32.xlu0 %v379, 4
        %v551 = vpop.permute.xlu0 %550
        %552 = vrot.lane.b32.xlu0 %v391, 4
        %v553 = vpop.permute.xlu0 %552
        %554 = vrot.lane.b32.xlu0 %v403, 4
        %v555 = vpop.permute.xlu0 %554
        %556 = vrot.lane.b32.xlu0 %v415, 4
        %v557 = vpop.permute.xlu0 %556
        %558 = vrot.lane.b32.xlu0 %v427, 4
        %v559 = vpop.permute.xlu0 %558
        %560 = vrot.lane.b32.xlu0 %v439, 4
        %v561 = vpop.permute.xlu0 %560
        %562 = vrot.lane.b32.xlu0 %v451, 4
        %v563 = vpop.permute.xlu0 %562
        %564 = vrot.lane.b32.xlu0 %v463, 4
        %v565 = vpop.permute.xlu0 %564
        %566 = vrot.lane.b32.xlu0 %v475, 4
        %v567 = vpop.permute.xlu0 %566
        %568 = vrot.lane.b32.xlu0 %v487, 4
        %v569 = vpop.permute.xlu0 %568
        %570 = vrot.lane.b32.xlu0 %v499, 4
        %v571 = vpop.permute.xlu0 %570
        %572 = vrot.lane.b32.xlu0 %v511, 4
        %v573 = vpop.permute.xlu0 %572
        %574 = vrot.lane.b32.xlu0 %v523, 4
        %v575 = vpop.permute.xlu0 %574
        %576 = vrot.lane.b32.xlu0 %v535, 4
        %v577 = vpop.permute.xlu0 %576
        %578 = vrot.lane.b32.xlu0 %v547, 4
        %v579 = vpop.permute.xlu0 %578
        %vm596 = vcmask 64544
        %597 = vst.msk [vmem:[#allocation2] sm:$0xff] %vm596, %v549
        %598 = vst.msk [vmem:[#allocation2 + $0x8] sm:$0xff] %vm596, %v551
        %599 = vst.msk [vmem:[#allocation2 + $0x10] sm:$0xff] %vm596, %v553
        %600 = vst.msk [vmem:[#allocation2 + $0x18] sm:$0xff] %vm596, %v555
        %601 = vst.msk [vmem:[#allocation2 + $0x20] sm:$0xff] %vm596, %v557
        %602 = vst.msk [vmem:[#allocation2 + $0x28] sm:$0xff] %vm596, %v559
        %603 = vst.msk [vmem:[#allocation2 + $0x30] sm:$0xff] %vm596, %v561
        %604 = vst.msk [vmem:[#allocation2 + $0x38] sm:$0xff] %vm596, %v563
        %605 = vst.msk [vmem:[#allocation2 + $0x40] sm:$0xff] %vm596, %v565
        %606 = vst.msk [vmem:[#allocation2 + $0x48] sm:$0xff] %vm596, %v567
        %607 = vst.msk [vmem:[#allocation2 + $0x50] sm:$0xff] %vm596, %v569
        %608 = vst.msk [vmem:[#allocation2 + $0x58] sm:$0xff] %vm596, %v571
        %609 = vst.msk [vmem:[#allocation2 + $0x60] sm:$0xff] %vm596, %v573
        %610 = vst.msk [vmem:[#allocation2 + $0x68] sm:$0xff] %vm596, %v575
        %611 = vst.msk [vmem:[#allocation2 + $0x70] sm:$0xff] %vm596, %v577
        %612 = vst.msk [vmem:[#allocation2 + $0x78] sm:$0xff] %vm596, %v579
        %vm645 = vcmask 1046528
        %v646 = vrot.slane %v302, 1
        %v647 = vrot.slane %v303, 1
        %v648 = vsel %vm645, %v646, %v647
        %v649 = vrot.slane %v304, 1
        %v650 = vrot.slane %v305, 1
        %v651 = vsel %vm645, %v649, %v650
        %v652 = vrot.slane %v306, 1
        %v653 = vrot.slane %v307, 1
        %v654 = vsel %vm645, %v652, %v653
        %v655 = vrot.slane %v308, 1
        %v656 = vrot.slane %v309, 1
        %v657 = vsel %vm645, %v655, %v656
        %v658 = vrot.slane %v310, 1
        %v659 = vrot.slane %v311, 1
        %v660 = vsel %vm645, %v658, %v659
        %v661 = vrot.slane %v312, 1
        %v662 = vrot.slane %v313, 1
        %v663 = vsel %vm645, %v661, %v662
        %v664 = vrot.slane %v314, 1
        %v665 = vrot.slane %v315, 1
        %v666 = vsel %vm645, %v664, %v665
        %v667 = vrot.slane %v316, 1
        %v668 = vrot.slane %v317, 1
        %v669 = vsel %vm645, %v667, %v668
        %v670 = vrot.slane %v318, 1
        %v671 = vrot.slane %v319, 1
        %v672 = vsel %vm645, %v670, %v671
        %v673 = vrot.slane %v320, 1
        %v674 = vrot.slane %v321, 1
        %v675 = vsel %vm645, %v673, %v674
        %v676 = vrot.slane %v322, 1
        %v677 = vrot.slane %v323, 1
        %v678 = vsel %vm645, %v676, %v677
        %v679 = vrot.slane %v324, 1
        %v680 = vrot.slane %v325, 1
        %v681 = vsel %vm645, %v679, %v680
        %v682 = vrot.slane %v326, 1
        %v683 = vrot.slane %v327, 1
        %v684 = vsel %vm645, %v682, %v683
        %v685 = vrot.slane %v328, 1
        %v686 = vrot.slane %v329, 1
        %v687 = vsel %vm645, %v685, %v686
        %v688 = vrot.slane %v330, 1
        %v689 = vrot.slane %v331, 1
        %v690 = vsel %vm645, %v688, %v689
        %v691 = vrot.slane %v332, 1
        %v692 = vrot.slane %v333, 1
        %v693 = vsel %vm645, %v691, %v692
        %694 = vrot.lane.b32.xlu0 %v648, 8
        %v695 = vpop.permute.xlu0 %694
        %696 = vrot.lane.b32.xlu0 %v651, 8
        %v697 = vpop.permute.xlu0 %696
        %698 = vrot.lane.b32.xlu0 %v654, 8
        %v699 = vpop.permute.xlu0 %698
        %700 = vrot.lane.b32.xlu0 %v657, 8
        %v701 = vpop.permute.xlu0 %700
        %702 = vrot.lane.b32.xlu0 %v660, 8
        %v703 = vpop.permute.xlu0 %702
        %704 = vrot.lane.b32.xlu0 %v663, 8
        %v705 = vpop.permute.xlu0 %704
        %706 = vrot.lane.b32.xlu0 %v666, 8
        %v707 = vpop.permute.xlu0 %706
        %708 = vrot.lane.b32.xlu0 %v669, 8
        %v709 = vpop.permute.xlu0 %708
        %710 = vrot.lane.b32.xlu0 %v672, 8
        %v711 = vpop.permute.xlu0 %710
        %712 = vrot.lane.b32.xlu0 %v675, 8
        %v713 = vpop.permute.xlu0 %712
        %714 = vrot.lane.b32.xlu0 %v678, 8
        %v715 = vpop.permute.xlu0 %714
        %716 = vrot.lane.b32.xlu0 %v681, 8
        %v717 = vpop.permute.xlu0 %716
        %718 = vrot.lane.b32.xlu0 %v684, 8
        %v719 = vpop.permute.xlu0 %718
        %720 = vrot.lane.b32.xlu0 %v687, 8
        %v721 = vpop.permute.xlu0 %720
        %722 = vrot.lane.b32.xlu0 %v690, 8
        %v723 = vpop.permute.xlu0 %722
        %724 = vrot.lane.b32.xlu0 %v693, 8
        %v725 = vpop.permute.xlu0 %724
        %vm742 = vcmask 97344
        %743 = vst.msk [vmem:[#allocation2] sm:$0xff] %vm742, %v695
        %744 = vst.msk [vmem:[#allocation2 + $0x8] sm:$0xff] %vm742, %v697
        %745 = vst.msk [vmem:[#allocation2 + $0x10] sm:$0xff] %vm742, %v699
        %746 = vst.msk [vmem:[#allocation2 + $0x18] sm:$0xff] %vm742, %v701
        %747 = vst.msk [vmem:[#allocation2 + $0x20] sm:$0xff] %vm742, %v703
        %748 = vst.msk [vmem:[#allocation2 + $0x28] sm:$0xff] %vm742, %v705
        %749 = vst.msk [vmem:[#allocation2 + $0x30] sm:$0xff] %vm742, %v707
        %750 = vst.msk [vmem:[#allocation2 + $0x38] sm:$0xff] %vm742, %v709
        %751 = vst.msk [vmem:[#allocation2 + $0x40] sm:$0xff] %vm742, %v711
        %752 = vst.msk [vmem:[#allocation2 + $0x48] sm:$0xff] %vm742, %v713
        %753 = vst.msk [vmem:[#allocation2 + $0x50] sm:$0xff] %vm742, %v715
        %754 = vst.msk [vmem:[#allocation2 + $0x58] sm:$0xff] %vm742, %v717
        %755 = vst.msk [vmem:[#allocation2 + $0x60] sm:$0xff] %vm742, %v719
        %756 = vst.msk [vmem:[#allocation2 + $0x68] sm:$0xff] %vm742, %v721
        %757 = vst.msk [vmem:[#allocation2 + $0x70] sm:$0xff] %vm742, %v723
        %758 = vst.msk [vmem:[#allocation2 + $0x78] sm:$0xff] %vm742, %v725
        %760 = vrot.lane.b32.xlu0 %v304, 12
        %v761 = vpop.permute.xlu0 %760
        %762 = vrot.lane.b32.xlu0 %v306, 12
        %v763 = vpop.permute.xlu0 %762
        %764 = vrot.lane.b32.xlu0 %v308, 12
        %v765 = vpop.permute.xlu0 %764
        %766 = vrot.lane.b32.xlu0 %v310, 12
        %v767 = vpop.permute.xlu0 %766
        %768 = vrot.lane.b32.xlu0 %v312, 12
        %v769 = vpop.permute.xlu0 %768
        %770 = vrot.lane.b32.xlu0 %v314, 12
        %v771 = vpop.permute.xlu0 %770
        %772 = vrot.lane.b32.xlu0 %v316, 12
        %v773 = vpop.permute.xlu0 %772
        %774 = vrot.lane.b32.xlu0 %v318, 12
        %v775 = vpop.permute.xlu0 %774
        %776 = vrot.lane.b32.xlu0 %v320, 12
        %v777 = vpop.permute.xlu0 %776
        %778 = vrot.lane.b32.xlu0 %v322, 12
        %v779 = vpop.permute.xlu0 %778
        %780 = vrot.lane.b32.xlu0 %v324, 12
        %v781 = vpop.permute.xlu0 %780
        %782 = vrot.lane.b32.xlu0 %v326, 12
        %v783 = vpop.permute.xlu0 %782
        %784 = vrot.lane.b32.xlu0 %v328, 12
        %v785 = vpop.permute.xlu0 %784
        %786 = vrot.lane.b32.xlu0 %v330, 12
        %v787 = vpop.permute.xlu0 %786
        %788 = vrot.lane.b32.xlu0 %v332, 12
        %v789 = vpop.permute.xlu0 %788
        %790 = vrot.lane.b32.xlu0 %v334, 12
        %v791 = vpop.permute.xlu0 %790
        %vm808 = vcmask 130144
        %809 = vst.msk [vmem:[#allocation2] sm:$0xff] %vm808, %v761
        %810 = vst.msk [vmem:[#allocation2 + $0x8] sm:$0xff] %vm808, %v763
        %811 = vst.msk [vmem:[#allocation2 + $0x10] sm:$0xff] %vm808, %v765
        %812 = vst.msk [vmem:[#allocation2 + $0x18] sm:$0xff] %vm808, %v767
        %813 = vst.msk [vmem:[#allocation2 + $0x20] sm:$0xff] %vm808, %v769
        %814 = vst.msk [vmem:[#allocation2 + $0x28] sm:$0xff] %vm808, %v771
        %815 = vst.msk [vmem:[#allocation2 + $0x30] sm:$0xff] %vm808, %v773
        %816 = vst.msk [vmem:[#allocation2 + $0x38] sm:$0xff] %vm808, %v775
        %817 = vst.msk [vmem:[#allocation2 + $0x40] sm:$0xff] %vm808, %v777
        %818 = vst.msk [vmem:[#allocation2 + $0x48] sm:$0xff] %vm808, %v779
        %819 = vst.msk [vmem:[#allocation2 + $0x50] sm:$0xff] %vm808, %v781
        %820 = vst.msk [vmem:[#allocation2 + $0x58] sm:$0xff] %vm808, %v783
        %821 = vst.msk [vmem:[#allocation2 + $0x60] sm:$0xff] %vm808, %v785
        %822 = vst.msk [vmem:[#allocation2 + $0x68] sm:$0xff] %vm808, %v787
        %823 = vst.msk [vmem:[#allocation2 + $0x70] sm:$0xff] %vm808, %v789
        %824 = vst.msk [vmem:[#allocation2 + $0x78] sm:$0xff] %vm808, %v791
        %v826 = vshrl.u32 %v334, 16
        %v828 = vshll.u32 %v334, 16
        %v830 = vrot.slane %v828, 1
        %v831 = vor.u32 %v826, %v830
        %v833 = vshll.u32 %v335, 16
        %v835 = vrot.slane %v833, 1
        %v836 = vsel %vm355, %v831, %v835
        %837 = vrot.lane.b32.xlu0 %v379, 16
        %v838 = vpop.permute.xlu0 %837
        %839 = vrot.lane.b32.xlu0 %v391, 16
        %v840 = vpop.permute.xlu0 %839
        %841 = vrot.lane.b32.xlu0 %v403, 16
        %v842 = vpop.permute.xlu0 %841
        %843 = vrot.lane.b32.xlu0 %v415, 16
        %v844 = vpop.permute.xlu0 %843
        %845 = vrot.lane.b32.xlu0 %v427, 16
        %v846 = vpop.permute.xlu0 %845
        %847 = vrot.lane.b32.xlu0 %v439, 16
        %v848 = vpop.permute.xlu0 %847
        %849 = vrot.lane.b32.xlu0 %v451, 16
        %v850 = vpop.permute.xlu0 %849
        %851 = vrot.lane.b32.xlu0 %v463, 16
        %v852 = vpop.permute.xlu0 %851
        %853 = vrot.lane.b32.xlu0 %v475, 16
        %v854 = vpop.permute.xlu0 %853
        %855 = vrot.lane.b32.xlu0 %v487, 16
        %v856 = vpop.permute.xlu0 %855
        %857 = vrot.lane.b32.xlu0 %v499, 16
        %v858 = vpop.permute.xlu0 %857
        %859 = vrot.lane.b32.xlu0 %v511, 16
        %v860 = vpop.permute.xlu0 %859
        %861 = vrot.lane.b32.xlu0 %v523, 16
        %v862 = vpop.permute.xlu0 %861
        %863 = vrot.lane.b32.xlu0 %v535, 16
        %v864 = vpop.permute.xlu0 %863
        %865 = vrot.lane.b32.xlu0 %v547, 16
        %v866 = vpop.permute.xlu0 %865
        %867 = vrot.lane.b32.xlu0 %v836, 16
        %v868 = vpop.permute.xlu0 %867
        %vm885 = vcmask 162944
        %886 = vst.msk [vmem:[#allocation2] sm:$0xff] %vm885, %v838
        %887 = vst.msk [vmem:[#allocation2 + $0x8] sm:$0xff] %vm885, %v840
        %888 = vst.msk [vmem:[#allocation2 + $0x10] sm:$0xff] %vm885, %v842
        %889 = vst.msk [vmem:[#allocation2 + $0x18] sm:$0xff] %vm885, %v844
        %890 = vst.msk [vmem:[#allocation2 + $0x20] sm:$0xff] %vm885, %v846
        %891 = vst.msk [vmem:[#allocation2 + $0x28] sm:$0xff] %vm885, %v848
        %892 = vst.msk [vmem:[#allocation2 + $0x30] sm:$0xff] %vm885, %v850
        %893 = vst.msk [vmem:[#allocation2 + $0x38] sm:$0xff] %vm885, %v852
        %894 = vst.msk [vmem:[#allocation2 + $0x40] sm:$0xff] %vm885, %v854
        %895 = vst.msk [vmem:[#allocation2 + $0x48] sm:$0xff] %vm885, %v856
        %896 = vst.msk [vmem:[#allocation2 + $0x50] sm:$0xff] %vm885, %v858
        %897 = vst.msk [vmem:[#allocation2 + $0x58] sm:$0xff] %vm885, %v860
        %898 = vst.msk [vmem:[#allocation2 + $0x60] sm:$0xff] %vm885, %v862
        %899 = vst.msk [vmem:[#allocation2 + $0x68] sm:$0xff] %vm885, %v864
        %900 = vst.msk [vmem:[#allocation2 + $0x70] sm:$0xff] %vm885, %v866
        %901 = vst.msk [vmem:[#allocation2 + $0x78] sm:$0xff] %vm885, %v868
        %v903 = vrot.slane %v334, 1
        %v904 = vrot.slane %v335, 1
        %v905 = vsel %vm645, %v903, %v904
        %906 = vrot.lane.b32.xlu0 %v651, 20
        %v907 = vpop.permute.xlu0 %906
        %908 = vrot.lane.b32.xlu0 %v654, 20
        %v909 = vpop.permute.xlu0 %908
        %910 = vrot.lane.b32.xlu0 %v657, 20
        %v911 = vpop.permute.xlu0 %910
        %912 = vrot.lane.b32.xlu0 %v660, 20
        %v913 = vpop.permute.xlu0 %912
        %914 = vrot.lane.b32.xlu0 %v663, 20
        %v915 = vpop.permute.xlu0 %914
        %916 = vrot.lane.b32.xlu0 %v666, 20
        %v917 = vpop.permute.xlu0 %916
        %918 = vrot.lane.b32.xlu0 %v669, 20
        %v919 = vpop.permute.xlu0 %918
        %920 = vrot.lane.b32.xlu0 %v672, 20
        %v921 = vpop.permute.xlu0 %920
        %922 = vrot.lane.b32.xlu0 %v675, 20
        %v923 = vpop.permute.xlu0 %922
        %924 = vrot.lane.b32.xlu0 %v678, 20
        %v925 = vpop.permute.xlu0 %924
        %926 = vrot.lane.b32.xlu0 %v681, 20
        %v927 = vpop.permute.xlu0 %926
        %928 = vrot.lane.b32.xlu0 %v684, 20
        %v929 = vpop.permute.xlu0 %928
        %930 = vrot.lane.b32.xlu0 %v687, 20
        %v931 = vpop.permute.xlu0 %930
        %932 = vrot.lane.b32.xlu0 %v690, 20
        %v933 = vpop.permute.xlu0 %932
        %934 = vrot.lane.b32.xlu0 %v693, 20
        %v935 = vpop.permute.xlu0 %934
        %936 = vrot.lane.b32.xlu0 %v905, 20
        %v937 = vpop.permute.xlu0 %936
        %vm954 = vcmask 195744
        %955 = vst.msk [vmem:[#allocation2] sm:$0xff] %vm954, %v907
        %956 = vst.msk [vmem:[#allocation2 + $0x8] sm:$0xff] %vm954, %v909
        %957 = vst.msk [vmem:[#allocation2 + $0x10] sm:$0xff] %vm954, %v911
        %958 = vst.msk [vmem:[#allocation2 + $0x18] sm:$0xff] %vm954, %v913
        %959 = vst.msk [vmem:[#allocation2 + $0x20] sm:$0xff] %vm954, %v915
        %960 = vst.msk [vmem:[#allocation2 + $0x28] sm:$0xff] %vm954, %v917
        %961 = vst.msk [vmem:[#allocation2 + $0x30] sm:$0xff] %vm954, %v919
        %962 = vst.msk [vmem:[#allocation2 + $0x38] sm:$0xff] %vm954, %v921
        %963 = vst.msk [vmem:[#allocation2 + $0x40] sm:$0xff] %vm954, %v923
        %964 = vst.msk [vmem:[#allocation2 + $0x48] sm:$0xff] %vm954, %v925
        %965 = vst.msk [vmem:[#allocation2 + $0x50] sm:$0xff] %vm954, %v927
        %966 = vst.msk [vmem:[#allocation2 + $0x58] sm:$0xff] %vm954, %v929
        %967 = vst.msk [vmem:[#allocation2 + $0x60] sm:$0xff] %vm954, %v931
        %968 = vst.msk [vmem:[#allocation2 + $0x68] sm:$0xff] %vm954, %v933
        %969 = vst.msk [vmem:[#allocation2 + $0x70] sm:$0xff] %vm954, %v935
        %970 = vst.msk [vmem:[#allocation2 + $0x78] sm:$0xff] %vm954, %v937
        %972 = vrot.lane.b32.xlu0 %v306, 24
        %v973 = vpop.permute.xlu0 %972
        %974 = vrot.lane.b32.xlu0 %v308, 24
        %v975 = vpop.permute.xlu0 %974
        %976 = vrot.lane.b32.xlu0 %v310, 24
        %v977 = vpop.permute.xlu0 %976
        %978 = vrot.lane.b32.xlu0 %v312, 24
        %v979 = vpop.permute.xlu0 %978
        %980 = vrot.lane.b32.xlu0 %v314, 24
        %v981 = vpop.permute.xlu0 %980
        %982 = vrot.lane.b32.xlu0 %v316, 24
        %v983 = vpop.permute.xlu0 %982
        %984 = vrot.lane.b32.xlu0 %v318, 24
        %v985 = vpop.permute.xlu0 %984
        %986 = vrot.lane.b32.xlu0 %v320, 24
        %v987 = vpop.permute.xlu0 %986
        %988 = vrot.lane.b32.xlu0 %v322, 24
        %v989 = vpop.permute.xlu0 %988
        %990 = vrot.lane.b32.xlu0 %v324, 24
        %v991 = vpop.permute.xlu0 %990
        %992 = vrot.lane.b32.xlu0 %v326, 24
        %v993 = vpop.permute.xlu0 %992
        %994 = vrot.lane.b32.xlu0 %v328, 24
        %v995 = vpop.permute.xlu0 %994
        %996 = vrot.lane.b32.xlu0 %v330, 24
        %v997 = vpop.permute.xlu0 %996
        %998 = vrot.lane.b32.xlu0 %v332, 24
        %v999 = vpop.permute.xlu0 %998
        %1000 = vrot.lane.b32.xlu0 %v334, 24
        %v1001 = vpop.permute.xlu0 %1000
        %1002 = vrot.lane.b32.xlu0 %v336, 24
        %v1003 = vpop.permute.xlu0 %1002
        %vm1020 = vcmask 228544
        %1021 = vst.msk [vmem:[#allocation2] sm:$0xff] %vm1020, %v973
        %1022 = vst.msk [vmem:[#allocation2 + $0x8] sm:$0xff] %vm1020, %v975
        %1023 = vst.msk [vmem:[#allocation2 + $0x10] sm:$0xff] %vm1020, %v977
        %1024 = vst.msk [vmem:[#allocation2 + $0x18] sm:$0xff] %vm1020, %v979
        %1025 = vst.msk [vmem:[#allocation2 + $0x20] sm:$0xff] %vm1020, %v981
        %1026 = vst.msk [vmem:[#allocation2 + $0x28] sm:$0xff] %vm1020, %v983
        %1027 = vst.msk [vmem:[#allocation2 + $0x30] sm:$0xff] %vm1020, %v985
        %1028 = vst.msk [vmem:[#allocation2 + $0x38] sm:$0xff] %vm1020, %v987
        %1029 = vst.msk [vmem:[#allocation2 + $0x40] sm:$0xff] %vm1020, %v989
        %1030 = vst.msk [vmem:[#allocation2 + $0x48] sm:$0xff] %vm1020, %v991
        %1031 = vst.msk [vmem:[#allocation2 + $0x50] sm:$0xff] %vm1020, %v993
        %1032 = vst.msk [vmem:[#allocation2 + $0x58] sm:$0xff] %vm1020, %v995
        %1033 = vst.msk [vmem:[#allocation2 + $0x60] sm:$0xff] %vm1020, %v997
        %1034 = vst.msk [vmem:[#allocation2 + $0x68] sm:$0xff] %vm1020, %v999
        %1035 = vst.msk [vmem:[#allocation2 + $0x70] sm:$0xff] %vm1020, %v1001
        %1036 = vst.msk [vmem:[#allocation2 + $0x78] sm:$0xff] %vm1020, %v1003
        %v1038 = vshrl.u32 %v336, 16
        %v1040 = vshll.u32 %v336, 16
        %v1042 = vrot.slane %v1040, 1
        %v1043 = vor.u32 %v1038, %v1042
        %v1045 = vshll.u32 %v337, 16
        %v1047 = vrot.slane %v1045, 1
        %v1048 = vsel %vm355, %v1043, %v1047
        %1049 = vrot.lane.b32.xlu0 %v391, 28
        %v1050 = vpop.permute.xlu0 %1049
        %1051 = vrot.lane.b32.xlu0 %v403, 28
        %v1052 = vpop.permute.xlu0 %1051
        %1053 = vrot.lane.b32.xlu0 %v415, 28
        %v1054 = vpop.permute.xlu0 %1053
        %1055 = vrot.lane.b32.xlu0 %v427, 28
        %v1056 = vpop.permute.xlu0 %1055
        %1057 = vrot.lane.b32.xlu0 %v439, 28
        %v1058 = vpop.permute.xlu0 %1057
        %1059 = vrot.lane.b32.xlu0 %v451, 28
        %v1060 = vpop.permute.xlu0 %1059
        %1061 = vrot.lane.b32.xlu0 %v463, 28
        %v1062 = vpop.permute.xlu0 %1061
        %1063 = vrot.lane.b32.xlu0 %v475, 28
        %v1064 = vpop.permute.xlu0 %1063
        %1065 = vrot.lane.b32.xlu0 %v487, 28
        %v1066 = vpop.permute.xlu0 %1065
        %1067 = vrot.lane.b32.xlu0 %v499, 28
        %v1068 = vpop.permute.xlu0 %1067
        %1069 = vrot.lane.b32.xlu0 %v511, 28
        %v1070 = vpop.permute.xlu0 %1069
        %1071 = vrot.lane.b32.xlu0 %v523, 28
        %v1072 = vpop.permute.xlu0 %1071
        %1073 = vrot.lane.b32.xlu0 %v535, 28
        %v1074 = vpop.permute.xlu0 %1073
        %1075 = vrot.lane.b32.xlu0 %v547, 28
        %v1076 = vpop.permute.xlu0 %1075
        %1077 = vrot.lane.b32.xlu0 %v836, 28
        %v1078 = vpop.permute.xlu0 %1077
        %1079 = vrot.lane.b32.xlu0 %v1048, 28
        %v1080 = vpop.permute.xlu0 %1079
        %vm1097 = vcmask 261344
        %1098 = vst.msk [vmem:[#allocation2] sm:$0xff] %vm1097, %v1050
        %1099 = vst.msk [vmem:[#allocation2 + $0x8] sm:$0xff] %vm1097, %v1052
        %1100 = vst.msk [vmem:[#allocation2 + $0x10] sm:$0xff] %vm1097, %v1054
        %1101 = vst.msk [vmem:[#allocation2 + $0x18] sm:$0xff] %vm1097, %v1056
        %1102 = vst.msk [vmem:[#allocation2 + $0x20] sm:$0xff] %vm1097, %v1058
        %1103 = vst.msk [vmem:[#allocation2 + $0x28] sm:$0xff] %vm1097, %v1060
        %1104 = vst.msk [vmem:[#allocation2 + $0x30] sm:$0xff] %vm1097, %v1062
        %1105 = vst.msk [vmem:[#allocation2 + $0x38] sm:$0xff] %vm1097, %v1064
        %1106 = vst.msk [vmem:[#allocation2 + $0x40] sm:$0xff] %vm1097, %v1066
        %1107 = vst.msk [vmem:[#allocation2 + $0x48] sm:$0xff] %vm1097, %v1068
        %1108 = vst.msk [vmem:[#allocation2 + $0x50] sm:$0xff] %vm1097, %v1070
        %1109 = vst.msk [vmem:[#allocation2 + $0x58] sm:$0xff] %vm1097, %v1072
        %1110 = vst.msk [vmem:[#allocation2 + $0x60] sm:$0xff] %vm1097, %v1074
        %1111 = vst.msk [vmem:[#allocation2 + $0x68] sm:$0xff] %vm1097, %v1076
        %1112 = vst.msk [vmem:[#allocation2 + $0x70] sm:$0xff] %vm1097, %v1078
        %1113 = vst.msk [vmem:[#allocation2 + $0x78] sm:$0xff] %vm1097, %v1080
        %v1115 = vrot.slane %v336, 1
        %v1116 = vrot.slane %v337, 1
        %v1117 = vsel %vm645, %v1115, %v1116
        %1118 = vrot.lane.b32.xlu0 %v654, 32
        %v1119 = vpop.permute.xlu0 %1118
        %1120 = vrot.lane.b32.xlu0 %v657, 32
        %v1121 = vpop.permute.xlu0 %1120
        %1122 = vrot.lane.b32.xlu0 %v660, 32
        %v1123 = vpop.permute.xlu0 %1122
        %1124 = vrot.lane.b32.xlu0 %v663, 32
        %v1125 = vpop.permute.xlu0 %1124
        %1126 = vrot.lane.b32.xlu0 %v666, 32
        %v1127 = vpop.permute.xlu0 %1126
        %1128 = vrot.lane.b32.xlu0 %v669, 32
        %v1129 = vpop.permute.xlu0 %1128
        %1130 = vrot.lane.b32.xlu0 %v672, 32
        %v1131 = vpop.permute.xlu0 %1130
        %1132 = vrot.lane.b32.xlu0 %v675, 32
        %v1133 = vpop.permute.xlu0 %1132
        %1134 = vrot.lane.b32.xlu0 %v678, 32
        %v1135 = vpop.permute.xlu0 %1134
        %1136 = vrot.lane.b32.xlu0 %v681, 32
        %v1137 = vpop.permute.xlu0 %1136
        %1138 = vrot.lane.b32.xlu0 %v684, 32
        %v1139 = vpop.permute.xlu0 %1138
        %1140 = vrot.lane.b32.xlu0 %v687, 32
        %v1141 = vpop.permute.xlu0 %1140
        %1142 = vrot.lane.b32.xlu0 %v690, 32
        %v1143 = vpop.permute.xlu0 %1142
        %1144 = vrot.lane.b32.xlu0 %v693, 32
        %v1145 = vpop.permute.xlu0 %1144
        %1146 = vrot.lane.b32.xlu0 %v905, 32
        %v1147 = vpop.permute.xlu0 %1146
        %1148 = vrot.lane.b32.xlu0 %v1117, 32
        %v1149 = vpop.permute.xlu0 %1148
        %vm1166 = vcmask 294144
        %1167 = vst.msk [vmem:[#allocation2] sm:$0xff] %vm1166, %v1119
        %1168 = vst.msk [vmem:[#allocation2 + $0x8] sm:$0xff] %vm1166, %v1121
        %1169 = vst.msk [vmem:[#allocation2 + $0x10] sm:$0xff] %vm1166, %v1123
        %1170 = vst.msk [vmem:[#allocation2 + $0x18] sm:$0xff] %vm1166, %v1125
        %1171 = vst.msk [vmem:[#allocation2 + $0x20] sm:$0xff] %vm1166, %v1127
        %1172 = vst.msk [vmem:[#allocation2 + $0x28] sm:$0xff] %vm1166, %v1129
        %1173 = vst.msk [vmem:[#allocation2 + $0x30] sm:$0xff] %vm1166, %v1131
        %1174 = vst.msk [vmem:[#allocation2 + $0x38] sm:$0xff] %vm1166, %v1133
        %1175 = vst.msk [vmem:[#allocation2 + $0x40] sm:$0xff] %vm1166, %v1135
        %1176 = vst.msk [vmem:[#allocation2 + $0x48] sm:$0xff] %vm1166, %v1137
        %1177 = vst.msk [vmem:[#allocation2 + $0x50] sm:$0xff] %vm1166, %v1139
        %1178 = vst.msk [vmem:[#allocation2 + $0x58] sm:$0xff] %vm1166, %v1141
        %1179 = vst.msk [vmem:[#allocation2 + $0x60] sm:$0xff] %vm1166, %v1143
        %1180 = vst.msk [vmem:[#allocation2 + $0x68] sm:$0xff] %vm1166, %v1145
        %1181 = vst.msk [vmem:[#allocation2 + $0x70] sm:$0xff] %vm1166, %v1147
        %1182 = vst.msk [vmem:[#allocation2 + $0x78] sm:$0xff] %vm1166, %v1149
        %v1183 = vld [vmem:[#allocation2] sm:$0xff]
        %v1184 = vld [vmem:[#allocation2 + $0x8] sm:$0xff]
        %v1185 = vld [vmem:[#allocation2 + $0x10] sm:$0xff]
        %v1186 = vld [vmem:[#allocation2 + $0x18] sm:$0xff]
        %v1187 = vld [vmem:[#allocation2 + $0x20] sm:$0xff]
        %v1188 = vld [vmem:[#allocation2 + $0x28] sm:$0xff]
        %v1189 = vld [vmem:[#allocation2 + $0x30] sm:$0xff]
        %v1190 = vld [vmem:[#allocation2 + $0x38] sm:$0xff]
        %v1191 = vld [vmem:[#allocation2 + $0x40] sm:$0xff]
        %v1192 = vld [vmem:[#allocation2 + $0x48] sm:$0xff]
        %v1193 = vld [vmem:[#allocation2 + $0x50] sm:$0xff]
        %v1194 = vld [vmem:[#allocation2 + $0x58] sm:$0xff]
        %v1195 = vld [vmem:[#allocation2 + $0x60] sm:$0xff]
        %v1196 = vld [vmem:[#allocation2 + $0x68] sm:$0xff]
        %v1197 = vld [vmem:[#allocation2 + $0x70] sm:$0xff]
        %v1198 = vld [vmem:[#allocation2 + $0x78] sm:$0xff]
        %v1199 = vld [vmem:[#allocation6] sm:$0xf]
        %v1200 = vld [vmem:[#allocation6 + $0x4] sm:$0xf]
        %v1201 = vld [vmem:[#allocation6 + $0x8] sm:$0xf]
        %v1202 = vld [vmem:[#allocation6 + $0xc] sm:$0xf]
        %v1203 = vld [vmem:[#allocation6 + $0x10] sm:$0x3]
        %v1209 = vunpack.c.l.b16 %v1199
        %v1210 = vunpack.c.l.b16 %v1200
        %v1211 = vunpack.c.l.b16 %v1201
        %v1212 = vunpack.c.l.b16 %v1202
        %v1213 = vunpack.c.l.b16 %v1203
        %v1214 = vpack.c.b16 %v1210, %v1209
        %v1215 = vpack.c.b16 %v1212, %v1211
        %v1216 = vpack.c.b16 %v1213, %v1213
        %vm1219 = vcmask 293888
        %v1221 = vsel %vm1219, %v1183, 0
        %v1224 = vsel %vm1219, %v1184, 0
        %v1227 = vsel %vm1219, %v1185, 0
        %v1230 = vsel %vm1219, %v1186, 0
        %v1233 = vsel %vm1219, %v1187, 0
        %v1236 = vsel %vm1219, %v1188, 0
        %v1239 = vsel %vm1219, %v1189, 0
        %v1242 = vsel %vm1219, %v1190, 0
        %v1245 = vsel %vm1219, %v1191, 0
        %v1248 = vsel %vm1219, %v1192, 0
        %v1251 = vsel %vm1219, %v1193, 0
        %v1254 = vsel %vm1219, %v1194, 0
        %v1257 = vsel %vm1219, %v1195, 0
        %v1260 = vsel %vm1219, %v1196, 0
        %v1263 = vsel %vm1219, %v1197, 0
        %v1266 = vsel %vm1219, %v1198, 0
        %vm1268 = vcmask 1041408
        %v1270 = vsel %vm1268, %v1216, 0
        %1272 = vmatprep.subr.bf16.mxu0 0
        %1273 = vmatpush1.bf16.msra.mxu0 %v1214
        %1274 = vmatprep.subr.bf16.mxu0 0
        %1275 = vmatpush1.bf16.msra.mxu0 %v1215
        %1276 = vmatprep.subr.bf16.mxu0 0
        %1277 = vmatpush1.bf16.msra.mxu0 %v1270
        %1278 = vmatprep.subr.bf16.mxu0 0
        %1279 = vmatpush1.bf16.msra.mxu0 0
        %1280 = vmatprep.subr.bf16.mxu0 0
        %1281 = vmatpush1.bf16.msra.mxu0 0
        %1282 = vmatprep.subr.bf16.mxu0 0
        %1283 = vmatpush1.bf16.msra.mxu0 0
        %1284 = vmatprep.subr.bf16.mxu0 0
        %1285 = vmatpush1.bf16.msra.mxu0 0
        %1286 = vmatprep.subr.bf16.mxu0 0
        %1287 = vmatpush1.bf16.msra.mxu0 0
        %1288 = vmatprep.subr.bf16.mxu0 0
        %1289 = vmatpush1.bf16.msra.mxu0 0
        %1290 = vmatprep.subr.bf16.mxu0 0
        %1291 = vmatpush1.bf16.msra.mxu0 0
        %1292 = vmatprep.subr.bf16.mxu0 0
        %1293 = vmatpush1.bf16.msra.mxu0 0
        %1294 = vmatprep.subr.bf16.mxu0 0
        %1295 = vmatpush1.bf16.msra.mxu0 0
        %1296 = vmatprep.subr.bf16.mxu0 0
        %1297 = vmatpush1.bf16.msra.mxu0 0
        %1298 = vmatprep.subr.bf16.mxu0 0
        %1299 = vmatpush1.bf16.msra.mxu0 0
        %1300 = vmatprep.subr.bf16.mxu0 0
        %1301 = vmatpush1.bf16.msra.mxu0 0
        %1302 = vmatprep.subr.bf16.mxu0 0
        %1303 = vmatpush1.bf16.msra.mxu0 0
        %1304 = vmatprep.mubr.bf16.mxu0 0
        %1305 = vmatmul.mubr.bf16.gmra.mrb[0].mxu0 %v1221
        %v1306 = vpop.f32.mrb[0].mxu0
        %v1307 = vadd.f32 0.0, %v1306
        %v1308 = vpop.f32.mrb[0].mxu0
        %v1309 = vpop.f32.mrb[0].mxu0
        %v1310 = vadd.f32 0.0, %v1309
        %v1311 = vpop.f32.mrb[0].mxu0
        %1312 = vmatprep.mubr.bf16.mxu0 0
        %1313 = vmatmul.mubr.bf16.gmra.mrb[0].mxu0 %v1224
        %v1314 = vpop.f32.mrb[0].mxu0
        %v1315 = vadd.f32 0.0, %v1314
        %v1316 = vpop.f32.mrb[0].mxu0
        %v1317 = vpop.f32.mrb[0].mxu0
        %v1318 = vadd.f32 0.0, %v1317
        %v1319 = vpop.f32.mrb[0].mxu0
        %1320 = vmatprep.mubr.bf16.mxu0 0
        %1321 = vmatmul.mubr.bf16.gmra.mrb[0].mxu0 %v1227
        %v1322 = vpop.f32.mrb[0].mxu0
        %v1323 = vadd.f32 0.0, %v1322
        %v1324 = vpop.f32.mrb[0].mxu0
        %v1325 = vpop.f32.mrb[0].mxu0
        %v1326 = vadd.f32 0.0, %v1325
        %v1327 = vpop.f32.mrb[0].mxu0
        %1328 = vmatprep.mubr.bf16.mxu0 0
        %1329 = vmatmul.mubr.bf16.gmra.mrb[0].mxu0 %v1230
        %v1330 = vpop.f32.mrb[0].mxu0
        %v1331 = vadd.f32 0.0, %v1330
        %v1332 = vpop.f32.mrb[0].mxu0
        %v1333 = vpop.f32.mrb[0].mxu0
        %v1334 = vadd.f32 0.0, %v1333
        %v1335 = vpop.f32.mrb[0].mxu0
        %1336 = vmatprep.mubr.bf16.mxu0 0
        %1337 = vmatmul.mubr.bf16.gmra.mrb[0].mxu0 %v1233
        %v1338 = vpop.f32.mrb[0].mxu0
        %v1339 = vadd.f32 0.0, %v1338
        %v1340 = vpop.f32.mrb[0].mxu0
        %v1341 = vpop.f32.mrb[0].mxu0
        %v1342 = vadd.f32 0.0, %v1341
        %v1343 = vpop.f32.mrb[0].mxu0
        %1344 = vmatprep.mubr.bf16.mxu0 0
        %1345 = vmatmul.mubr.bf16.gmra.mrb[0].mxu0 %v1236
        %v1346 = vpop.f32.mrb[0].mxu0
        %v1347 = vadd.f32 0.0, %v1346
        %v1348 = vpop.f32.mrb[0].mxu0
        %v1349 = vpop.f32.mrb[0].mxu0
        %v1350 = vadd.f32 0.0, %v1349
        %v1351 = vpop.f32.mrb[0].mxu0
        %1352 = vmatprep.mubr.bf16.mxu0 0
        %1353 = vmatmul.mubr.bf16.gmra.mrb[0].mxu0 %v1239
        %v1354 = vpop.f32.mrb[0].mxu0
        %v1355 = vadd.f32 0.0, %v1354
        %v1356 = vpop.f32.mrb[0].mxu0
        %v1357 = vpop.f32.mrb[0].mxu0
        %v1358 = vadd.f32 0.0, %v1357
        %v1359 = vpop.f32.mrb[0].mxu0
        %1360 = vmatprep.mubr.bf16.mxu0 0
        %1361 = vmatmul.mubr.bf16.gmra.mrb[0].mxu0 %v1242
        %v1362 = vpop.f32.mrb[0].mxu0
        %v1363 = vadd.f32 0.0, %v1362
        %v1364 = vpop.f32.mrb[0].mxu0
        %v1365 = vpop.f32.mrb[0].mxu0
        %v1366 = vadd.f32 0.0, %v1365
        %v1367 = vpop.f32.mrb[0].mxu0
        %1368 = vmatprep.mubr.bf16.mxu0 0
        %1369 = vmatmul.mubr.bf16.gmra.mrb[0].mxu0 %v1245
        %v1370 = vpop.f32.mrb[0].mxu0
        %v1371 = vadd.f32 0.0, %v1370
        %v1372 = vpop.f32.mrb[0].mxu0
        %v1373 = vpop.f32.mrb[0].mxu0
        %v1374 = vadd.f32 0.0, %v1373
        %v1375 = vpop.f32.mrb[0].mxu0
        %1376 = vmatprep.mubr.bf16.mxu0 0
        %1377 = vmatmul.mubr.bf16.gmra.mrb[0].mxu0 %v1248
        %v1378 = vpop.f32.mrb[0].mxu0
        %v1379 = vadd.f32 0.0, %v1378
        %v1380 = vpop.f32.mrb[0].mxu0
        %v1381 = vpop.f32.mrb[0].mxu0
        %v1382 = vadd.f32 0.0, %v1381
        %v1383 = vpop.f32.mrb[0].mxu0
        %1384 = vmatprep.mubr.bf16.mxu0 0
        %1385 = vmatmul.mubr.bf16.gmra.mrb[0].mxu0 %v1251
        %v1386 = vpop.f32.mrb[0].mxu0
        %v1387 = vadd.f32 0.0, %v1386
        %v1388 = vpop.f32.mrb[0].mxu0
        %v1389 = vpop.f32.mrb[0].mxu0
        %v1390 = vadd.f32 0.0, %v1389
        %v1391 = vpop.f32.mrb[0].mxu0
        %1392 = vmatprep.mubr.bf16.mxu0 0
        %1393 = vmatmul.mubr.bf16.gmra.mrb[0].mxu0 %v1254
        %v1394 = vpop.f32.mrb[0].mxu0
        %v1395 = vadd.f32 0.0, %v1394
        %v1396 = vpop.f32.mrb[0].mxu0
        %v1397 = vpop.f32.mrb[0].mxu0
        %v1398 = vadd.f32 0.0, %v1397
        %v1399 = vpop.f32.mrb[0].mxu0
        %1400 = vmatprep.mubr.bf16.mxu0 0
        %1401 = vmatmul.mubr.bf16.gmra.mrb[0].mxu0 %v1257
        %v1402 = vpop.f32.mrb[0].mxu0
        %v1403 = vadd.f32 0.0, %v1402
        %v1404 = vpop.f32.mrb[0].mxu0
        %v1405 = vpop.f32.mrb[0].mxu0
        %v1406 = vadd.f32 0.0, %v1405
        %v1407 = vpop.f32.mrb[0].mxu0
        %1408 = vmatprep.mubr.bf16.mxu0 0
        %1409 = vmatmul.mubr.bf16.gmra.mrb[0].mxu0 %v1260
        %v1410 = vpop.f32.mrb[0].mxu0
        %v1411 = vadd.f32 0.0, %v1410
        %v1412 = vpop.f32.mrb[0].mxu0
        %v1413 = vpop.f32.mrb[0].mxu0
        %v1414 = vadd.f32 0.0, %v1413
        %v1415 = vpop.f32.mrb[0].mxu0
        %1416 = vmatprep.mubr.bf16.mxu0 0
        %1417 = vmatmul.mubr.bf16.gmra.mrb[0].mxu0 %v1263
        %v1418 = vpop.f32.mrb[0].mxu0
        %v1419 = vadd.f32 0.0, %v1418
        %v1420 = vpop.f32.mrb[0].mxu0
        %v1421 = vpop.f32.mrb[0].mxu0
        %v1422 = vadd.f32 0.0, %v1421
        %v1423 = vpop.f32.mrb[0].mxu0
        %1424 = vmatprep.mubr.bf16.mxu0 0
        %1425 = vmatmul.mubr.bf16.gmra.mrb[0].mxu0 %v1266
        %v1426 = vpop.f32.mrb[0].mxu0
        %v1427 = vadd.f32 0.0, %v1426
        %v1428 = vpop.f32.mrb[0].mxu0
        %v1429 = vpop.f32.mrb[0].mxu0
        %v1430 = vadd.f32 0.0, %v1429
        %v1431 = vpop.f32.mrb[0].mxu0
        %1432 = vdwg.mxu0
        %v1433 = vpack.c.bf16 %v1310, %v1307
        %v1434 = vpack.c.bf16 %v1318, %v1315
        %v1435 = vpack.c.bf16 %v1326, %v1323
        %v1436 = vpack.c.bf16 %v1334, %v1331
        %v1437 = vpack.c.bf16 %v1342, %v1339
        %v1438 = vpack.c.bf16 %v1350, %v1347
        %v1439 = vpack.c.bf16 %v1358, %v1355
        %v1440 = vpack.c.bf16 %v1366, %v1363
        %v1441 = vpack.c.bf16 %v1374, %v1371
        %v1442 = vpack.c.bf16 %v1382, %v1379
        %v1443 = vpack.c.bf16 %v1390, %v1387
        %v1444 = vpack.c.bf16 %v1398, %v1395
        %v1445 = vpack.c.bf16 %v1406, %v1403
        %v1446 = vpack.c.bf16 %v1414, %v1411
        %v1447 = vpack.c.bf16 %v1422, %v1419
        %v1448 = vpack.c.bf16 %v1430, %v1427
        %v1465 = vunpack.c.l.b16 %v1433
        %v1466 = vunpack.c.h.b16 %v1433
        %v1467 = vunpack.c.l.b16 %v1434
        %v1468 = vunpack.c.h.b16 %v1434
        %v1469 = vunpack.c.l.b16 %v1435
        %v1470 = vunpack.c.h.b16 %v1435
        %v1471 = vunpack.c.l.b16 %v1436
        %v1472 = vunpack.c.h.b16 %v1436
        %v1473 = vunpack.c.l.b16 %v1437
        %v1474 = vunpack.c.h.b16 %v1437
        %v1475 = vunpack.c.l.b16 %v1438
        %v1476 = vunpack.c.h.b16 %v1438
        %v1477 = vunpack.c.l.b16 %v1439
        %v1478 = vunpack.c.h.b16 %v1439
        %v1479 = vunpack.c.l.b16 %v1440
        %v1480 = vunpack.c.h.b16 %v1440
        %v1481 = vunpack.c.l.b16 %v1441
        %v1482 = vunpack.c.h.b16 %v1441
        %v1483 = vunpack.c.l.b16 %v1442
        %v1484 = vunpack.c.h.b16 %v1442
        %v1485 = vunpack.c.l.b16 %v1443
        %v1486 = vunpack.c.h.b16 %v1443
        %v1487 = vunpack.c.l.b16 %v1444
        %v1488 = vunpack.c.h.b16 %v1444
        %v1489 = vunpack.c.l.b16 %v1445
        %v1490 = vunpack.c.h.b16 %v1445
        %v1491 = vunpack.c.l.b16 %v1446
        %v1492 = vunpack.c.h.b16 %v1446
        %v1493 = vunpack.c.l.b16 %v1447
        %v1494 = vunpack.c.h.b16 %v1447
        %v1495 = vunpack.c.l.b16 %v1448
        %v1496 = vunpack.c.h.b16 %v1448
        %v1497 = vpack.c.b16 %v1465, %v1465
        %v1498 = vpack.c.b16 %v1466, %v1466
        %v1499 = vpack.c.b16 %v1467, %v1467
        %v1500 = vpack.c.b16 %v1468, %v1468
        %v1501 = vpack.c.b16 %v1469, %v1469
        %v1502 = vpack.c.b16 %v1470, %v1470
        %v1503 = vpack.c.b16 %v1471, %v1471
        %v1504 = vpack.c.b16 %v1472, %v1472
        %v1505 = vpack.c.b16 %v1473, %v1473
        %v1506 = vpack.c.b16 %v1474, %v1474
        %v1507 = vpack.c.b16 %v1475, %v1475
        %v1508 = vpack.c.b16 %v1476, %v1476
        %v1509 = vpack.c.b16 %v1477, %v1477
        %v1510 = vpack.c.b16 %v1478, %v1478
        %v1511 = vpack.c.b16 %v1479, %v1479
        %v1512 = vpack.c.b16 %v1480, %v1480
        %v1513 = vpack.c.b16 %v1481, %v1481
        %v1514 = vpack.c.b16 %v1482, %v1482
        %v1515 = vpack.c.b16 %v1483, %v1483
        %v1516 = vpack.c.b16 %v1484, %v1484
        %v1517 = vpack.c.b16 %v1485, %v1485
        %v1518 = vpack.c.b16 %v1486, %v1486
        %v1519 = vpack.c.b16 %v1487, %v1487
        %v1520 = vpack.c.b16 %v1488, %v1488
        %v1521 = vpack.c.b16 %v1489, %v1489
        %v1522 = vpack.c.b16 %v1490, %v1490
        %v1523 = vpack.c.b16 %v1491, %v1491
        %v1524 = vpack.c.b16 %v1492, %v1492
        %v1525 = vpack.c.b16 %v1493, %v1493
        %v1526 = vpack.c.b16 %v1494, %v1494
        %v1527 = vpack.c.b16 %v1495, %v1495
        %v1528 = vpack.c.b16 %v1496, %v1496
        %1561 = vst [vmem:[%s234] sm:$0xf] %v1497
        %1562 = vst [vmem:[%s234 + $0x4] sm:$0xf] %v1498
        %1563 = vst [vmem:[%s234 + $0x8] sm:$0xf] %v1499
        %1564 = vst [vmem:[%s234 + $0xc] sm:$0xf] %v1500
        %1565 = vst [vmem:[%s234 + $0x10] sm:$0xf] %v1501
        %1566 = vst [vmem:[%s234 + $0x14] sm:$0xf] %v1502
        %1567 = vst [vmem:[%s234 + $0x18] sm:$0xf] %v1503
        %1568 = vst [vmem:[%s234 + $0x1c] sm:$0xf] %v1504
        %1569 = vst [vmem:[%s234 + $0x20] sm:$0xf] %v1505
        %1570 = vst [vmem:[%s234 + $0x24] sm:$0xf] %v1506
        %1571 = vst [vmem:[%s234 + $0x28] sm:$0xf] %v1507
        %1572 = vst [vmem:[%s234 + $0x2c] sm:$0xf] %v1508
        %1573 = vst [vmem:[%s234 + $0x30] sm:$0xf] %v1509
        %1574 = vst [vmem:[%s234 + $0x34] sm:$0xf] %v1510
        %1575 = vst [vmem:[%s234 + $0x38] sm:$0xf] %v1511
        %1576 = vst [vmem:[%s234 + $0x3c] sm:$0xf] %v1512
        %1577 = vst [vmem:[%s234 + $0x40] sm:$0xf] %v1513
        %1578 = vst [vmem:[%s234 + $0x44] sm:$0xf] %v1514
        %1579 = vst [vmem:[%s234 + $0x48] sm:$0xf] %v1515
        %1580 = vst [vmem:[%s234 + $0x4c] sm:$0xf] %v1516
        %1581 = vst [vmem:[%s234 + $0x50] sm:$0xf] %v1517
        %1582 = vst [vmem:[%s234 + $0x54] sm:$0xf] %v1518
        %1583 = vst [vmem:[%s234 + $0x58] sm:$0xf] %v1519
        %1584 = vst [vmem:[%s234 + $0x5c] sm:$0xf] %v1520
        %1585 = vst [vmem:[%s234 + $0x60] sm:$0xf] %v1521
        %1586 = vst [vmem:[%s234 + $0x64] sm:$0xf] %v1522
        %1587 = vst [vmem:[%s234 + $0x68] sm:$0xf] %v1523
        %1588 = vst [vmem:[%s234 + $0x6c] sm:$0xf] %v1524
        %1589 = vst [vmem:[%s234 + $0x70] sm:$0xf] %v1525
        %1590 = vst [vmem:[%s234 + $0x74] sm:$0xf] %v1526
        %1591 = vst [vmem:[%s234 + $0x78] sm:$0xf] %v1527
        %1592 = vst [vmem:[%s234 + $0x7c] sm:$0xf] %v1528
        %v1593 = vunpack.c.l.bf16 %v1433
        %v1594 = vunpack.c.h.bf16 %v1433
        %v1595 = vunpack.c.l.bf16 %v1434
        %v1596 = vunpack.c.h.bf16 %v1434
        %v1597 = vunpack.c.l.bf16 %v1435
        %v1598 = vunpack.c.h.bf16 %v1435
        %v1599 = vunpack.c.l.bf16 %v1436
        %v1600 = vunpack.c.h.bf16 %v1436
        %v1601 = vunpack.c.l.bf16 %v1437
        %v1602 = vunpack.c.h.bf16 %v1437
        %v1603 = vunpack.c.l.bf16 %v1438
        %v1604 = vunpack.c.h.bf16 %v1438
        %v1605 = vunpack.c.l.bf16 %v1439
        %v1606 = vunpack.c.h.bf16 %v1439
        %v1607 = vunpack.c.l.bf16 %v1440
        %v1608 = vunpack.c.h.bf16 %v1440
        %v1609 = vunpack.c.l.bf16 %v1441
        %v1610 = vunpack.c.h.bf16 %v1441
        %v1611 = vunpack.c.l.bf16 %v1442
        %v1612 = vunpack.c.h.bf16 %v1442
        %v1613 = vunpack.c.l.bf16 %v1443
        %v1614 = vunpack.c.h.bf16 %v1443
        %v1615 = vunpack.c.l.bf16 %v1444
        %v1616 = vunpack.c.h.bf16 %v1444
        %v1617 = vunpack.c.l.bf16 %v1445
        %v1618 = vunpack.c.h.bf16 %v1445
        %v1619 = vunpack.c.l.bf16 %v1446
        %v1620 = vunpack.c.h.bf16 %v1446
        %v1621 = vunpack.c.l.bf16 %v1447
        %v1622 = vunpack.c.h.bf16 %v1447
        %v1623 = vunpack.c.l.bf16 %v1448
        %v1624 = vunpack.c.h.bf16 %v1448
        %v1625 = vadd.f32 %v1593, %v1594
        %v1626 = vadd.f32 %v1625, %v1595
        %v1627 = vadd.f32 %v1626, %v1596
        %v1628 = vadd.f32 %v1627, %v1597
        %v1629 = vadd.f32 %v1628, %v1598
        %v1630 = vadd.f32 %v1629, %v1599
        %v1631 = vadd.f32 %v1630, %v1600
        %v1632 = vadd.f32 %v1631, %v1601
        %v1633 = vadd.f32 %v1632, %v1602
        %v1634 = vadd.f32 %v1633, %v1603
        %v1635 = vadd.f32 %v1634, %v1604
        %v1636 = vadd.f32 %v1635, %v1605
        %v1637 = vadd.f32 %v1636, %v1606
        %v1638 = vadd.f32 %v1637, %v1607
        %v1639 = vadd.f32 %v1638, %v1608
        %v1640 = vadd.f32 %v1639, %v1609
        %v1641 = vadd.f32 %v1640, %v1610
        %v1642 = vadd.f32 %v1641, %v1611
        %v1643 = vadd.f32 %v1642, %v1612
        %v1644 = vadd.f32 %v1643, %v1613
        %v1645 = vadd.f32 %v1644, %v1614
        %v1646 = vadd.f32 %v1645, %v1615
        %v1647 = vadd.f32 %v1646, %v1616
        %v1648 = vadd.f32 %v1647, %v1617
        %v1649 = vadd.f32 %v1648, %v1618
        %v1650 = vadd.f32 %v1649, %v1619
        %v1651 = vadd.f32 %v1650, %v1620
        %v1652 = vadd.f32 %v1651, %v1621
        %v1653 = vadd.f32 %v1652, %v1622
        %v1654 = vadd.f32 %v1653, %v1623
        %v1655 = vadd.f32 %v1654, %v1624
        %v1656 = vrot.slane %v1655, 4
        %v1657 = vadd.f32 %v1655, %v1656
        %v1658 = vrot.slane %v1657, 2
        %v1659 = vadd.f32 %v1657, %v1658
        %v1660 = vrot.slane %v1659, 1
        %v1661 = vadd.f32 %v1659, %v1660
        %1662 = vst [vmem:[%s240] sm:$0x1] %v1661
        %v1663 = vmul.f32 %v1593, %v1593
        %v1664 = vmul.f32 %v1594, %v1594
        %v1665 = vmul.f32 %v1595, %v1595
        %v1666 = vmul.f32 %v1596, %v1596
        %v1667 = vmul.f32 %v1597, %v1597
        %v1668 = vmul.f32 %v1598, %v1598
        %v1669 = vmul.f32 %v1599, %v1599
        %v1670 = vmul.f32 %v1600, %v1600
        %v1671 = vmul.f32 %v1601, %v1601
        %v1672 = vmul.f32 %v1602, %v1602
        %v1673 = vmul.f32 %v1603, %v1603
        %v1674 = vmul.f32 %v1604, %v1604
        %v1675 = vmul.f32 %v1605, %v1605
        %v1676 = vmul.f32 %v1606, %v1606
        %v1677 = vmul.f32 %v1607, %v1607
        %v1678 = vmul.f32 %v1608, %v1608
        %v1679 = vmul.f32 %v1609, %v1609
        %v1680 = vmul.f32 %v1610, %v1610
        %v1681 = vmul.f32 %v1611, %v1611
        %v1682 = vmul.f32 %v1612, %v1612
        %v1683 = vmul.f32 %v1613, %v1613
        %v1684 = vmul.f32 %v1614, %v1614
        %v1685 = vmul.f32 %v1615, %v1615
        %v1686 = vmul.f32 %v1616, %v1616
        %v1687 = vmul.f32 %v1617, %v1617
        %v1688 = vmul.f32 %v1618, %v1618
        %v1689 = vmul.f32 %v1619, %v1619
        %v1690 = vmul.f32 %v1620, %v1620
        %v1691 = vmul.f32 %v1621, %v1621
        %v1692 = vmul.f32 %v1622, %v1622
        %v1693 = vmul.f32 %v1623, %v1623
        %v1694 = vmul.f32 %v1624, %v1624
        %v1695 = vadd.f32 %v1663, %v1664
        %v1696 = vadd.f32 %v1695, %v1665
        %v1697 = vadd.f32 %v1696, %v1666
        %v1698 = vadd.f32 %v1697, %v1667
        %v1699 = vadd.f32 %v1698, %v1668
        %v1700 = vadd.f32 %v1699, %v1669
        %v1701 = vadd.f32 %v1700, %v1670
        %v1702 = vadd.f32 %v1701, %v1671
        %v1703 = vadd.f32 %v1702, %v1672
        %v1704 = vadd.f32 %v1703, %v1673
        %v1705 = vadd.f32 %v1704, %v1674
        %v1706 = vadd.f32 %v1705, %v1675
        %v1707 = vadd.f32 %v1706, %v1676
        %v1708 = vadd.f32 %v1707, %v1677
        %v1709 = vadd.f32 %v1708, %v1678
        %v1710 = vadd.f32 %v1709, %v1679
        %v1711 = vadd.f32 %v1710, %v1680
        %v1712 = vadd.f32 %v1711, %v1681
        %v1713 = vadd.f32 %v1712, %v1682
        %v1714 = vadd.f32 %v1713, %v1683
        %v1715 = vadd.f32 %v1714, %v1684
        %v1716 = vadd.f32 %v1715, %v1685
        %v1717 = vadd.f32 %v1716, %v1686
        %v1718 = vadd.f32 %v1717, %v1687
        %v1719 = vadd.f32 %v1718, %v1688
        %v1720 = vadd.f32 %v1719, %v1689
        %v1721 = vadd.f32 %v1720, %v1690
        %v1722 = vadd.f32 %v1721, %v1691
        %v1723 = vadd.f32 %v1722, %v1692
        %v1724 = vadd.f32 %v1723, %v1693
        %v1725 = vadd.f32 %v1724, %v1694
        %v1726 = vrot.slane %v1725, 4
        %v1727 = vadd.f32 %v1725, %v1726
        %v1728 = vrot.slane %v1727, 2
        %v1729 = vadd.f32 %v1727, %v1728
        %v1730 = vrot.slane %v1729, 1
        %v1731 = vadd.f32 %v1729, %v1730
        %1732 = vst [vmem:[%s246] sm:$0x1] %v1731
        %s1733 = sand.u32 %s81, 1
        %s1734 = scalar_lea.sflag [#allocation5], %s1733
        %s1735 = sand.u32 %s81, 1
        %s1736 = smul.addr %s1735, 128
        %s1737 = scalar_lea.vmem [#allocation8], %s1736
        %s1738 = sand.u32 %s26, 1
        %s1739 = scalar_lea.sflag [#allocation10], %s1738
        %s1740 = sand.u32 %s107, 1
        %s1741 = scalar_lea.vmem [#allocation9], %s1740
        %s1742 = sand.u32 %s26, 1
        %s1743 = scalar_lea.sflag [#allocation10], %s1742
        %s1744 = sand.u32 %s133, 1
        %s1745 = scalar_lea.vmem [#allocation11], %s1744
        // Predicated region
        $region37: #{_double_conv.3} parent=27 // pred_check
          %p1746 = pneg %p91
        $region38: #{_double_conv.3} parent=27 // pred_check_branch
          %1748 = sbr.rel (%p1746) target = $region40
        $region39: #{_double_conv.3} parent=27 // pred_region
          %s1750 = ssub.s32 2048, 2048
          %1751 = vsyncadd %s1734, %s1750
          %s1752 = smul.addr %s26, 32
          %s1753 = smul.addr %s1752, 64
          %s1754 = scalar_lea.hbm %s2, %s1753
          %s1755 = sshll.u32 %s1737, 4
          %s1756 = int_to_ptr.vmem [resolvable:$true] %s1755
          %1761 = dma.vmem_to_hbm [thread:$0]  %s1756, 2048, %s1754, %s1734, 64, 64, 4
        $region40: #{_double_conv.3} parent=27 // pred_fallthru
          _
        // Predicated region
        $region41: #{_double_conv.3} parent=27 // pred_check
          %p1762 = pneg %p117
        $region42: #{_double_conv.3} parent=27 // pred_check_branch
          %1764 = sbr.rel (%p1762) target = $region44
        $region43: #{_double_conv.3} parent=27 // pred_region
          %s1766 = ssub.s32 16, 16
          %1767 = vsyncadd %s1739, %s1766
          %s1768 = smul.addr %s26, 16
          %s1769 = scalar_lea.hbm %s3, %s1768
          %s1771 = sshll.u32 %s1741, 4
          %s1772 = int_to_ptr.vmem [resolvable:$true] %s1771
          %1774 = dma.vmem_to_hbm [thread:$0]  %s1772, 16, %s1769, %s1739
        $region44: #{_double_conv.3} parent=27 // pred_fallthru
          _
        // Predicated region
        $region45: #{_double_conv.3} parent=27 // pred_check
          %p1775 = pneg %p143
        $region46: #{_double_conv.3} parent=27 // pred_check_branch
          %1777 = sbr.rel (%p1775) target = $region48
        $region47: #{_double_conv.3} parent=27 // pred_region
          %s1779 = ssub.s32 16, 16
          %1780 = vsyncadd %s1743, %s1779
          %s1781 = smul.addr %s26, 16
          %s1782 = scalar_lea.hbm %s4, %s1781
          %s1784 = sshll.u32 %s1745, 4
          %s1785 = int_to_ptr.vmem [resolvable:$true] %s1784
          %1787 = dma.vmem_to_hbm [thread:$0]  %s1785, 16, %s1782, %s1743
        $region48: #{_double_conv.3} parent=27 // pred_fallthru
          _
      $region28: #{_double_conv.3} parent=5 // pred_fallthru
        _
      %p1788 = scmp.le.s32.totalorder 2, %s21
      // Predicated region
      $region49: #{_double_conv.3} parent=5 // pred_check
        %p1789 = pneg %p1788
      $region50: #{_double_conv.3} parent=5 // pred_check_branch
        %1791 = sbr.rel (%p1789) target = $region52
      $region51: #{_double_conv.3} parent=5 // pred_region
        %s1792 = ssub.s32 %s21, 2
        // Predicated region
        $region53: #{_double_conv.3} parent=51 // pred_check
          %p1793 = pneg %p97
        $region54: #{_double_conv.3} parent=51 // pred_check_branch
          %1795 = sbr.rel (%p1793) target = $region56
        $region55: #{_double_conv.3} parent=51 // pred_region
          %s1796 = sand.u32 %s82, 1
          %s1797 = scalar_lea.sflag [#allocation5], %s1796
          %s1798 = sand.u32 %s82, 1
          %s1799 = smul.addr %s1798, 128
          %s1800 = scalar_lea.vmem [#allocation8], %s1799
          %1801 = dma.done %s1797, 2048
        $region56: #{_double_conv.3} parent=51 // pred_fallthru
          _
        // Predicated region
        $region57: #{_double_conv.3} parent=51 // pred_check
          %p1802 = pneg %p123
        $region58: #{_double_conv.3} parent=51 // pred_check_branch
          %1804 = sbr.rel (%p1802) target = $region60
        $region59: #{_double_conv.3} parent=51 // pred_region
          %s1805 = sand.u32 %s27, 1
          %s1806 = scalar_lea.sflag [#allocation10], %s1805
          %s1807 = sand.u32 %s108, 1
          %s1808 = scalar_lea.vmem [#allocation9], %s1807
          %1809 = dma.done %s1806, 16
        $region60: #{_double_conv.3} parent=51 // pred_fallthru
          _
        // Predicated region
        $region61: #{_double_conv.3} parent=51 // pred_check
          %p1810 = pneg %p149
        $region62: #{_double_conv.3} parent=51 // pred_check_branch
          %1812 = sbr.rel (%p1810) target = $region64
        $region63: #{_double_conv.3} parent=51 // pred_region
          %s1813 = sand.u32 %s27, 1
          %s1814 = scalar_lea.sflag [#allocation10], %s1813
          %s1815 = sand.u32 %s134, 1
          %s1816 = scalar_lea.vmem [#allocation11], %s1815
          %1817 = dma.done %s1814, 16
        $region64: #{_double_conv.3} parent=51 // pred_fallthru
          _
      $region52: #{_double_conv.3} parent=5 // pred_fallthru
        _
    $region6: #{_double_conv.3} parent=1 // loop_footer
      %s25 = sadd.s32 1, %s21
    $region7: #{_double_conv.3} parent=1 // loop_footer_branch
      %20 = sbr.rel target = $region3
    $region8: #{_double_conv.3} parent=1 // loop_exit
      _
    %1818 = vsyncpa [#allocation4], 1
    %s1819 = scalar_lea.sflag [#allocation4], 1
    %1820 = vsyncpa %s1819, 1
    %1821 = vsyncpa [#allocation7], 1
    %1822 = vsyncpa [#allocation5], 1
    %s1823 = scalar_lea.sflag [#allocation5], 1
    %1824 = vsyncpa %s1823, 1
    %1825 = vsyncpa [#allocation10], 1
    %s1826 = scalar_lea.sflag [#allocation10], 1
    %1827 = vsyncpa %s1826, 1

// kernel: _double_conv.4
$region0: #{_double_conv.4}
  #allocation0 [shape = 'u32[]', space=smem, size = 0x4, offset = 0x4, fixed_abs, tag = 'smem constant byte address 0x4 - core index']
  #allocation1 [shape = 'u32[144,128]{1,0:T(1,128)}', space=vmem, size = 0x12000, scoped, tag = 'internal scratch']
  #allocation2 [shape = 'bf16[18,18,128]{2,1,0:T(8,128)(2,1)}', space=vmem, size = 0x1b000, scoped, tag = 'scratch operand']
  #allocation3 [shape = 'bf16[256,1152]{1,0:T(16,128)(2,1)}', space=vmem, size = 0x90000, scoped, tag = 'scratch operand']
  %s0 = inlined_call_operand.hbm [shape: bf16[2,256,128], index: 0, kind: input, shape index: {}]
  %s1 = inlined_call_operand.hbm [shape: f32[1,128], index: 1, kind: input, shape index: {}]
  %s2 = inlined_call_operand.hbm [shape: f32[1,128], index: 2, kind: input, shape index: {}]
  %s3 = inlined_call_operand.hbm [shape: bf16[1152,128], index: 3, kind: input, shape index: {}]
  %s4 = inlined_call_operand.hbm [shape: bf16[2,256,128], index: 4, kind: output, shape index: {0}]
  %s5 = inlined_call_operand.hbm [shape: f32[2,1,128], index: 5, kind: output, shape index: {1}]
  %s6 = inlined_call_operand.hbm [shape: f32[2,1,128], index: 6, kind: output, shape index: {2}]
  %7 = xla_tuple %s4, %s5, %s6
  %s8 = sld [smem:[#allocation0]]
  $region81: #{_double_conv.4} parent=0
    _
  %s10 = ssub.s32 1, %s8
  %s11 = scalar_select 0, %s10, %s8
  $region1: #{_double_conv.4} parent=0
    #allocation4 [shape = 'u8[131072]{0}', space=vmem, size = 0x20000, scoped, tag = 'input window, operand 0']
    #allocation5 [shape = 's32[2]{0}', space=sflag, size = 0x8, scoped, tag = 'scoped memory for _double_conv.4']
    #allocation6 [shape = 's32[2]{0}', space=sflag, size = 0x8, scoped, tag = 'scoped memory for _double_conv.4']
    #allocation7 [shape = 'u8[512]{0}', space=vmem, size = 0x400, scoped, tag = 'input window, operand 1, single buffered']
    #allocation8 [shape = 's32[1]{0}', space=sflag, size = 0x4, scoped, tag = 'scoped memory for _double_conv.4']
    #allocation9 [shape = 'u8[512]{0}', space=vmem, size = 0x400, scoped, tag = 'input window, operand 2, single buffered']
    #allocation10 [shape = 'u8[294912]{0}', space=vmem, size = 0x48000, scoped, tag = 'input window, operand 3, single buffered']
    #allocation11 [shape = 's32[1]{0}', space=sflag, size = 0x4, scoped, tag = 'scoped memory for _double_conv.4']
    #allocation12 [shape = 'u8[131072]{0}', space=vmem, size = 0x20000, scoped, tag = 'output window, operand 0']
    #allocation13 [shape = 'u8[1024]{0}', space=vmem, size = 0x400, scoped, tag = 'output window, operand 1']
    #allocation14 [shape = 's32[2]{0}', space=sflag, size = 0x8, scoped, tag = 'scoped memory for _double_conv.4']
    #allocation15 [shape = 'u8[1024]{0}', space=vmem, size = 0x400, scoped, tag = 'output window, operand 2']
    %12 = vsyncpa [#allocation5], 0
    %s13 = scalar_lea.sflag [#allocation5], 1
    %14 = vsyncpa %s13, 0
    %15 = vsyncpa [#allocation8], 0
    %16 = vsyncpa [#allocation11], 0
    %17 = vsyncpa [#allocation6], 0
    %s18 = scalar_lea.sflag [#allocation6], 1
    %19 = vsyncpa %s18, 0
    %20 = vsyncpa [#allocation14], 0
    %s21 = scalar_lea.sflag [#allocation14], 1
    %22 = vsyncpa %s21, 0
    loop: start=0, step=1, limit=4
    $region2: #{_double_conv.4} parent=1 // loop_pre_header
      _
    $region3: #{_double_conv.4} parent=1 // loop_header
      %s24 = sphi 0, %s28
      %p25 = scmp.ge.s32.totalorder %s24, 4
      %s34 = sphi 0, %s36
      %s37 = sphi 0, %s34
      %s38 = sphi 0, %s37
      %s54 = sphi 0, %s38
      %s58 = sphi 0, %s58
      %s60 = sphi 0, %s58
      %s61 = sphi 0, %s60
      %s75 = sphi 0, %s61
      %s79 = sphi 0, %s79
      %s81 = sphi 0, %s79
      %s82 = sphi 0, %s81
      %s96 = sphi 0, %s82
      %s100 = sphi 0, %s100
      %s102 = sphi 0, %s100
      %s103 = sphi 0, %s102
      %s117 = sphi 0, %s103
      %s123 = sphi 0, %s125
      %s126 = sphi 0, %s123
      %s127 = sphi 0, %s126
      %s143 = sphi 0, %s127
      %s149 = sphi 0, %s151
      %s152 = sphi 0, %s149
      %s153 = sphi 0, %s152
      %s169 = sphi 0, %s153
      %s175 = sphi 0, %s177
      %s178 = sphi 0, %s175
      %s179 = sphi 0, %s178
      %s195 = sphi 0, %s179
    $region4: #{_double_conv.4} parent=1 // loop_header_branch
      %27 = sbr.rel (%p25) target = $region8
    $region5: #{_double_conv.4} parent=1 // loop_body
      %s29 = ssub.s32 %s24, 1
      %s30 = ssub.s32 %s24, 2
      %s31 = sadd.s32 %s24, 1
      %s32 = ssub.s32 %s24, %s31
      %p33 = scmp.eq.s32.totalorder %s32, 0
      %s35 = sadd.s32 %s34, 1
      %s36 = scalar_select %p33, %s34, %s35
      %p39 = pneg %p33
      %p40 = scmp.eq.s32.totalorder %s24, 1
      %p41 = por %p39, %p40
      %p42 = scmp.ne.s32.totalorder %s34, %s37
      %p43 = scmp.eq.s32.totalorder %s24, 0
      %p44 = por %p42, %p43
      %p45 = scmp.ne.s32.totalorder %s34, %s37
      %p46 = scmp.eq.s32.totalorder %s29, 1
      %p47 = por %p45, %p46
      %p48 = scmp.ne.s32.totalorder %s37, %s38
      %p49 = scmp.eq.s32.totalorder %s29, 0
      %p50 = por %p48, %p49
      %p51 = scmp.ne.s32.totalorder %s37, %s38
      %p52 = scmp.eq.s32.totalorder %s30, 1
      %p53 = por %p51, %p52
      %p55 = scmp.ne.s32.totalorder %s38, %s54
      %p56 = scmp.eq.s32.totalorder %s30, 0
      %p57 = por %p55, %p56
      %s59 = sadd.s32 %s58, 1
      %p62 = scmp.eq.s32.totalorder %s24, 1
      %p63 = scmp.ne.s32.totalorder %s58, %s60
      %p64 = scmp.eq.s32.totalorder %s24, 0
      %p65 = por %p63, %p64
      %p66 = scmp.ne.s32.totalorder %s58, %s60
      %p67 = scmp.eq.s32.totalorder %s29, 1
      %p68 = por %p66, %p67
      %p69 = scmp.ne.s32.totalorder %s60, %s61
      %p70 = scmp.eq.s32.totalorder %s29, 0
      %p71 = por %p69, %p70
      %p72 = scmp.ne.s32.totalorder %s60, %s61
      %p73 = scmp.eq.s32.totalorder %s30, 1
      %p74 = por %p72, %p73
      %p76 = scmp.ne.s32.totalorder %s61, %s75
      %p77 = scmp.eq.s32.totalorder %s30, 0
      %p78 = por %p76, %p77
      %s80 = sadd.s32 %s79, 1
      %p83 = scmp.eq.s32.totalorder %s24, 1
      %p84 = scmp.ne.s32.totalorder %s79, %s81
      %p85 = scmp.eq.s32.totalorder %s24, 0
      %p86 = por %p84, %p85
      %p87 = scmp.ne.s32.totalorder %s79, %s81
      %p88 = scmp.eq.s32.totalorder %s29, 1
      %p89 = por %p87, %p88
      %p90 = scmp.ne.s32.totalorder %s81, %s82
      %p91 = scmp.eq.s32.totalorder %s29, 0
      %p92 = por %p90, %p91
      %p93 = scmp.ne.s32.totalorder %s81, %s82
      %p94 = scmp.eq.s32.totalorder %s30, 1
      %p95 = por %p93, %p94
      %p97 = scmp.ne.s32.totalorder %s82, %s96
      %p98 = scmp.eq.s32.totalorder %s30, 0
      %p99 = por %p97, %p98
      %s101 = sadd.s32 %s100, 1
      %p104 = scmp.eq.s32.totalorder %s24, 1
      %p105 = scmp.ne.s32.totalorder %s100, %s102
      %p106 = scmp.eq.s32.totalorder %s24, 0
      %p107 = por %p105, %p106
      %p108 = scmp.ne.s32.totalorder %s100, %s102
      %p109 = scmp.eq.s32.totalorder %s29, 1
      %p110 = por %p108, %p109
      %p111 = scmp.ne.s32.totalorder %s102, %s103
      %p112 = scmp.eq.s32.totalorder %s29, 0
      %p113 = por %p111, %p112
      %p114 = scmp.ne.s32.totalorder %s102, %s103
      %p115 = scmp.eq.s32.totalorder %s30, 1
      %p116 = por %p114, %p115
      %p118 = scmp.ne.s32.totalorder %s103, %s117
      %p119 = scmp.eq.s32.totalorder %s30, 0
      %p120 = por %p118, %p119
      %s121 = ssub.s32 %s24, %s31
      %p122 = scmp.eq.s32.totalorder %s121, 0
      %s124 = sadd.s32 %s123, 1
      %s125 = scalar_select %p122, %s123, %s124
      %p128 = pneg %p122
      %p129 = scmp.eq.s32.totalorder %s24, 1
      %p130 = por %p128, %p129
      %p131 = scmp.ne.s32.totalorder %s123, %s126
      %p132 = scmp.eq.s32.totalorder %s24, 0
      %p133 = por %p131, %p132
      %p134 = scmp.ne.s32.totalorder %s123, %s126
      %p135 = scmp.eq.s32.totalorder %s29, 1
      %p136 = por %p134, %p135
      %p137 = scmp.ne.s32.totalorder %s126, %s127
      %p138 = scmp.eq.s32.totalorder %s29, 0
      %p139 = por %p137, %p138
      %p140 = scmp.ne.s32.totalorder %s126, %s127
      %p141 = scmp.eq.s32.totalorder %s30, 1
      %p142 = por %p140, %p141
      %p144 = scmp.ne.s32.totalorder %s127, %s143
      %p145 = scmp.eq.s32.totalorder %s30, 0
      %p146 = por %p144, %p145
      %s147 = ssub.s32 %s24, %s31
      %p148 = scmp.eq.s32.totalorder %s147, 0
      %s150 = sadd.s32 %s149, 1
      %s151 = scalar_select %p148, %s149, %s150
      %p154 = pneg %p148
      %p155 = scmp.eq.s32.totalorder %s24, 1
      %p156 = por %p154, %p155
      %p157 = scmp.ne.s32.totalorder %s149, %s152
      %p158 = scmp.eq.s32.totalorder %s24, 0
      %p159 = por %p157, %p158
      %p160 = scmp.ne.s32.totalorder %s149, %s152
      %p161 = scmp.eq.s32.totalorder %s29, 1
      %p162 = por %p160, %p161
      %p163 = scmp.ne.s32.totalorder %s152, %s153
      %p164 = scmp.eq.s32.totalorder %s29, 0
      %p165 = por %p163, %p164
      %p166 = scmp.ne.s32.totalorder %s152, %s153
      %p167 = scmp.eq.s32.totalorder %s30, 1
      %p168 = por %p166, %p167
      %p170 = scmp.ne.s32.totalorder %s153, %s169
      %p171 = scmp.eq.s32.totalorder %s30, 0
      %p172 = por %p170, %p171
      %s173 = ssub.s32 %s24, %s31
      %p174 = scmp.eq.s32.totalorder %s173, 0
      %s176 = sadd.s32 %s175, 1
      %s177 = scalar_select %p174, %s175, %s176
      %p180 = pneg %p174
      %p181 = scmp.eq.s32.totalorder %s24, 1
      %p182 = por %p180, %p181
      %p183 = scmp.ne.s32.totalorder %s175, %s178
      %p184 = scmp.eq.s32.totalorder %s24, 0
      %p185 = por %p183, %p184
      %p186 = scmp.ne.s32.totalorder %s175, %s178
      %p187 = scmp.eq.s32.totalorder %s29, 1
      %p188 = por %p186, %p187
      %p189 = scmp.ne.s32.totalorder %s178, %s179
      %p190 = scmp.eq.s32.totalorder %s29, 0
      %p191 = por %p189, %p190
      %p192 = scmp.ne.s32.totalorder %s178, %s179
      %p193 = scmp.eq.s32.totalorder %s30, 1
      %p194 = por %p192, %p193
      %p196 = scmp.ne.s32.totalorder %s179, %s195
      %p197 = scmp.eq.s32.totalorder %s30, 0
      %p198 = por %p196, %p197
      %p199 = scmp.le.s32.totalorder 1, %s24
      %p200 = scmp.lt.s32.totalorder %s24, 3
      %p201 = pnand %p199, %p200
      %p202 = pneg %p201
      // Predicated region
      $region9: #{_double_conv.4} parent=5 // pred_check
        _
      $region10: #{_double_conv.4} parent=5 // pred_check_branch
        %204 = sbr.rel (%p201) target = $region12
      $region11: #{_double_conv.4} parent=5 // pred_region
        %s205 = ssub.s32 %s24, 1
        // Predicated region
        $region13: #{_double_conv.4} parent=11 // pred_check
          %p206 = pneg %p71
        $region14: #{_double_conv.4} parent=11 // pred_check_branch
          %208 = sbr.rel (%p206) target = $region16
        $region15: #{_double_conv.4} parent=11 // pred_region
          %s210 = ssub.s32 16, 16
          %211 = vsyncadd [#allocation8], %s210
          %s213 = sshll.u32 [#allocation7], 4
          %s214 = int_to_ptr.vmem [resolvable:$true] %s213
          %216 = dma.hbm_to_vmem [thread:$0]  %s1, 16, %s214, [#allocation8]
        $region16: #{_double_conv.4} parent=11 // pred_fallthru
          _
        // Predicated region
        $region17: #{_double_conv.4} parent=11 // pred_check
          %p217 = pneg %p92
        $region18: #{_double_conv.4} parent=11 // pred_check_branch
          %219 = sbr.rel (%p217) target = $region20
        $region19: #{_double_conv.4} parent=11 // pred_region
          %s221 = ssub.s32 16, 16
          %222 = vsyncadd [#allocation8], %s221
          %s224 = sshll.u32 [#allocation9], 4
          %s225 = int_to_ptr.vmem [resolvable:$true] %s224
          %227 = dma.hbm_to_vmem [thread:$0]  %s2, 16, %s225, [#allocation8]
        $region20: #{_double_conv.4} parent=11 // pred_fallthru
          _
        // Predicated region
        $region21: #{_double_conv.4} parent=11 // pred_check
          %p228 = pneg %p113
        $region22: #{_double_conv.4} parent=11 // pred_check_branch
          %230 = sbr.rel (%p228) target = $region24
        $region23: #{_double_conv.4} parent=11 // pred_region
          %s232 = ssub.s32 9216, 9216
          %233 = vsyncadd [#allocation11], %s232
          %s234 = sshll.u32 [#allocation10], 4
          %s235 = int_to_ptr.vmem [resolvable:$true] %s234
          %240 = dma.hbm_to_vmem [thread:$0]  %s3, 9216, %s235, [#allocation11], 64, 64, 4
        $region24: #{_double_conv.4} parent=11 // pred_fallthru
          _
      $region12: #{_double_conv.4} parent=5 // pred_fallthru
        _
      %p241 = scmp.lt.s32.totalorder %s24, 2
      // Predicated region
      $region25: #{_double_conv.4} parent=5 // pred_check
        %p242 = pneg %p241
      $region26: #{_double_conv.4} parent=5 // pred_check_branch
        %244 = sbr.rel (%p242) target = $region28
      $region27: #{_double_conv.4} parent=5 // pred_region
        // Predicated region
        $region29: #{_double_conv.4} parent=27 // pred_check
          %p245 = pneg %p44
        $region30: #{_double_conv.4} parent=27 // pred_check_branch
          %247 = sbr.rel (%p245) target = $region32
        $region31: #{_double_conv.4} parent=27 // pred_region
          %s248 = sand.u32 %s34, 1
          %s249 = scalar_lea.sflag [#allocation5], %s248
          %s250 = sand.u32 %s34, 1
          %s251 = smul.addr %s250, 128
          %s252 = scalar_lea.vmem [#allocation4], %s251
          %s254 = ssub.s32 2048, 2048
          %255 = vsyncadd %s249, %s254
          %s256 = smul.addr %s24, 32
          %s257 = smul.addr %s256, 64
          %s258 = scalar_lea.hbm %s0, %s257
          %s259 = sshll.u32 %s252, 4
          %s260 = int_to_ptr.vmem [resolvable:$true] %s259
          %265 = dma.hbm_to_vmem [thread:$0]  %s258, 2048, %s260, %s249, 64, 64, 4
        $region32: #{_double_conv.4} parent=27 // pred_fallthru
          _
      $region28: #{_double_conv.4} parent=5 // pred_fallthru
        _
      %p266 = scmp.le.s32.totalorder 1, %s24
      %p267 = scmp.lt.s32.totalorder %s24, 3
      %p268 = pnand %p266, %p267
      %p269 = pneg %p268
      // Predicated region
      $region33: #{_double_conv.4} parent=5 // pred_check
        _
      $region34: #{_double_conv.4} parent=5 // pred_check_branch
        %271 = sbr.rel (%p268) target = $region36
      $region35: #{_double_conv.4} parent=5 // pred_region
        %s272 = ssub.s32 %s24, 1
        %s273 = sand.u32 %s37, 1
        %s274 = scalar_lea.sflag [#allocation5], %s273
        %s275 = sand.u32 %s37, 1
        %s276 = smul.addr %s275, 128
        %s277 = scalar_lea.vmem [#allocation4], %s276
        // Predicated region
        $region37: #{_double_conv.4} parent=35 // pred_check
          %p278 = pneg %p50
        $region38: #{_double_conv.4} parent=35 // pred_check_branch
          %280 = sbr.rel (%p278) target = $region40
        $region39: #{_double_conv.4} parent=35 // pred_region
          %281 = dma.done %s274, 2048
        $region40: #{_double_conv.4} parent=35 // pred_fallthru
          _
        // Predicated region
        $region41: #{_double_conv.4} parent=35 // pred_check
          %p282 = pneg %p71
        $region42: #{_double_conv.4} parent=35 // pred_check_branch
          %284 = sbr.rel (%p282) target = $region44
        $region43: #{_double_conv.4} parent=35 // pred_region
          %285 = dma.done [#allocation8], 16
        $region44: #{_double_conv.4} parent=35 // pred_fallthru
          _
        // Predicated region
        $region45: #{_double_conv.4} parent=35 // pred_check
          %p286 = pneg %p92
        $region46: #{_double_conv.4} parent=35 // pred_check_branch
          %288 = sbr.rel (%p286) target = $region48
        $region47: #{_double_conv.4} parent=35 // pred_region
          %289 = dma.done [#allocation8], 16
        $region48: #{_double_conv.4} parent=35 // pred_fallthru
          _
        // Predicated region
        $region49: #{_double_conv.4} parent=35 // pred_check
          %p290 = pneg %p113
        $region50: #{_double_conv.4} parent=35 // pred_check_branch
          %292 = sbr.rel (%p290) target = $region52
        $region51: #{_double_conv.4} parent=35 // pred_region
          %293 = dma.done [#allocation11], 9216
        $region52: #{_double_conv.4} parent=35 // pred_fallthru
          _
        %s294 = sand.u32 %s37, 1
        %s295 = scalar_lea.sflag [#allocation5], %s294
        %s296 = sand.u32 %s37, 1
        %s297 = smul.addr %s296, 128
        %s298 = scalar_lea.vmem [#allocation4], %s297
        %p299 = pneg %p50
        %p300 = pneg %p47
        %p301 = pneg %p71
        %p302 = pneg %p68
        %p303 = pneg %p92
        %p304 = pneg %p89
        %p305 = pneg %p113
        %p306 = pneg %p110
        %p307 = pneg %p139
        %p308 = pneg %p136
        %s309 = sand.u32 %s126, 1
        %s310 = scalar_lea.sflag [#allocation6], %s309
        %s311 = sand.u32 %s126, 1
        %s312 = smul.addr %s311, 128
        %s313 = scalar_lea.vmem [#allocation12], %s312
        %p314 = pneg %p165
        %p315 = pneg %p162
        %s316 = sand.u32 %s29, 1
        %s317 = scalar_lea.sflag [#allocation14], %s316
        %s318 = sand.u32 %s152, 1
        %s319 = scalar_lea.vmem [#allocation13], %s318
        %p320 = pneg %p191
        %p321 = pneg %p188
        %s322 = sand.u32 %s29, 1
        %s323 = scalar_lea.sflag [#allocation14], %s322
        %s324 = sand.u32 %s178, 1
        %s325 = scalar_lea.vmem [#allocation15], %s324
        %v327 = vld [vmem:[%s277] sm:$0xf]
        %v328 = vld [vmem:[%s277 + $0x4] sm:$0xf]
        %v329 = vld [vmem:[%s277 + $0x8] sm:$0xf]
        %v330 = vld [vmem:[%s277 + $0xc] sm:$0xf]
        %v331 = vld [vmem:[%s277 + $0x10] sm:$0xf]
        %v332 = vld [vmem:[%s277 + $0x14] sm:$0xf]
        %v333 = vld [vmem:[%s277 + $0x18] sm:$0xf]
        %v334 = vld [vmem:[%s277 + $0x1c] sm:$0xf]
        %v335 = vld [vmem:[%s277 + $0x20] sm:$0xf]
        %v336 = vld [vmem:[%s277 + $0x24] sm:$0xf]
        %v337 = vld [vmem:[%s277 + $0x28] sm:$0xf]
        %v338 = vld [vmem:[%s277 + $0x2c] sm:$0xf]
        %v339 = vld [vmem:[%s277 + $0x30] sm:$0xf]
        %v340 = vld [vmem:[%s277 + $0x34] sm:$0xf]
        %v341 = vld [vmem:[%s277 + $0x38] sm:$0xf]
        %v342 = vld [vmem:[%s277 + $0x3c] sm:$0xf]
        %v343 = vld [vmem:[%s277 + $0x40] sm:$0xf]
        %v344 = vld [vmem:[%s277 + $0x44] sm:$0xf]
        %v345 = vld [vmem:[%s277 + $0x48] sm:$0xf]
        %v346 = vld [vmem:[%s277 + $0x4c] sm:$0xf]
        %v347 = vld [vmem:[%s277 + $0x50] sm:$0xf]
        %v348 = vld [vmem:[%s277 + $0x54] sm:$0xf]
        %v349 = vld [vmem:[%s277 + $0x58] sm:$0xf]
        %v350 = vld [vmem:[%s277 + $0x5c] sm:$0xf]
        %v351 = vld [vmem:[%s277 + $0x60] sm:$0xf]
        %v352 = vld [vmem:[%s277 + $0x64] sm:$0xf]
        %v353 = vld [vmem:[%s277 + $0x68] sm:$0xf]
        %v354 = vld [vmem:[%s277 + $0x6c] sm:$0xf]
        %v355 = vld [vmem:[%s277 + $0x70] sm:$0xf]
        %v356 = vld [vmem:[%s277 + $0x74] sm:$0xf]
        %v357 = vld [vmem:[%s277 + $0x78] sm:$0xf]
        %v358 = vld [vmem:[%s277 + $0x7c] sm:$0xf]
        %v359 = vunpack.c.l.bf16 %v327
        %v360 = vunpack.c.l.bf16 %v328
        %v361 = vunpack.c.l.bf16 %v329
        %v362 = vunpack.c.l.bf16 %v330
        %v363 = vunpack.c.l.bf16 %v331
        %v364 = vunpack.c.l.bf16 %v332
        %v365 = vunpack.c.l.bf16 %v333
        %v366 = vunpack.c.l.bf16 %v334
        %v367 = vunpack.c.l.bf16 %v335
        %v368 = vunpack.c.l.bf16 %v336
        %v369 = vunpack.c.l.bf16 %v337
        %v370 = vunpack.c.l.bf16 %v338
        %v371 = vunpack.c.l.bf16 %v339
        %v372 = vunpack.c.l.bf16 %v340
        %v373 = vunpack.c.l.bf16 %v341
        %v374 = vunpack.c.l.bf16 %v342
        %v375 = vunpack.c.l.bf16 %v343
        %v376 = vunpack.c.l.bf16 %v344
        %v377 = vunpack.c.l.bf16 %v345
        %v378 = vunpack.c.l.bf16 %v346
        %v379 = vunpack.c.l.bf16 %v347
        %v380 = vunpack.c.l.bf16 %v348
        %v381 = vunpack.c.l.bf16 %v349
        %v382 = vunpack.c.l.bf16 %v350
        %v383 = vunpack.c.l.bf16 %v351
        %v384 = vunpack.c.l.bf16 %v352
        %v385 = vunpack.c.l.bf16 %v353
        %v386 = vunpack.c.l.bf16 %v354
        %v387 = vunpack.c.l.bf16 %v355
        %v388 = vunpack.c.l.bf16 %v356
        %v389 = vunpack.c.l.bf16 %v357
        %v390 = vunpack.c.l.bf16 %v358
        %v391 = vld [vmem:[#allocation7] sm:$0x1]
        %v393 = vlaneseq
        %v394 = vshrl.u32 %v393, 7
        %v395 = vsub.s32 0, %v394
        %v396 = vrot.slane %v391, %v395
        %v398 = vmul.f32 %v359, %v396
        %v399 = vmul.f32 %v360, %v396
        %v400 = vmul.f32 %v361, %v396
        %v401 = vmul.f32 %v362, %v396
        %v402 = vmul.f32 %v363, %v396
        %v403 = vmul.f32 %v364, %v396
        %v404 = vmul.f32 %v365, %v396
        %v405 = vmul.f32 %v366, %v396
        %v406 = vmul.f32 %v367, %v396
        %v407 = vmul.f32 %v368, %v396
        %v408 = vmul.f32 %v369, %v396
        %v409 = vmul.f32 %v370, %v396
        %v410 = vmul.f32 %v371, %v396
        %v411 = vmul.f32 %v372, %v396
        %v412 = vmul.f32 %v373, %v396
        %v413 = vmul.f32 %v374, %v396
        %v414 = vmul.f32 %v375, %v396
        %v415 = vmul.f32 %v376, %v396
        %v416 = vmul.f32 %v377, %v396
        %v417 = vmul.f32 %v378, %v396
        %v418 = vmul.f32 %v379, %v396
        %v419 = vmul.f32 %v380, %v396
        %v420 = vmul.f32 %v381, %v396
        %v421 = vmul.f32 %v382, %v396
        %v422 = vmul.f32 %v383, %v396
        %v423 = vmul.f32 %v384, %v396
        %v424 = vmul.f32 %v385, %v396
        %v425 = vmul.f32 %v386, %v396
        %v426 = vmul.f32 %v387, %v396
        %v427 = vmul.f32 %v388, %v396
        %v428 = vmul.f32 %v389, %v396
        %v429 = vmul.f32 %v390, %v396
        %v430 = vld [vmem:[#allocation9] sm:$0x1]
        %v432 = vlaneseq
        %v433 = vshrl.u32 %v432, 7
        %v434 = vsub.s32 0, %v433
        %v435 = vrot.slane %v430, %v434
        %v437 = vadd.f32 %v398, %v435
        %v438 = vadd.f32 %v399, %v435
        %v439 = vadd.f32 %v400, %v435
        %v440 = vadd.f32 %v401, %v435
        %v441 = vadd.f32 %v402, %v435
        %v442 = vadd.f32 %v403, %v435
        %v443 = vadd.f32 %v404, %v435
        %v444 = vadd.f32 %v405, %v435
        %v445 = vadd.f32 %v406, %v435
        %v446 = vadd.f32 %v407, %v435
        %v447 = vadd.f32 %v408, %v435
        %v448 = vadd.f32 %v409, %v435
        %v449 = vadd.f32 %v410, %v435
        %v450 = vadd.f32 %v411, %v435
        %v451 = vadd.f32 %v412, %v435
        %v452 = vadd.f32 %v413, %v435
        %v453 = vadd.f32 %v414, %v435
        %v454 = vadd.f32 %v415, %v435
        %v455 = vadd.f32 %v416, %v435
        %v456 = vadd.f32 %v417, %v435
        %v457 = vadd.f32 %v418, %v435
        %v458 = vadd.f32 %v419, %v435
        %v459 = vadd.f32 %v420, %v435
        %v460 = vadd.f32 %v421, %v435
        %v461 = vadd.f32 %v422, %v435
        %v462 = vadd.f32 %v423, %v435
        %v463 = vadd.f32 %v424, %v435
        %v464 = vadd.f32 %v425, %v435
        %v465 = vadd.f32 %v426, %v435
        %v466 = vadd.f32 %v427, %v435
        %v467 = vadd.f32 %v428, %v435
        %v468 = vadd.f32 %v429, %v435
        %v469 = vmax.f32 %v437, 0.0
        %v470 = vmax.f32 %v438, 0.0
        %v471 = vmax.f32 %v439, 0.0
        %v472 = vmax.f32 %v440, 0.0
        %v473 = vmax.f32 %v441, 0.0
        %v474 = vmax.f32 %v442, 0.0
        %v475 = vmax.f32 %v443, 0.0
        %v476 = vmax.f32 %v444, 0.0
        %v477 = vmax.f32 %v445, 0.0
        %v478 = vmax.f32 %v446, 0.0
        %v479 = vmax.f32 %v447, 0.0
        %v480 = vmax.f32 %v448, 0.0
        %v481 = vmax.f32 %v449, 0.0
        %v482 = vmax.f32 %v450, 0.0
        %v483 = vmax.f32 %v451, 0.0
        %v484 = vmax.f32 %v452, 0.0
        %v485 = vmax.f32 %v453, 0.0
        %v486 = vmax.f32 %v454, 0.0
        %v487 = vmax.f32 %v455, 0.0
        %v488 = vmax.f32 %v456, 0.0
        %v489 = vmax.f32 %v457, 0.0
        %v490 = vmax.f32 %v458, 0.0
        %v491 = vmax.f32 %v459, 0.0
        %v492 = vmax.f32 %v460, 0.0
        %v493 = vmax.f32 %v461, 0.0
        %v494 = vmax.f32 %v462, 0.0
        %v495 = vmax.f32 %v463, 0.0
        %v496 = vmax.f32 %v464, 0.0
        %v497 = vmax.f32 %v465, 0.0
        %v498 = vmax.f32 %v466, 0.0
        %v499 = vmax.f32 %v467, 0.0
        %v500 = vmax.f32 %v468, 0.0
        %v501 = vpack.c.bf16 %v470, %v469
        %v502 = vpack.c.bf16 %v472, %v471
        %v503 = vpack.c.bf16 %v474, %v473
        %v504 = vpack.c.bf16 %v476, %v475
        %v505 = vpack.c.bf16 %v478, %v477
        %v506 = vpack.c.bf16 %v480, %v479
        %v507 = vpack.c.bf16 %v482, %v481
        %v508 = vpack.c.bf16 %v484, %v483
        %v509 = vpack.c.bf16 %v486, %v485
        %v510 = vpack.c.bf16 %v488, %v487
        %v511 = vpack.c.bf16 %v490, %v489
        %v512 = vpack.c.bf16 %v492, %v491
        %v513 = vpack.c.bf16 %v494, %v493
        %v514 = vpack.c.bf16 %v496, %v495
        %v515 = vpack.c.bf16 %v498, %v497
        %v516 = vpack.c.bf16 %v500, %v499
        %517 = vst [vmem:[#allocation2] sm:$0xf] 0
        %518 = vst [vmem:[#allocation2 + $0x4] sm:$0xf] 0
        %519 = vst [vmem:[#allocation2 + $0x8] sm:$0x1] 0
        %s520 = scalar_lea.vmem [#allocation2], 204
        %521 = vst [vmem:[%s520] sm:$0xf] 0
        %522 = vst [vmem:[%s520 + $0x4] sm:$0xf] 0
        %523 = vst [vmem:[%s520 + $0x8] sm:$0x1] 0
        %s524 = scalar_lea.vmem [#allocation2], 12
        %vm525 = vcmask 1040384
        %vm526 = vsmask.f32 256
        %vm527 = vmand %vm525, %vm526
        %v528 = vld [vmem:[%s524] sm:$0x1]
        %v529 = vsel %vm527, 0, %v528
        %530 = vst [vmem:[%s524] sm:$0x1] %v529
        %v531 = vld [vmem:[%s524 + $0xc] sm:$0x1]
        %v532 = vsel %vm527, 0, %v531
        %533 = vst [vmem:[%s524 + $0xc] sm:$0x1] %v532
        %v534 = vld [vmem:[%s524 + $0x18] sm:$0x1]
        %v535 = vsel %vm527, 0, %v534
        %536 = vst [vmem:[%s524 + $0x18] sm:$0x1] %v535
        %v537 = vld [vmem:[%s524 + $0x24] sm:$0x1]
        %v538 = vsel %vm527, 0, %v537
        %539 = vst [vmem:[%s524 + $0x24] sm:$0x1] %v538
        %v540 = vld [vmem:[%s524 + $0x30] sm:$0x1]
        %v541 = vsel %vm527, 0, %v540
        %542 = vst [vmem:[%s524 + $0x30] sm:$0x1] %v541
        %v543 = vld [vmem:[%s524 + $0x3c] sm:$0x1]
        %v544 = vsel %vm527, 0, %v543
        %545 = vst [vmem:[%s524 + $0x3c] sm:$0x1] %v544
        %v546 = vld [vmem:[%s524 + $0x48] sm:$0x1]
        %v547 = vsel %vm527, 0, %v546
        %548 = vst [vmem:[%s524 + $0x48] sm:$0x1] %v547
        %v549 = vld [vmem:[%s524 + $0x54] sm:$0x1]
        %v550 = vsel %vm527, 0, %v549
        %551 = vst [vmem:[%s524 + $0x54] sm:$0x1] %v550
        %v552 = vld [vmem:[%s524 + $0x60] sm:$0x1]
        %v553 = vsel %vm527, 0, %v552
        %554 = vst [vmem:[%s524 + $0x60] sm:$0x1] %v553
        %v555 = vld [vmem:[%s524 + $0x6c] sm:$0x1]
        %v556 = vsel %vm527, 0, %v555
        %557 = vst [vmem:[%s524 + $0x6c] sm:$0x1] %v556
        %v558 = vld [vmem:[%s524 + $0x78] sm:$0x1]
        %v559 = vsel %vm527, 0, %v558
        %560 = vst [vmem:[%s524 + $0x78] sm:$0x1] %v559
        %v561 = vld [vmem:[%s524 + $0x84] sm:$0x1]
        %v562 = vsel %vm527, 0, %v561
        %563 = vst [vmem:[%s524 + $0x84] sm:$0x1] %v562
        %v564 = vld [vmem:[%s524 + $0x90] sm:$0x1]
        %v565 = vsel %vm527, 0, %v564
        %566 = vst [vmem:[%s524 + $0x90] sm:$0x1] %v565
        %v567 = vld [vmem:[%s524 + $0x9c] sm:$0x1]
        %v568 = vsel %vm527, 0, %v567
        %569 = vst [vmem:[%s524 + $0x9c] sm:$0x1] %v568
        %v570 = vld [vmem:[%s524 + $0xa8] sm:$0x1]
        %v571 = vsel %vm527, 0, %v570
        %572 = vst [vmem:[%s524 + $0xa8] sm:$0x1] %v571
        %v573 = vld [vmem:[%s524 + $0xb4] sm:$0x1]
        %v574 = vsel %vm527, 0, %v573
        %575 = vst [vmem:[%s524 + $0xb4] sm:$0x1] %v574
        %vm576 = vsmask.f32 7938
        %vm577 = vmand %vm525, %vm576
        %v578 = vld [vmem:[%s524 + $0x8] sm:$0x1]
        %v579 = vsel %vm577, 0, %v578
        %580 = vst [vmem:[%s524 + $0x8] sm:$0x1] %v579
        %v581 = vld [vmem:[%s524 + $0x14] sm:$0x1]
        %v582 = vsel %vm577, 0, %v581
        %583 = vst [vmem:[%s524 + $0x14] sm:$0x1] %v582
        %v584 = vld [vmem:[%s524 + $0x20] sm:$0x1]
        %v585 = vsel %vm577, 0, %v584
        %586 = vst [vmem:[%s524 + $0x20] sm:$0x1] %v585
        %v587 = vld [vmem:[%s524 + $0x2c] sm:$0x1]
        %v588 = vsel %vm577, 0, %v587
        %589 = vst [vmem:[%s524 + $0x2c] sm:$0x1] %v588
        %v590 = vld [vmem:[%s524 + $0x38] sm:$0x1]
        %v591 = vsel %vm577, 0, %v590
        %592 = vst [vmem:[%s524 + $0x38] sm:$0x1] %v591
        %v593 = vld [vmem:[%s524 + $0x44] sm:$0x1]
        %v594 = vsel %vm577, 0, %v593
        %595 = vst [vmem:[%s524 + $0x44] sm:$0x1] %v594
        %v596 = vld [vmem:[%s524 + $0x50] sm:$0x1]
        %v597 = vsel %vm577, 0, %v596
        %598 = vst [vmem:[%s524 + $0x50] sm:$0x1] %v597
        %v599 = vld [vmem:[%s524 + $0x5c] sm:$0x1]
        %v600 = vsel %vm577, 0, %v599
        %601 = vst [vmem:[%s524 + $0x5c] sm:$0x1] %v600
        %v602 = vld [vmem:[%s524 + $0x68] sm:$0x1]
        %v603 = vsel %vm577, 0, %v602
        %604 = vst [vmem:[%s524 + $0x68] sm:$0x1] %v603
        %v605 = vld [vmem:[%s524 + $0x74] sm:$0x1]
        %v606 = vsel %vm577, 0, %v605
        %607 = vst [vmem:[%s524 + $0x74] sm:$0x1] %v606
        %v608 = vld [vmem:[%s524 + $0x80] sm:$0x1]
        %v609 = vsel %vm577, 0, %v608
        %610 = vst [vmem:[%s524 + $0x80] sm:$0x1] %v609
        %v611 = vld [vmem:[%s524 + $0x8c] sm:$0x1]
        %v612 = vsel %vm577, 0, %v611
        %613 = vst [vmem:[%s524 + $0x8c] sm:$0x1] %v612
        %v614 = vld [vmem:[%s524 + $0x98] sm:$0x1]
        %v615 = vsel %vm577, 0, %v614
        %616 = vst [vmem:[%s524 + $0x98] sm:$0x1] %v615
        %v617 = vld [vmem:[%s524 + $0xa4] sm:$0x1]
        %v618 = vsel %vm577, 0, %v617
        %619 = vst [vmem:[%s524 + $0xa4] sm:$0x1] %v618
        %v620 = vld [vmem:[%s524 + $0xb0] sm:$0x1]
        %v621 = vsel %vm577, 0, %v620
        %622 = vst [vmem:[%s524 + $0xb0] sm:$0x1] %v621
        %v623 = vld [vmem:[%s524 + $0xbc] sm:$0x1]
        %v624 = vsel %vm577, 0, %v623
        %625 = vst [vmem:[%s524 + $0xbc] sm:$0x1] %v624
        %v642 = vunpack.c.l.b16 %v501
        %v643 = vunpack.c.h.b16 %v501
        %v644 = vunpack.c.l.b16 %v502
        %v645 = vunpack.c.h.b16 %v502
        %v646 = vunpack.c.l.b16 %v503
        %v647 = vunpack.c.h.b16 %v503
        %v648 = vunpack.c.l.b16 %v504
        %v649 = vunpack.c.h.b16 %v504
        %v650 = vunpack.c.l.b16 %v505
        %v651 = vunpack.c.h.b16 %v505
        %v652 = vunpack.c.l.b16 %v506
        %v653 = vunpack.c.h.b16 %v506
        %v654 = vunpack.c.l.b16 %v507
        %v655 = vunpack.c.h.b16 %v507
        %v656 = vunpack.c.l.b16 %v508
        %v657 = vunpack.c.h.b16 %v508
        %v658 = vunpack.c.l.b16 %v509
        %v659 = vunpack.c.h.b16 %v509
        %v660 = vunpack.c.l.b16 %v510
        %v661 = vunpack.c.h.b16 %v510
        %v662 = vunpack.c.l.b16 %v511
        %v663 = vunpack.c.h.b16 %v511
        %v664 = vunpack.c.l.b16 %v512
        %v665 = vunpack.c.h.b16 %v512
        %v666 = vunpack.c.l.b16 %v513
        %v667 = vunpack.c.h.b16 %v513
        %v668 = vunpack.c.l.b16 %v514
        %v669 = vunpack.c.h.b16 %v514
        %v670 = vunpack.c.l.b16 %v515
        %v671 = vunpack.c.h.b16 %v515
        %v672 = vunpack.c.l.b16 %v516
        %v673 = vunpack.c.h.b16 %v516
        %v674 = vpack.c.b16 %v642, %v642
        %v675 = vpack.c.b16 %v643, %v643
        %v676 = vpack.c.b16 %v644, %v644
        %v677 = vpack.c.b16 %v645, %v645
        %v678 = vpack.c.b16 %v646, %v646
        %v679 = vpack.c.b16 %v647, %v647
        %v680 = vpack.c.b16 %v648, %v648
        %v681 = vpack.c.b16 %v649, %v649
        %v682 = vpack.c.b16 %v650, %v650
        %v683 = vpack.c.b16 %v651, %v651
        %v684 = vpack.c.b16 %v652, %v652
        %v685 = vpack.c.b16 %v653, %v653
        %v686 = vpack.c.b16 %v654, %v654
        %v687 = vpack.c.b16 %v655, %v655
        %v688 = vpack.c.b16 %v656, %v656
        %v689 = vpack.c.b16 %v657, %v657
        %v690 = vpack.c.b16 %v658, %v658
        %v691 = vpack.c.b16 %v659, %v659
        %v692 = vpack.c.b16 %v660, %v660
        %v693 = vpack.c.b16 %v661, %v661
        %v694 = vpack.c.b16 %v662, %v662
        %v695 = vpack.c.b16 %v663, %v663
        %v696 = vpack.c.b16 %v664, %v664
        %v697 = vpack.c.b16 %v665, %v665
        %v698 = vpack.c.b16 %v666, %v666
        %v699 = vpack.c.b16 %v667, %v667
        %v700 = vpack.c.b16 %v668, %v668
        %v701 = vpack.c.b16 %v669, %v669
        %v702 = vpack.c.b16 %v670, %v670
        %v703 = vpack.c.b16 %v671, %v671
        %v704 = vpack.c.b16 %v672, %v672
        %v705 = vpack.c.b16 %v673, %v673
        %vm706 = vsmask.f32 4368
        %vm707 = vmor %vm526, %vm706
        %v709 = vshrl.u32 %v674, 16
        %v711 = vrot.slane %v709, 7
        %v712 = vshll.u32 %v674, 16
        %v714 = vor.u32 %v711, %v712
        %v715 = vrot.slane %v711, 4
        %v717 = vshrl.u32 %v675, 16
        %v719 = vrot.slane %v717, 7
        %v720 = vshll.u32 %v675, 16
        %v722 = vor.u32 %v719, %v720
        %v723 = vsel %vm707, %v715, %v722
        %v724 = vrot.slane %v719, 4
        %v726 = vshrl.u32 %v676, 16
        %v728 = vrot.slane %v726, 7
        %v729 = vshll.u32 %v676, 16
        %v731 = vor.u32 %v728, %v729
        %v732 = vrot.slane %v728, 4
        %v734 = vshrl.u32 %v677, 16
        %v736 = vrot.slane %v734, 7
        %v737 = vshll.u32 %v677, 16
        %v739 = vor.u32 %v736, %v737
        %v740 = vsel %vm707, %v732, %v739
        %v741 = vrot.slane %v736, 4
        %v743 = vshrl.u32 %v678, 16
        %v745 = vrot.slane %v743, 7
        %v746 = vshll.u32 %v678, 16
        %v748 = vor.u32 %v745, %v746
        %v749 = vrot.slane %v745, 4
        %v751 = vshrl.u32 %v679, 16
        %v753 = vrot.slane %v751, 7
        %v754 = vshll.u32 %v679, 16
        %v756 = vor.u32 %v753, %v754
        %v757 = vsel %vm707, %v749, %v756
        %v758 = vrot.slane %v753, 4
        %v760 = vshrl.u32 %v680, 16
        %v762 = vrot.slane %v760, 7
        %v763 = vshll.u32 %v680, 16
        %v765 = vor.u32 %v762, %v763
        %v766 = vrot.slane %v762, 4
        %v768 = vshrl.u32 %v681, 16
        %v770 = vrot.slane %v768, 7
        %v771 = vshll.u32 %v681, 16
        %v773 = vor.u32 %v770, %v771
        %v774 = vsel %vm707, %v766, %v773
        %v775 = vrot.slane %v770, 4
        %v777 = vshrl.u32 %v682, 16
        %v779 = vrot.slane %v777, 7
        %v780 = vshll.u32 %v682, 16
        %v782 = vor.u32 %v779, %v780
        %v783 = vrot.slane %v779, 4
        %v785 = vshrl.u32 %v683, 16
        %v787 = vrot.slane %v785, 7
        %v788 = vshll.u32 %v683, 16
        %v790 = vor.u32 %v787, %v788
        %v791 = vsel %vm707, %v783, %v790
        %v792 = vrot.slane %v787, 4
        %v794 = vshrl.u32 %v684, 16
        %v796 = vrot.slane %v794, 7
        %v797 = vshll.u32 %v684, 16
        %v799 = vor.u32 %v796, %v797
        %v800 = vrot.slane %v796, 4
        %v802 = vshrl.u32 %v685, 16
        %v804 = vrot.slane %v802, 7
        %v805 = vshll.u32 %v685, 16
        %v807 = vor.u32 %v804, %v805
        %v808 = vsel %vm707, %v800, %v807
        %v809 = vrot.slane %v804, 4
        %v811 = vshrl.u32 %v686, 16
        %v813 = vrot.slane %v811, 7
        %v814 = vshll.u32 %v686, 16
        %v816 = vor.u32 %v813, %v814
        %v817 = vrot.slane %v813, 4
        %v819 = vshrl.u32 %v687, 16
        %v821 = vrot.slane %v819, 7
        %v822 = vshll.u32 %v687, 16
        %v824 = vor.u32 %v821, %v822
        %v825 = vsel %vm707, %v817, %v824
        %v826 = vrot.slane %v821, 4
        %v828 = vshrl.u32 %v688, 16
        %v830 = vrot.slane %v828, 7
        %v831 = vshll.u32 %v688, 16
        %v833 = vor.u32 %v830, %v831
        %v834 = vrot.slane %v830, 4
        %v836 = vshrl.u32 %v689, 16
        %v838 = vrot.slane %v836, 7
        %v839 = vshll.u32 %v689, 16
        %v841 = vor.u32 %v838, %v839
        %v842 = vsel %vm707, %v834, %v841
        %v843 = vrot.slane %v838, 4
        %v845 = vshrl.u32 %v690, 16
        %v847 = vrot.slane %v845, 7
        %v848 = vshll.u32 %v690, 16
        %v850 = vor.u32 %v847, %v848
        %v851 = vrot.slane %v847, 4
        %v853 = vshrl.u32 %v691, 16
        %v855 = vrot.slane %v853, 7
        %v856 = vshll.u32 %v691, 16
        %v858 = vor.u32 %v855, %v856
        %v859 = vsel %vm707, %v851, %v858
        %v860 = vrot.slane %v855, 4
        %v862 = vshrl.u32 %v692, 16
        %v864 = vrot.slane %v862, 7
        %v865 = vshll.u32 %v692, 16
        %v867 = vor.u32 %v864, %v865
        %v868 = vrot.slane %v864, 4
        %v870 = vshrl.u32 %v693, 16
        %v872 = vrot.slane %v870, 7
        %v873 = vshll.u32 %v693, 16
        %v875 = vor.u32 %v872, %v873
        %v876 = vsel %vm707, %v868, %v875
        %v877 = vrot.slane %v872, 4
        %v879 = vshrl.u32 %v694, 16
        %v881 = vrot.slane %v879, 7
        %v882 = vshll.u32 %v694, 16
        %v884 = vor.u32 %v881, %v882
        %v885 = vrot.slane %v881, 4
        %v887 = vshrl.u32 %v695, 16
        %v889 = vrot.slane %v887, 7
        %v890 = vshll.u32 %v695, 16
        %v892 = vor.u32 %v889, %v890
        %v893 = vsel %vm707, %v885, %v892
        %v894 = vrot.slane %v889, 4
        %v896 = vshrl.u32 %v696, 16
        %v898 = vrot.slane %v896, 7
        %v899 = vshll.u32 %v696, 16
        %v901 = vor.u32 %v898, %v899
        %v902 = vrot.slane %v898, 4
        %v904 = vshrl.u32 %v697, 16
        %v906 = vrot.slane %v904, 7
        %v907 = vshll.u32 %v697, 16
        %v909 = vor.u32 %v906, %v907
        %v910 = vsel %vm707, %v902, %v909
        %v911 = vrot.slane %v906, 4
        %v913 = vshrl.u32 %v698, 16
        %v915 = vrot.slane %v913, 7
        %v916 = vshll.u32 %v698, 16
        %v918 = vor.u32 %v915, %v916
        %v919 = vrot.slane %v915, 4
        %v921 = vshrl.u32 %v699, 16
        %v923 = vrot.slane %v921, 7
        %v924 = vshll.u32 %v699, 16
        %v926 = vor.u32 %v923, %v924
        %v927 = vsel %vm707, %v919, %v926
        %v928 = vrot.slane %v923, 4
        %v930 = vshrl.u32 %v700, 16
        %v932 = vrot.slane %v930, 7
        %v933 = vshll.u32 %v700, 16
        %v935 = vor.u32 %v932, %v933
        %v936 = vrot.slane %v932, 4
        %v938 = vshrl.u32 %v701, 16
        %v940 = vrot.slane %v938, 7
        %v941 = vshll.u32 %v701, 16
        %v943 = vor.u32 %v940, %v941
        %v944 = vsel %vm707, %v936, %v943
        %v945 = vrot.slane %v940, 4
        %v947 = vshrl.u32 %v702, 16
        %v949 = vrot.slane %v947, 7
        %v950 = vshll.u32 %v702, 16
        %v952 = vor.u32 %v949, %v950
        %v953 = vrot.slane %v949, 4
        %v955 = vshrl.u32 %v703, 16
        %v957 = vrot.slane %v955, 7
        %v958 = vshll.u32 %v703, 16
        %v960 = vor.u32 %v957, %v958
        %v961 = vsel %vm707, %v953, %v960
        %v962 = vrot.slane %v957, 4
        %v964 = vshrl.u32 %v704, 16
        %v966 = vrot.slane %v964, 7
        %v967 = vshll.u32 %v704, 16
        %v969 = vor.u32 %v966, %v967
        %v970 = vrot.slane %v966, 4
        %v972 = vshrl.u32 %v705, 16
        %v974 = vrot.slane %v972, 7
        %v975 = vshll.u32 %v705, 16
        %v977 = vor.u32 %v974, %v975
        %v978 = vsel %vm707, %v970, %v977
        %v979 = vrot.slane %v974, 4
        %vm1028 = vcmask 1043456
        %vm1029 = vmand %vm1028, %vm576
        %v1030 = vld [vmem:[%s524] sm:$0xf]
        %v1031 = vsel %vm1029, %v714, %v1030
        %1032 = vst [vmem:[%s524] sm:$0xf] %v1031
        %1033 = vst [vmem:[%s524 + $0x4] sm:$0xf] %v723
        %v1034 = vld [vmem:[%s524 + $0x8] sm:$0x1]
        %v1035 = vsel %vm527, %v724, %v1034
        %1036 = vst [vmem:[%s524 + $0x8] sm:$0x1] %v1035
        %v1037 = vld [vmem:[%s524 + $0xc] sm:$0xf]
        %v1038 = vsel %vm1029, %v731, %v1037
        %1039 = vst [vmem:[%s524 + $0xc] sm:$0xf] %v1038
        %1040 = vst [vmem:[%s524 + $0x10] sm:$0xf] %v740
        %v1041 = vld [vmem:[%s524 + $0x14] sm:$0x1]
        %v1042 = vsel %vm527, %v741, %v1041
        %1043 = vst [vmem:[%s524 + $0x14] sm:$0x1] %v1042
        %v1044 = vld [vmem:[%s524 + $0x18] sm:$0xf]
        %v1045 = vsel %vm1029, %v748, %v1044
        %1046 = vst [vmem:[%s524 + $0x18] sm:$0xf] %v1045
        %1047 = vst [vmem:[%s524 + $0x1c] sm:$0xf] %v757
        %v1048 = vld [vmem:[%s524 + $0x20] sm:$0x1]
        %v1049 = vsel %vm527, %v758, %v1048
        %1050 = vst [vmem:[%s524 + $0x20] sm:$0x1] %v1049
        %v1051 = vld [vmem:[%s524 + $0x24] sm:$0xf]
        %v1052 = vsel %vm1029, %v765, %v1051
        %1053 = vst [vmem:[%s524 + $0x24] sm:$0xf] %v1052
        %1054 = vst [vmem:[%s524 + $0x28] sm:$0xf] %v774
        %v1055 = vld [vmem:[%s524 + $0x2c] sm:$0x1]
        %v1056 = vsel %vm527, %v775, %v1055
        %1057 = vst [vmem:[%s524 + $0x2c] sm:$0x1] %v1056
        %v1058 = vld [vmem:[%s524 + $0x30] sm:$0xf]
        %v1059 = vsel %vm1029, %v782, %v1058
        %1060 = vst [vmem:[%s524 + $0x30] sm:$0xf] %v1059
        %1061 = vst [vmem:[%s524 + $0x34] sm:$0xf] %v791
        %v1062 = vld [vmem:[%s524 + $0x38] sm:$0x1]
        %v1063 = vsel %vm527, %v792, %v1062
        %1064 = vst [vmem:[%s524 + $0x38] sm:$0x1] %v1063
        %v1065 = vld [vmem:[%s524 + $0x3c] sm:$0xf]
        %v1066 = vsel %vm1029, %v799, %v1065
        %1067 = vst [vmem:[%s524 + $0x3c] sm:$0xf] %v1066
        %1068 = vst [vmem:[%s524 + $0x40] sm:$0xf] %v808
        %v1069 = vld [vmem:[%s524 + $0x44] sm:$0x1]
        %v1070 = vsel %vm527, %v809, %v1069
        %1071 = vst [vmem:[%s524 + $0x44] sm:$0x1] %v1070
        %v1072 = vld [vmem:[%s524 + $0x48] sm:$0xf]
        %v1073 = vsel %vm1029, %v816, %v1072
        %1074 = vst [vmem:[%s524 + $0x48] sm:$0xf] %v1073
        %1075 = vst [vmem:[%s524 + $0x4c] sm:$0xf] %v825
        %v1076 = vld [vmem:[%s524 + $0x50] sm:$0x1]
        %v1077 = vsel %vm527, %v826, %v1076
        %1078 = vst [vmem:[%s524 + $0x50] sm:$0x1] %v1077
        %v1079 = vld [vmem:[%s524 + $0x54] sm:$0xf]
        %v1080 = vsel %vm1029, %v833, %v1079
        %1081 = vst [vmem:[%s524 + $0x54] sm:$0xf] %v1080
        %1082 = vst [vmem:[%s524 + $0x58] sm:$0xf] %v842
        %v1083 = vld [vmem:[%s524 + $0x5c] sm:$0x1]
        %v1084 = vsel %vm527, %v843, %v1083
        %1085 = vst [vmem:[%s524 + $0x5c] sm:$0x1] %v1084
        %v1086 = vld [vmem:[%s524 + $0x60] sm:$0xf]
        %v1087 = vsel %vm1029, %v850, %v1086
        %1088 = vst [vmem:[%s524 + $0x60] sm:$0xf] %v1087
        %1089 = vst [vmem:[%s524 + $0x64] sm:$0xf] %v859
        %v1090 = vld [vmem:[%s524 + $0x68] sm:$0x1]
        %v1091 = vsel %vm527, %v860, %v1090
        %1092 = vst [vmem:[%s524 + $0x68] sm:$0x1] %v1091
        %v1093 = vld [vmem:[%s524 + $0x6c] sm:$0xf]
        %v1094 = vsel %vm1029, %v867, %v1093
        %1095 = vst [vmem:[%s524 + $0x6c] sm:$0xf] %v1094
        %1096 = vst [vmem:[%s524 + $0x70] sm:$0xf] %v876
        %v1097 = vld [vmem:[%s524 + $0x74] sm:$0x1]
        %v1098 = vsel %vm527, %v877, %v1097
        %1099 = vst [vmem:[%s524 + $0x74] sm:$0x1] %v1098
        %v1100 = vld [vmem:[%s524 + $0x78] sm:$0xf]
        %v1101 = vsel %vm1029, %v884, %v1100
        %1102 = vst [vmem:[%s524 + $0x78] sm:$0xf] %v1101
        %1103 = vst [vmem:[%s524 + $0x7c] sm:$0xf] %v893
        %v1104 = vld [vmem:[%s524 + $0x80] sm:$0x1]
        %v1105 = vsel %vm527, %v894, %v1104
        %1106 = vst [vmem:[%s524 + $0x80] sm:$0x1] %v1105
        %v1107 = vld [vmem:[%s524 + $0x84] sm:$0xf]
        %v1108 = vsel %vm1029, %v901, %v1107
        %1109 = vst [vmem:[%s524 + $0x84] sm:$0xf] %v1108
        %1110 = vst [vmem:[%s524 + $0x88] sm:$0xf] %v910
        %v1111 = vld [vmem:[%s524 + $0x8c] sm:$0x1]
        %v1112 = vsel %vm527, %v911, %v1111
        %1113 = vst [vmem:[%s524 + $0x8c] sm:$0x1] %v1112
        %v1114 = vld [vmem:[%s524 + $0x90] sm:$0xf]
        %v1115 = vsel %vm1029, %v918, %v1114
        %1116 = vst [vmem:[%s524 + $0x90] sm:$0xf] %v1115
        %1117 = vst [vmem:[%s524 + $0x94] sm:$0xf] %v927
        %v1118 = vld [vmem:[%s524 + $0x98] sm:$0x1]
        %v1119 = vsel %vm527, %v928, %v1118
        %1120 = vst [vmem:[%s524 + $0x98] sm:$0x1] %v1119
        %v1121 = vld [vmem:[%s524 + $0x9c] sm:$0xf]
        %v1122 = vsel %vm1029, %v935, %v1121
        %1123 = vst [vmem:[%s524 + $0x9c] sm:$0xf] %v1122
        %1124 = vst [vmem:[%s524 + $0xa0] sm:$0xf] %v944
        %v1125 = vld [vmem:[%s524 + $0xa4] sm:$0x1]
        %v1126 = vsel %vm527, %v945, %v1125
        %1127 = vst [vmem:[%s524 + $0xa4] sm:$0x1] %v1126
        %v1128 = vld [vmem:[%s524 + $0xa8] sm:$0xf]
        %v1129 = vsel %vm1029, %v952, %v1128
        %1130 = vst [vmem:[%s524 + $0xa8] sm:$0xf] %v1129
        %1131 = vst [vmem:[%s524 + $0xac] sm:$0xf] %v961
        %v1132 = vld [vmem:[%s524 + $0xb0] sm:$0x1]
        %v1133 = vsel %vm527, %v962, %v1132
        %1134 = vst [vmem:[%s524 + $0xb0] sm:$0x1] %v1133
        %v1135 = vld [vmem:[%s524 + $0xb4] sm:$0xf]
        %v1136 = vsel %vm1029, %v969, %v1135
        %1137 = vst [vmem:[%s524 + $0xb4] sm:$0xf] %v1136
        %1138 = vst [vmem:[%s524 + $0xb8] sm:$0xf] %v978
        %v1139 = vld [vmem:[%s524 + $0xbc] sm:$0x1]
        %v1140 = vsel %vm527, %v979, %v1139
        %1141 = vst [vmem:[%s524 + $0xbc] sm:$0x1] %v1140
        %v1142 = vld [vmem:[#allocation2] sm:$0xf]
        %v1143 = vld [vmem:[#allocation2 + $0x4] sm:$0xf]
        %v1144 = vld [vmem:[#allocation2 + $0x8] sm:$0x1]
        %v1145 = vld [vmem:[#allocation2 + $0xc] sm:$0xf]
        %v1146 = vld [vmem:[#allocation2 + $0x10] sm:$0xf]
        %v1147 = vld [vmem:[#allocation2 + $0x14] sm:$0x1]
        %v1148 = vld [vmem:[#allocation2 + $0x18] sm:$0xf]
        %v1149 = vld [vmem:[#allocation2 + $0x1c] sm:$0xf]
        %v1150 = vld [vmem:[#allocation2 + $0x20] sm:$0x1]
        %v1151 = vld [vmem:[#allocation2 + $0x24] sm:$0xf]
        %v1152 = vld [vmem:[#allocation2 + $0x28] sm:$0xf]
        %v1153 = vld [vmem:[#allocation2 + $0x2c] sm:$0x1]
        %v1154 = vld [vmem:[#allocation2 + $0x30] sm:$0xf]
        %v1155 = vld [vmem:[#allocation2 + $0x34] sm:$0xf]
        %v1156 = vld [vmem:[#allocation2 + $0x38] sm:$0x1]
        %v1157 = vld [vmem:[#allocation2 + $0x3c] sm:$0xf]
        %v1158 = vld [vmem:[#allocation2 + $0x40] sm:$0xf]
        %v1159 = vld [vmem:[#allocation2 + $0x44] sm:$0x1]
        %v1160 = vld [vmem:[#allocation2 + $0x48] sm:$0xf]
        %v1161 = vld [vmem:[#allocation2 + $0x4c] sm:$0xf]
        %v1162 = vld [vmem:[#allocation2 + $0x50] sm:$0x1]
        %v1163 = vld [vmem:[#allocation2 + $0x54] sm:$0xf]
        %v1164 = vld [vmem:[#allocation2 + $0x58] sm:$0xf]
        %v1165 = vld [vmem:[#allocation2 + $0x5c] sm:$0x1]
        %v1166 = vld [vmem:[#allocation2 + $0x60] sm:$0xf]
        %v1167 = vld [vmem:[#allocation2 + $0x64] sm:$0xf]
        %v1168 = vld [vmem:[#allocation2 + $0x68] sm:$0x1]
        %v1169 = vld [vmem:[#allocation2 + $0x6c] sm:$0xf]
        %v1170 = vld [vmem:[#allocation2 + $0x70] sm:$0xf]
        %v1171 = vld [vmem:[#allocation2 + $0x74] sm:$0x1]
        %v1172 = vld [vmem:[#allocation2 + $0x78] sm:$0xf]
        %v1173 = vld [vmem:[#allocation2 + $0x7c] sm:$0xf]
        %v1174 = vld [vmem:[#allocation2 + $0x80] sm:$0x1]
        %v1175 = vld [vmem:[#allocation2 + $0x84] sm:$0xf]
        %v1176 = vld [vmem:[#allocation2 + $0x88] sm:$0xf]
        %v1177 = vld [vmem:[#allocation2 + $0x8c] sm:$0x1]
        %v1178 = vld [vmem:[#allocation2 + $0x90] sm:$0xf]
        %v1179 = vld [vmem:[#allocation2 + $0x94] sm:$0xf]
        %v1180 = vld [vmem:[#allocation2 + $0x98] sm:$0x1]
        %v1181 = vld [vmem:[#allocation2 + $0x9c] sm:$0xf]
        %v1182 = vld [vmem:[#allocation2 + $0xa0] sm:$0xf]
        %v1183 = vld [vmem:[#allocation2 + $0xa4] sm:$0x1]
        %v1184 = vld [vmem:[#allocation2 + $0xa8] sm:$0xf]
        %v1185 = vld [vmem:[#allocation2 + $0xac] sm:$0xf]
        %v1186 = vld [vmem:[#allocation2 + $0xb0] sm:$0x1]
        %v1187 = vld [vmem:[#allocation2 + $0xb4] sm:$0xf]
        %v1188 = vld [vmem:[#allocation2 + $0xb8] sm:$0xf]
        %v1189 = vld [vmem:[#allocation2 + $0xbc] sm:$0x1]
        %v1190 = vld [vmem:[#allocation2 + $0xc0] sm:$0xf]
        %v1191 = vld [vmem:[#allocation2 + $0xc4] sm:$0xf]
        %v1192 = vld [vmem:[#allocation2 + $0xc8] sm:$0x1]
        %v1193 = vld [vmem:[#allocation2 + $0xcc] sm:$0xf]
        %v1194 = vld [vmem:[#allocation2 + $0xd0] sm:$0xf]
        %v1195 = vld [vmem:[#allocation2 + $0xd4] sm:$0x1]
        %v1228 = vunpack.c.l.b16 %v1142
        %v1229 = vunpack.c.l.b16 %v1143
        %v1230 = vunpack.c.l.b16 %v1145
        %v1231 = vunpack.c.l.b16 %v1146
        %v1232 = vunpack.c.l.b16 %v1148
        %v1233 = vunpack.c.l.b16 %v1149
        %v1234 = vunpack.c.l.b16 %v1151
        %v1235 = vunpack.c.l.b16 %v1152
        %v1236 = vunpack.c.l.b16 %v1154
        %v1237 = vunpack.c.l.b16 %v1155
        %v1238 = vunpack.c.l.b16 %v1157
        %v1239 = vunpack.c.l.b16 %v1158
        %v1240 = vunpack.c.l.b16 %v1160
        %v1241 = vunpack.c.l.b16 %v1161
        %v1242 = vunpack.c.l.b16 %v1163
        %v1243 = vunpack.c.l.b16 %v1164
        %v1244 = vunpack.c.l.b16 %v1166
        %v1245 = vunpack.c.l.b16 %v1167
        %v1246 = vunpack.c.l.b16 %v1169
        %v1247 = vunpack.c.l.b16 %v1170
        %v1248 = vunpack.c.l.b16 %v1172
        %v1249 = vunpack.c.l.b16 %v1173
        %v1250 = vunpack.c.l.b16 %v1175
        %v1251 = vunpack.c.l.b16 %v1176
        %v1252 = vunpack.c.l.b16 %v1178
        %v1253 = vunpack.c.l.b16 %v1179
        %v1254 = vunpack.c.l.b16 %v1181
        %v1255 = vunpack.c.l.b16 %v1182
        %v1256 = vunpack.c.l.b16 %v1184
        %v1257 = vunpack.c.l.b16 %v1185
        %v1258 = vunpack.c.l.b16 %v1187
        %v1259 = vunpack.c.l.b16 %v1188
        %v1260 = vpack.c.b16 %v1229, %v1228
        %v1261 = vpack.c.b16 %v1231, %v1230
        %v1262 = vpack.c.b16 %v1233, %v1232
        %v1263 = vpack.c.b16 %v1235, %v1234
        %v1264 = vpack.c.b16 %v1237, %v1236
        %v1265 = vpack.c.b16 %v1239, %v1238
        %v1266 = vpack.c.b16 %v1241, %v1240
        %v1267 = vpack.c.b16 %v1243, %v1242
        %v1268 = vpack.c.b16 %v1245, %v1244
        %v1269 = vpack.c.b16 %v1247, %v1246
        %v1270 = vpack.c.b16 %v1249, %v1248
        %v1271 = vpack.c.b16 %v1251, %v1250
        %v1272 = vpack.c.b16 %v1253, %v1252
        %v1273 = vpack.c.b16 %v1255, %v1254
        %v1274 = vpack.c.b16 %v1257, %v1256
        %v1275 = vpack.c.b16 %v1259, %v1258
        %1292 = vst [vmem:[#allocation3] sm:$0xff] %v1260
        %1293 = vst [vmem:[#allocation3 + $0x48] sm:$0xff] %v1261
        %1294 = vst [vmem:[#allocation3 + $0x90] sm:$0xff] %v1262
        %1295 = vst [vmem:[#allocation3 + $0xd8] sm:$0xff] %v1263
        %1296 = vst [vmem:[#allocation3 + $0x120] sm:$0xff] %v1264
        %1297 = vst [vmem:[#allocation3 + $0x168] sm:$0xff] %v1265
        %1298 = vst [vmem:[#allocation3 + $0x1b0] sm:$0xff] %v1266
        %1299 = vst [vmem:[#allocation3 + $0x1f8] sm:$0xff] %v1267
        %1300 = vst [vmem:[#allocation3 + $0x240] sm:$0xff] %v1268
        %1301 = vst [vmem:[#allocation3 + $0x288] sm:$0xff] %v1269
        %1302 = vst [vmem:[#allocation3 + $0x2d0] sm:$0xff] %v1270
        %1303 = vst [vmem:[#allocation3 + $0x318] sm:$0xff] %v1271
        %1304 = vst [vmem:[#allocation3 + $0x360] sm:$0xff] %v1272
        %1305 = vst [vmem:[#allocation3 + $0x3a8] sm:$0xff] %v1273
        %1306 = vst [vmem:[#allocation3 + $0x3f0] sm:$0xff] %v1274
        %1307 = vst [vmem:[#allocation3 + $0x438] sm:$0xff] %v1275
        %vm1308 = vsmask.f32 3328
        %vm1309 = vsmask.f32 7440
        %vm1310 = vmor %vm1308, %vm1309
        %v1312 = vshrl.u32 %v1142, 16
        %v1314 = vrot.slane %v1312, 4
        %v1315 = vshll.u32 %v1142, 16
        %v1317 = vrot.slane %v1315, 5
        %v1318 = vor.u32 %v1314, %v1317
        %v1319 = vrot.slane %v1318, 4
        %v1321 = vshll.u32 %v1143, 16
        %v1323 = vrot.slane %v1321, 5
        %v1324 = vsel %vm1310, %v1319, %v1323
        %v1325 = vshrl.u32 %v1143, 16
        %v1327 = vrot.slane %v1325, 4
        %v1328 = vor.u32 %v1327, %v1323
        %v1329 = vrot.slane %v1328, 4
        %v1331 = vshll.u32 %v1144, 16
        %v1333 = vrot.slane %v1331, 5
        %v1334 = vsel %vm1310, %v1329, %v1333
        %v1336 = vshrl.u32 %v1145, 16
        %v1338 = vrot.slane %v1336, 4
        %v1339 = vshll.u32 %v1145, 16
        %v1341 = vrot.slane %v1339, 5
        %v1342 = vor.u32 %v1338, %v1341
        %v1343 = vrot.slane %v1342, 4
        %v1345 = vshll.u32 %v1146, 16
        %v1347 = vrot.slane %v1345, 5
        %v1348 = vsel %vm1310, %v1343, %v1347
        %v1349 = vshrl.u32 %v1146, 16
        %v1351 = vrot.slane %v1349, 4
        %v1352 = vor.u32 %v1351, %v1347
        %v1353 = vrot.slane %v1352, 4
        %v1355 = vshll.u32 %v1147, 16
        %v1357 = vrot.slane %v1355, 5
        %v1358 = vsel %vm1310, %v1353, %v1357
        %v1360 = vshrl.u32 %v1148, 16
        %v1362 = vrot.slane %v1360, 4
        %v1363 = vshll.u32 %v1148, 16
        %v1365 = vrot.slane %v1363, 5
        %v1366 = vor.u32 %v1362, %v1365
        %v1367 = vrot.slane %v1366, 4
        %v1369 = vshll.u32 %v1149, 16
        %v1371 = vrot.slane %v1369, 5
        %v1372 = vsel %vm1310, %v1367, %v1371
        %v1373 = vshrl.u32 %v1149, 16
        %v1375 = vrot.slane %v1373, 4
        %v1376 = vor.u32 %v1375, %v1371
        %v1377 = vrot.slane %v1376, 4
        %v1379 = vshll.u32 %v1150, 16
        %v1381 = vrot.slane %v1379, 5
        %v1382 = vsel %vm1310, %v1377, %v1381
        %v1384 = vshrl.u32 %v1151, 16
        %v1386 = vrot.slane %v1384, 4
        %v1387 = vshll.u32 %v1151, 16
        %v1389 = vrot.slane %v1387, 5
        %v1390 = vor.u32 %v1386, %v1389
        %v1391 = vrot.slane %v1390, 4
        %v1393 = vshll.u32 %v1152, 16
        %v1395 = vrot.slane %v1393, 5
        %v1396 = vsel %vm1310, %v1391, %v1395
        %v1397 = vshrl.u32 %v1152, 16
        %v1399 = vrot.slane %v1397, 4
        %v1400 = vor.u32 %v1399, %v1395
        %v1401 = vrot.slane %v1400, 4
        %v1403 = vshll.u32 %v1153, 16
        %v1405 = vrot.slane %v1403, 5
        %v1406 = vsel %vm1310, %v1401, %v1405
        %v1408 = vshrl.u32 %v1154, 16
        %v1410 = vrot.slane %v1408, 4
        %v1411 = vshll.u32 %v1154, 16
        %v1413 = vrot.slane %v1411, 5
        %v1414 = vor.u32 %v1410, %v1413
        %v1415 = vrot.slane %v1414, 4
        %v1417 = vshll.u32 %v1155, 16
        %v1419 = vrot.slane %v1417, 5
        %v1420 = vsel %vm1310, %v1415, %v1419
        %v1421 = vshrl.u32 %v1155, 16
        %v1423 = vrot.slane %v1421, 4
        %v1424 = vor.u32 %v1423, %v1419
        %v1425 = vrot.slane %v1424, 4
        %v1427 = vshll.u32 %v1156, 16
        %v1429 = vrot.slane %v1427, 5
        %v1430 = vsel %vm1310, %v1425, %v1429
        %v1432 = vshrl.u32 %v1157, 16
        %v1434 = vrot.slane %v1432, 4
        %v1435 = vshll.u32 %v1157, 16
        %v1437 = vrot.slane %v1435, 5
        %v1438 = vor.u32 %v1434, %v1437
        %v1439 = vrot.slane %v1438, 4
        %v1441 = vshll.u32 %v1158, 16
        %v1443 = vrot.slane %v1441, 5
        %v1444 = vsel %vm1310, %v1439, %v1443
        %v1445 = vshrl.u32 %v1158, 16
        %v1447 = vrot.slane %v1445, 4
        %v1448 = vor.u32 %v1447, %v1443
        %v1449 = vrot.slane %v1448, 4
        %v1451 = vshll.u32 %v1159, 16
        %v1453 = vrot.slane %v1451, 5
        %v1454 = vsel %vm1310, %v1449, %v1453
        %v1456 = vshrl.u32 %v1160, 16
        %v1458 = vrot.slane %v1456, 4
        %v1459 = vshll.u32 %v1160, 16
        %v1461 = vrot.slane %v1459, 5
        %v1462 = vor.u32 %v1458, %v1461
        %v1463 = vrot.slane %v1462, 4
        %v1465 = vshll.u32 %v1161, 16
        %v1467 = vrot.slane %v1465, 5
        %v1468 = vsel %vm1310, %v1463, %v1467
        %v1469 = vshrl.u32 %v1161, 16
        %v1471 = vrot.slane %v1469, 4
        %v1472 = vor.u32 %v1471, %v1467
        %v1473 = vrot.slane %v1472, 4
        %v1475 = vshll.u32 %v1162, 16
        %v1477 = vrot.slane %v1475, 5
        %v1478 = vsel %vm1310, %v1473, %v1477
        %v1480 = vshrl.u32 %v1163, 16
        %v1482 = vrot.slane %v1480, 4
        %v1483 = vshll.u32 %v1163, 16
        %v1485 = vrot.slane %v1483, 5
        %v1486 = vor.u32 %v1482, %v1485
        %v1487 = vrot.slane %v1486, 4
        %v1489 = vshll.u32 %v1164, 16
        %v1491 = vrot.slane %v1489, 5
        %v1492 = vsel %vm1310, %v1487, %v1491
        %v1493 = vshrl.u32 %v1164, 16
        %v1495 = vrot.slane %v1493, 4
        %v1496 = vor.u32 %v1495, %v1491
        %v1497 = vrot.slane %v1496, 4
        %v1499 = vshll.u32 %v1165, 16
        %v1501 = vrot.slane %v1499, 5
        %v1502 = vsel %vm1310, %v1497, %v1501
        %v1504 = vshrl.u32 %v1166, 16
        %v1506 = vrot.slane %v1504, 4
        %v1507 = vshll.u32 %v1166, 16
        %v1509 = vrot.slane %v1507, 5
        %v1510 = vor.u32 %v1506, %v1509
        %v1511 = vrot.slane %v1510, 4
        %v1513 = vshll.u32 %v1167, 16
        %v1515 = vrot.slane %v1513, 5
        %v1516 = vsel %vm1310, %v1511, %v1515
        %v1517 = vshrl.u32 %v1167, 16
        %v1519 = vrot.slane %v1517, 4
        %v1520 = vor.u32 %v1519, %v1515
        %v1521 = vrot.slane %v1520, 4
        %v1523 = vshll.u32 %v1168, 16
        %v1525 = vrot.slane %v1523, 5
        %v1526 = vsel %vm1310, %v1521, %v1525
        %v1528 = vshrl.u32 %v1169, 16
        %v1530 = vrot.slane %v1528, 4
        %v1531 = vshll.u32 %v1169, 16
        %v1533 = vrot.slane %v1531, 5
        %v1534 = vor.u32 %v1530, %v1533
        %v1535 = vrot.slane %v1534, 4
        %v1537 = vshll.u32 %v1170, 16
        %v1539 = vrot.slane %v1537, 5
        %v1540 = vsel %vm1310, %v1535, %v1539
        %v1541 = vshrl.u32 %v1170, 16
        %v1543 = vrot.slane %v1541, 4
        %v1544 = vor.u32 %v1543, %v1539
        %v1545 = vrot.slane %v1544, 4
        %v1547 = vshll.u32 %v1171, 16
        %v1549 = vrot.slane %v1547, 5
        %v1550 = vsel %vm1310, %v1545, %v1549
        %v1552 = vshrl.u32 %v1172, 16
        %v1554 = vrot.slane %v1552, 4
        %v1555 = vshll.u32 %v1172, 16
        %v1557 = vrot.slane %v1555, 5
        %v1558 = vor.u32 %v1554, %v1557
        %v1559 = vrot.slane %v1558, 4
        %v1561 = vshll.u32 %v1173, 16
        %v1563 = vrot.slane %v1561, 5
        %v1564 = vsel %vm1310, %v1559, %v1563
        %v1565 = vshrl.u32 %v1173, 16
        %v1567 = vrot.slane %v1565, 4
        %v1568 = vor.u32 %v1567, %v1563
        %v1569 = vrot.slane %v1568, 4
        %v1571 = vshll.u32 %v1174, 16
        %v1573 = vrot.slane %v1571, 5
        %v1574 = vsel %vm1310, %v1569, %v1573
        %v1576 = vshrl.u32 %v1175, 16
        %v1578 = vrot.slane %v1576, 4
        %v1579 = vshll.u32 %v1175, 16
        %v1581 = vrot.slane %v1579, 5
        %v1582 = vor.u32 %v1578, %v1581
        %v1583 = vrot.slane %v1582, 4
        %v1585 = vshll.u32 %v1176, 16
        %v1587 = vrot.slane %v1585, 5
        %v1588 = vsel %vm1310, %v1583, %v1587
        %v1589 = vshrl.u32 %v1176, 16
        %v1591 = vrot.slane %v1589, 4
        %v1592 = vor.u32 %v1591, %v1587
        %v1593 = vrot.slane %v1592, 4
        %v1595 = vshll.u32 %v1177, 16
        %v1597 = vrot.slane %v1595, 5
        %v1598 = vsel %vm1310, %v1593, %v1597
        %v1600 = vshrl.u32 %v1178, 16
        %v1602 = vrot.slane %v1600, 4
        %v1603 = vshll.u32 %v1178, 16
        %v1605 = vrot.slane %v1603, 5
        %v1606 = vor.u32 %v1602, %v1605
        %v1607 = vrot.slane %v1606, 4
        %v1609 = vshll.u32 %v1179, 16
        %v1611 = vrot.slane %v1609, 5
        %v1612 = vsel %vm1310, %v1607, %v1611
        %v1613 = vshrl.u32 %v1179, 16
        %v1615 = vrot.slane %v1613, 4
        %v1616 = vor.u32 %v1615, %v1611
        %v1617 = vrot.slane %v1616, 4
        %v1619 = vshll.u32 %v1180, 16
        %v1621 = vrot.slane %v1619, 5
        %v1622 = vsel %vm1310, %v1617, %v1621
        %v1624 = vshrl.u32 %v1181, 16
        %v1626 = vrot.slane %v1624, 4
        %v1627 = vshll.u32 %v1181, 16
        %v1629 = vrot.slane %v1627, 5
        %v1630 = vor.u32 %v1626, %v1629
        %v1631 = vrot.slane %v1630, 4
        %v1633 = vshll.u32 %v1182, 16
        %v1635 = vrot.slane %v1633, 5
        %v1636 = vsel %vm1310, %v1631, %v1635
        %v1637 = vshrl.u32 %v1182, 16
        %v1639 = vrot.slane %v1637, 4
        %v1640 = vor.u32 %v1639, %v1635
        %v1641 = vrot.slane %v1640, 4
        %v1643 = vshll.u32 %v1183, 16
        %v1645 = vrot.slane %v1643, 5
        %v1646 = vsel %vm1310, %v1641, %v1645
        %v1648 = vshrl.u32 %v1184, 16
        %v1650 = vrot.slane %v1648, 4
        %v1651 = vshll.u32 %v1184, 16
        %v1653 = vrot.slane %v1651, 5
        %v1654 = vor.u32 %v1650, %v1653
        %v1655 = vrot.slane %v1654, 4
        %v1657 = vshll.u32 %v1185, 16
        %v1659 = vrot.slane %v1657, 5
        %v1660 = vsel %vm1310, %v1655, %v1659
        %v1661 = vshrl.u32 %v1185, 16
        %v1663 = vrot.slane %v1661, 4
        %v1664 = vor.u32 %v1663, %v1659
        %v1665 = vrot.slane %v1664, 4
        %v1667 = vshll.u32 %v1186, 16
        %v1669 = vrot.slane %v1667, 5
        %v1670 = vsel %vm1310, %v1665, %v1669
        %v1672 = vshrl.u32 %v1187, 16
        %v1674 = vrot.slane %v1672, 4
        %v1675 = vshll.u32 %v1187, 16
        %v1677 = vrot.slane %v1675, 5
        %v1678 = vor.u32 %v1674, %v1677
        %v1679 = vrot.slane %v1678, 4
        %v1681 = vshll.u32 %v1188, 16
        %v1683 = vrot.slane %v1681, 5
        %v1684 = vsel %vm1310, %v1679, %v1683
        %v1685 = vshrl.u32 %v1188, 16
        %v1687 = vrot.slane %v1685, 4
        %v1688 = vor.u32 %v1687, %v1683
        %v1689 = vrot.slane %v1688, 4
        %v1691 = vshll.u32 %v1189, 16
        %v1693 = vrot.slane %v1691, 5
        %v1694 = vsel %vm1310, %v1689, %v1693
        %v1695 = vunpack.c.l.b16 %v1324
        %v1696 = vunpack.c.l.b16 %v1334
        %v1697 = vunpack.c.l.b16 %v1348
        %v1698 = vunpack.c.l.b16 %v1358
        %v1699 = vunpack.c.l.b16 %v1372
        %v1700 = vunpack.c.l.b16 %v1382
        %v1701 = vunpack.c.l.b16 %v1396
        %v1702 = vunpack.c.l.b16 %v1406
        %v1703 = vunpack.c.l.b16 %v1420
        %v1704 = vunpack.c.l.b16 %v1430
        %v1705 = vunpack.c.l.b16 %v1444
        %v1706 = vunpack.c.l.b16 %v1454
        %v1707 = vunpack.c.l.b16 %v1468
        %v1708 = vunpack.c.l.b16 %v1478
        %v1709 = vunpack.c.l.b16 %v1492
        %v1710 = vunpack.c.l.b16 %v1502
        %v1711 = vunpack.c.l.b16 %v1516
        %v1712 = vunpack.c.l.b16 %v1526
        %v1713 = vunpack.c.l.b16 %v1540
        %v1714 = vunpack.c.l.b16 %v1550
        %v1715 = vunpack.c.l.b16 %v1564
        %v1716 = vunpack.c.l.b16 %v1574
        %v1717 = vunpack.c.l.b16 %v1588
        %v1718 = vunpack.c.l.b16 %v1598
        %v1719 = vunpack.c.l.b16 %v1612
        %v1720 = vunpack.c.l.b16 %v1622
        %v1721 = vunpack.c.l.b16 %v1636
        %v1722 = vunpack.c.l.b16 %v1646
        %v1723 = vunpack.c.l.b16 %v1660
        %v1724 = vunpack.c.l.b16 %v1670
        %v1725 = vunpack.c.l.b16 %v1684
        %v1726 = vunpack.c.l.b16 %v1694
        %v1727 = vpack.c.b16 %v1696, %v1695
        %v1728 = vpack.c.b16 %v1698, %v1697
        %v1729 = vpack.c.b16 %v1700, %v1699
        %v1730 = vpack.c.b16 %v1702, %v1701
        %v1731 = vpack.c.b16 %v1704, %v1703
        %v1732 = vpack.c.b16 %v1706, %v1705
        %v1733 = vpack.c.b16 %v1708, %v1707
        %v1734 = vpack.c.b16 %v1710, %v1709
        %v1735 = vpack.c.b16 %v1712, %v1711
        %v1736 = vpack.c.b16 %v1714, %v1713
        %v1737 = vpack.c.b16 %v1716, %v1715
        %v1738 = vpack.c.b16 %v1718, %v1717
        %v1739 = vpack.c.b16 %v1720, %v1719
        %v1740 = vpack.c.b16 %v1722, %v1721
        %v1741 = vpack.c.b16 %v1724, %v1723
        %v1742 = vpack.c.b16 %v1726, %v1725
        %1759 = vst [vmem:[#allocation3 + $0x8] sm:$0xff] %v1727
        %1760 = vst [vmem:[#allocation3 + $0x50] sm:$0xff] %v1728
        %1761 = vst [vmem:[#allocation3 + $0x98] sm:$0xff] %v1729
        %1762 = vst [vmem:[#allocation3 + $0xe0] sm:$0xff] %v1730
        %1763 = vst [vmem:[#allocation3 + $0x128] sm:$0xff] %v1731
        %1764 = vst [vmem:[#allocation3 + $0x170] sm:$0xff] %v1732
        %1765 = vst [vmem:[#allocation3 + $0x1b8] sm:$0xff] %v1733
        %1766 = vst [vmem:[#allocation3 + $0x200] sm:$0xff] %v1734
        %1767 = vst [vmem:[#allocation3 + $0x248] sm:$0xff] %v1735
        %1768 = vst [vmem:[#allocation3 + $0x290] sm:$0xff] %v1736
        %1769 = vst [vmem:[#allocation3 + $0x2d8] sm:$0xff] %v1737
        %1770 = vst [vmem:[#allocation3 + $0x320] sm:$0xff] %v1738
        %1771 = vst [vmem:[#allocation3 + $0x368] sm:$0xff] %v1739
        %1772 = vst [vmem:[#allocation3 + $0x3b0] sm:$0xff] %v1740
        %1773 = vst [vmem:[#allocation3 + $0x3f8] sm:$0xff] %v1741
        %1774 = vst [vmem:[#allocation3 + $0x440] sm:$0xff] %v1742
        %vm1791 = vcmask 1042432
        %vm1792 = vcmask 1046532
        %vm1793 = vmor %vm1791, %vm1792
        %v1794 = vrot.slane %v1142, 5
        %v1795 = vrot.slane %v1794, 4
        %v1796 = vrot.slane %v1143, 5
        %v1797 = vsel %vm1793, %v1795, %v1796
        %v1798 = vrot.slane %v1796, 4
        %v1799 = vrot.slane %v1144, 5
        %v1800 = vsel %vm1793, %v1798, %v1799
        %v1801 = vrot.slane %v1145, 5
        %v1802 = vrot.slane %v1801, 4
        %v1803 = vrot.slane %v1146, 5
        %v1804 = vsel %vm1793, %v1802, %v1803
        %v1805 = vrot.slane %v1803, 4
        %v1806 = vrot.slane %v1147, 5
        %v1807 = vsel %vm1793, %v1805, %v1806
        %v1808 = vrot.slane %v1148, 5
        %v1809 = vrot.slane %v1808, 4
        %v1810 = vrot.slane %v1149, 5
        %v1811 = vsel %vm1793, %v1809, %v1810
        %v1812 = vrot.slane %v1810, 4
        %v1813 = vrot.slane %v1150, 5
        %v1814 = vsel %vm1793, %v1812, %v1813
        %v1815 = vrot.slane %v1151, 5
        %v1816 = vrot.slane %v1815, 4
        %v1817 = vrot.slane %v1152, 5
        %v1818 = vsel %vm1793, %v1816, %v1817
        %v1819 = vrot.slane %v1817, 4
        %v1820 = vrot.slane %v1153, 5
        %v1821 = vsel %vm1793, %v1819, %v1820
        %v1822 = vrot.slane %v1154, 5
        %v1823 = vrot.slane %v1822, 4
        %v1824 = vrot.slane %v1155, 5
        %v1825 = vsel %vm1793, %v1823, %v1824
        %v1826 = vrot.slane %v1824, 4
        %v1827 = vrot.slane %v1156, 5
        %v1828 = vsel %vm1793, %v1826, %v1827
        %v1829 = vrot.slane %v1157, 5
        %v1830 = vrot.slane %v1829, 4
        %v1831 = vrot.slane %v1158, 5
        %v1832 = vsel %vm1793, %v1830, %v1831
        %v1833 = vrot.slane %v1831, 4
        %v1834 = vrot.slane %v1159, 5
        %v1835 = vsel %vm1793, %v1833, %v1834
        %v1836 = vrot.slane %v1160, 5
        %v1837 = vrot.slane %v1836, 4
        %v1838 = vrot.slane %v1161, 5
        %v1839 = vsel %vm1793, %v1837, %v1838
        %v1840 = vrot.slane %v1838, 4
        %v1841 = vrot.slane %v1162, 5
        %v1842 = vsel %vm1793, %v1840, %v1841
        %v1843 = vrot.slane %v1163, 5
        %v1844 = vrot.slane %v1843, 4
        %v1845 = vrot.slane %v1164, 5
        %v1846 = vsel %vm1793, %v1844, %v1845
        %v1847 = vrot.slane %v1845, 4
        %v1848 = vrot.slane %v1165, 5
        %v1849 = vsel %vm1793, %v1847, %v1848
        %v1850 = vrot.slane %v1166, 5
        %v1851 = vrot.slane %v1850, 4
        %v1852 = vrot.slane %v1167, 5
        %v1853 = vsel %vm1793, %v1851, %v1852
        %v1854 = vrot.slane %v1852, 4
        %v1855 = vrot.slane %v1168, 5
        %v1856 = vsel %vm1793, %v1854, %v1855
        %v1857 = vrot.slane %v1169, 5
        %v1858 = vrot.slane %v1857, 4
        %v1859 = vrot.slane %v1170, 5
        %v1860 = vsel %vm1793, %v1858, %v1859
        %v1861 = vrot.slane %v1859, 4
        %v1862 = vrot.slane %v1171, 5
        %v1863 = vsel %vm1793, %v1861, %v1862
        %v1864 = vrot.slane %v1172, 5
        %v1865 = vrot.slane %v1864, 4
        %v1866 = vrot.slane %v1173, 5
        %v1867 = vsel %vm1793, %v1865, %v1866
        %v1868 = vrot.slane %v1866, 4
        %v1869 = vrot.slane %v1174, 5
        %v1870 = vsel %vm1793, %v1868, %v1869
        %v1871 = vrot.slane %v1175, 5
        %v1872 = vrot.slane %v1871, 4
        %v1873 = vrot.slane %v1176, 5
        %v1874 = vsel %vm1793, %v1872, %v1873
        %v1875 = vrot.slane %v1873, 4
        %v1876 = vrot.slane %v1177, 5
        %v1877 = vsel %vm1793, %v1875, %v1876
        %v1878 = vrot.slane %v1178, 5
        %v1879 = vrot.slane %v1878, 4
        %v1880 = vrot.slane %v1179, 5
        %v1881 = vsel %vm1793, %v1879, %v1880
        %v1882 = vrot.slane %v1880, 4
        %v1883 = vrot.slane %v1180, 5
        %v1884 = vsel %vm1793, %v1882, %v1883
        %v1885 = vrot.slane %v1181, 5
        %v1886 = vrot.slane %v1885, 4
        %v1887 = vrot.slane %v1182, 5
        %v1888 = vsel %vm1793, %v1886, %v1887
        %v1889 = vrot.slane %v1887, 4
        %v1890 = vrot.slane %v1183, 5
        %v1891 = vsel %vm1793, %v1889, %v1890
        %v1892 = vrot.slane %v1184, 5
        %v1893 = vrot.slane %v1892, 4
        %v1894 = vrot.slane %v1185, 5
        %v1895 = vsel %vm1793, %v1893, %v1894
        %v1896 = vrot.slane %v1894, 4
        %v1897 = vrot.slane %v1186, 5
        %v1898 = vsel %vm1793, %v1896, %v1897
        %v1899 = vrot.slane %v1187, 5
        %v1900 = vrot.slane %v1899, 4
        %v1901 = vrot.slane %v1188, 5
        %v1902 = vsel %vm1793, %v1900, %v1901
        %v1903 = vrot.slane %v1901, 4
        %v1904 = vrot.slane %v1189, 5
        %v1905 = vsel %vm1793, %v1903, %v1904
        %v1906 = vunpack.c.l.b16 %v1797
        %v1907 = vunpack.c.l.b16 %v1800
        %v1908 = vunpack.c.l.b16 %v1804
        %v1909 = vunpack.c.l.b16 %v1807
        %v1910 = vunpack.c.l.b16 %v1811
        %v1911 = vunpack.c.l.b16 %v1814
        %v1912 = vunpack.c.l.b16 %v1818
        %v1913 = vunpack.c.l.b16 %v1821
        %v1914 = vunpack.c.l.b16 %v1825
        %v1915 = vunpack.c.l.b16 %v1828
        %v1916 = vunpack.c.l.b16 %v1832
        %v1917 = vunpack.c.l.b16 %v1835
        %v1918 = vunpack.c.l.b16 %v1839
        %v1919 = vunpack.c.l.b16 %v1842
        %v1920 = vunpack.c.l.b16 %v1846
        %v1921 = vunpack.c.l.b16 %v1849
        %v1922 = vunpack.c.l.b16 %v1853
        %v1923 = vunpack.c.l.b16 %v1856
        %v1924 = vunpack.c.l.b16 %v1860
        %v1925 = vunpack.c.l.b16 %v1863
        %v1926 = vunpack.c.l.b16 %v1867
        %v1927 = vunpack.c.l.b16 %v1870
        %v1928 = vunpack.c.l.b16 %v1874
        %v1929 = vunpack.c.l.b16 %v1877
        %v1930 = vunpack.c.l.b16 %v1881
        %v1931 = vunpack.c.l.b16 %v1884
        %v1932 = vunpack.c.l.b16 %v1888
        %v1933 = vunpack.c.l.b16 %v1891
        %v1934 = vunpack.c.l.b16 %v1895
        %v1935 = vunpack.c.l.b16 %v1898
        %v1936 = vunpack.c.l.b16 %v1902
        %v1937 = vunpack.c.l.b16 %v1905
        %v1938 = vpack.c.b16 %v1907, %v1906
        %v1939 = vpack.c.b16 %v1909, %v1908
        %v1940 = vpack.c.b16 %v1911, %v1910
        %v1941 = vpack.c.b16 %v1913, %v1912
        %v1942 = vpack.c.b16 %v1915, %v1914
        %v1943 = vpack.c.b16 %v1917, %v1916
        %v1944 = vpack.c.b16 %v1919, %v1918
        %v1945 = vpack.c.b16 %v1921, %v1920
        %v1946 = vpack.c.b16 %v1923, %v1922
        %v1947 = vpack.c.b16 %v1925, %v1924
        %v1948 = vpack.c.b16 %v1927, %v1926
        %v1949 = vpack.c.b16 %v1929, %v1928
        %v1950 = vpack.c.b16 %v1931, %v1930
        %v1951 = vpack.c.b16 %v1933, %v1932
        %v1952 = vpack.c.b16 %v1935, %v1934
        %v1953 = vpack.c.b16 %v1937, %v1936
        %1970 = vst [vmem:[#allocation3 + $0x10] sm:$0xff] %v1938
        %1971 = vst [vmem:[#allocation3 + $0x58] sm:$0xff] %v1939
        %1972 = vst [vmem:[#allocation3 + $0xa0] sm:$0xff] %v1940
        %1973 = vst [vmem:[#allocation3 + $0xe8] sm:$0xff] %v1941
        %1974 = vst [vmem:[#allocation3 + $0x130] sm:$0xff] %v1942
        %1975 = vst [vmem:[#allocation3 + $0x178] sm:$0xff] %v1943
        %1976 = vst [vmem:[#allocation3 + $0x1c0] sm:$0xff] %v1944
        %1977 = vst [vmem:[#allocation3 + $0x208] sm:$0xff] %v1945
        %1978 = vst [vmem:[#allocation3 + $0x250] sm:$0xff] %v1946
        %1979 = vst [vmem:[#allocation3 + $0x298] sm:$0xff] %v1947
        %1980 = vst [vmem:[#allocation3 + $0x2e0] sm:$0xff] %v1948
        %1981 = vst [vmem:[#allocation3 + $0x328] sm:$0xff] %v1949
        %1982 = vst [vmem:[#allocation3 + $0x370] sm:$0xff] %v1950
        %1983 = vst [vmem:[#allocation3 + $0x3b8] sm:$0xff] %v1951
        %1984 = vst [vmem:[#allocation3 + $0x400] sm:$0xff] %v1952
        %1985 = vst [vmem:[#allocation3 + $0x448] sm:$0xff] %v1953
        %v1988 = vunpack.c.l.b16 %v1190
        %v1989 = vunpack.c.l.b16 %v1191
        %v1990 = vpack.c.b16 %v1989, %v1988
        %1992 = vst [vmem:[#allocation3 + $0x18] sm:$0xff] %v1261
        %1993 = vst [vmem:[#allocation3 + $0x60] sm:$0xff] %v1262
        %1994 = vst [vmem:[#allocation3 + $0xa8] sm:$0xff] %v1263
        %1995 = vst [vmem:[#allocation3 + $0xf0] sm:$0xff] %v1264
        %1996 = vst [vmem:[#allocation3 + $0x138] sm:$0xff] %v1265
        %1997 = vst [vmem:[#allocation3 + $0x180] sm:$0xff] %v1266
        %1998 = vst [vmem:[#allocation3 + $0x1c8] sm:$0xff] %v1267
        %1999 = vst [vmem:[#allocation3 + $0x210] sm:$0xff] %v1268
        %2000 = vst [vmem:[#allocation3 + $0x258] sm:$0xff] %v1269
        %2001 = vst [vmem:[#allocation3 + $0x2a0] sm:$0xff] %v1270
        %2002 = vst [vmem:[#allocation3 + $0x2e8] sm:$0xff] %v1271
        %2003 = vst [vmem:[#allocation3 + $0x330] sm:$0xff] %v1272
        %2004 = vst [vmem:[#allocation3 + $0x378] sm:$0xff] %v1273
        %2005 = vst [vmem:[#allocation3 + $0x3c0] sm:$0xff] %v1274
        %2006 = vst [vmem:[#allocation3 + $0x408] sm:$0xff] %v1275
        %2007 = vst [vmem:[#allocation3 + $0x450] sm:$0xff] %v1990
        %v2009 = vshrl.u32 %v1190, 16
        %v2011 = vrot.slane %v2009, 4
        %v2012 = vshll.u32 %v1190, 16
        %v2014 = vrot.slane %v2012, 5
        %v2015 = vor.u32 %v2011, %v2014
        %v2016 = vrot.slane %v2015, 4
        %v2018 = vshll.u32 %v1191, 16
        %v2020 = vrot.slane %v2018, 5
        %v2021 = vsel %vm1310, %v2016, %v2020
        %v2022 = vshrl.u32 %v1191, 16
        %v2024 = vrot.slane %v2022, 4
        %v2025 = vor.u32 %v2024, %v2020
        %v2026 = vrot.slane %v2025, 4
        %v2028 = vshll.u32 %v1192, 16
        %v2030 = vrot.slane %v2028, 5
        %v2031 = vsel %vm1310, %v2026, %v2030
        %v2032 = vunpack.c.l.b16 %v2021
        %v2033 = vunpack.c.l.b16 %v2031
        %v2034 = vpack.c.b16 %v2033, %v2032
        %2036 = vst [vmem:[#allocation3 + $0x20] sm:$0xff] %v1728
        %2037 = vst [vmem:[#allocation3 + $0x68] sm:$0xff] %v1729
        %2038 = vst [vmem:[#allocation3 + $0xb0] sm:$0xff] %v1730
        %2039 = vst [vmem:[#allocation3 + $0xf8] sm:$0xff] %v1731
        %2040 = vst [vmem:[#allocation3 + $0x140] sm:$0xff] %v1732
        %2041 = vst [vmem:[#allocation3 + $0x188] sm:$0xff] %v1733
        %2042 = vst [vmem:[#allocation3 + $0x1d0] sm:$0xff] %v1734
        %2043 = vst [vmem:[#allocation3 + $0x218] sm:$0xff] %v1735
        %2044 = vst [vmem:[#allocation3 + $0x260] sm:$0xff] %v1736
        %2045 = vst [vmem:[#allocation3 + $0x2a8] sm:$0xff] %v1737
        %2046 = vst [vmem:[#allocation3 + $0x2f0] sm:$0xff] %v1738
        %2047 = vst [vmem:[#allocation3 + $0x338] sm:$0xff] %v1739
        %2048 = vst [vmem:[#allocation3 + $0x380] sm:$0xff] %v1740
        %2049 = vst [vmem:[#allocation3 + $0x3c8] sm:$0xff] %v1741
        %2050 = vst [vmem:[#allocation3 + $0x410] sm:$0xff] %v1742
        %2051 = vst [vmem:[#allocation3 + $0x458] sm:$0xff] %v2034
        %v2053 = vrot.slane %v1190, 5
        %v2054 = vrot.slane %v2053, 4
        %v2055 = vrot.slane %v1191, 5
        %v2056 = vsel %vm1793, %v2054, %v2055
        %v2057 = vrot.slane %v2055, 4
        %v2058 = vrot.slane %v1192, 5
        %v2059 = vsel %vm1793, %v2057, %v2058
        %v2060 = vunpack.c.l.b16 %v2056
        %v2061 = vunpack.c.l.b16 %v2059
        %v2062 = vpack.c.b16 %v2061, %v2060
        %2064 = vst [vmem:[#allocation3 + $0x28] sm:$0xff] %v1939
        %2065 = vst [vmem:[#allocation3 + $0x70] sm:$0xff] %v1940
        %2066 = vst [vmem:[#allocation3 + $0xb8] sm:$0xff] %v1941
        %2067 = vst [vmem:[#allocation3 + $0x100] sm:$0xff] %v1942
        %2068 = vst [vmem:[#allocation3 + $0x148] sm:$0xff] %v1943
        %2069 = vst [vmem:[#allocation3 + $0x190] sm:$0xff] %v1944
        %2070 = vst [vmem:[#allocation3 + $0x1d8] sm:$0xff] %v1945
        %2071 = vst [vmem:[#allocation3 + $0x220] sm:$0xff] %v1946
        %2072 = vst [vmem:[#allocation3 + $0x268] sm:$0xff] %v1947
        %2073 = vst [vmem:[#allocation3 + $0x2b0] sm:$0xff] %v1948
        %2074 = vst [vmem:[#allocation3 + $0x2f8] sm:$0xff] %v1949
        %2075 = vst [vmem:[#allocation3 + $0x340] sm:$0xff] %v1950
        %2076 = vst [vmem:[#allocation3 + $0x388] sm:$0xff] %v1951
        %2077 = vst [vmem:[#allocation3 + $0x3d0] sm:$0xff] %v1952
        %2078 = vst [vmem:[#allocation3 + $0x418] sm:$0xff] %v1953
        %2079 = vst [vmem:[#allocation3 + $0x460] sm:$0xff] %v2062
        %v2082 = vunpack.c.l.b16 %v1193
        %v2083 = vunpack.c.l.b16 %v1194
        %v2084 = vpack.c.b16 %v2083, %v2082
        %2086 = vst [vmem:[#allocation3 + $0x30] sm:$0xff] %v1262
        %2087 = vst [vmem:[#allocation3 + $0x78] sm:$0xff] %v1263
        %2088 = vst [vmem:[#allocation3 + $0xc0] sm:$0xff] %v1264
        %2089 = vst [vmem:[#allocation3 + $0x108] sm:$0xff] %v1265
        %2090 = vst [vmem:[#allocation3 + $0x150] sm:$0xff] %v1266
        %2091 = vst [vmem:[#allocation3 + $0x198] sm:$0xff] %v1267
        %2092 = vst [vmem:[#allocation3 + $0x1e0] sm:$0xff] %v1268
        %2093 = vst [vmem:[#allocation3 + $0x228] sm:$0xff] %v1269
        %2094 = vst [vmem:[#allocation3 + $0x270] sm:$0xff] %v1270
        %2095 = vst [vmem:[#allocation3 + $0x2b8] sm:$0xff] %v1271
        %2096 = vst [vmem:[#allocation3 + $0x300] sm:$0xff] %v1272
        %2097 = vst [vmem:[#allocation3 + $0x348] sm:$0xff] %v1273
        %2098 = vst [vmem:[#allocation3 + $0x390] sm:$0xff] %v1274
        %2099 = vst [vmem:[#allocation3 + $0x3d8] sm:$0xff] %v1275
        %2100 = vst [vmem:[#allocation3 + $0x420] sm:$0xff] %v1990
        %2101 = vst [vmem:[#allocation3 + $0x468] sm:$0xff] %v2084
        %v2103 = vshrl.u32 %v1193, 16
        %v2105 = vrot.slane %v2103, 4
        %v2106 = vshll.u32 %v1193, 16
        %v2108 = vrot.slane %v2106, 5
        %v2109 = vor.u32 %v2105, %v2108
        %v2110 = vrot.slane %v2109, 4
        %v2112 = vshll.u32 %v1194, 16
        %v2114 = vrot.slane %v2112, 5
        %v2115 = vsel %vm1310, %v2110, %v2114
        %v2116 = vshrl.u32 %v1194, 16
        %v2118 = vrot.slane %v2116, 4
        %v2119 = vor.u32 %v2118, %v2114
        %v2120 = vrot.slane %v2119, 4
        %v2122 = vshll.u32 %v1195, 16
        %v2124 = vrot.slane %v2122, 5
        %v2125 = vsel %vm1310, %v2120, %v2124
        %v2126 = vunpack.c.l.b16 %v2115
        %v2127 = vunpack.c.l.b16 %v2125
        %v2128 = vpack.c.b16 %v2127, %v2126
        %2130 = vst [vmem:[#allocation3 + $0x38] sm:$0xff] %v1729
        %2131 = vst [vmem:[#allocation3 + $0x80] sm:$0xff] %v1730
        %2132 = vst [vmem:[#allocation3 + $0xc8] sm:$0xff] %v1731
        %2133 = vst [vmem:[#allocation3 + $0x110] sm:$0xff] %v1732
        %2134 = vst [vmem:[#allocation3 + $0x158] sm:$0xff] %v1733
        %2135 = vst [vmem:[#allocation3 + $0x1a0] sm:$0xff] %v1734
        %2136 = vst [vmem:[#allocation3 + $0x1e8] sm:$0xff] %v1735
        %2137 = vst [vmem:[#allocation3 + $0x230] sm:$0xff] %v1736
        %2138 = vst [vmem:[#allocation3 + $0x278] sm:$0xff] %v1737
        %2139 = vst [vmem:[#allocation3 + $0x2c0] sm:$0xff] %v1738
        %2140 = vst [vmem:[#allocation3 + $0x308] sm:$0xff] %v1739
        %2141 = vst [vmem:[#allocation3 + $0x350] sm:$0xff] %v1740
        %2142 = vst [vmem:[#allocation3 + $0x398] sm:$0xff] %v1741
        %2143 = vst [vmem:[#allocation3 + $0x3e0] sm:$0xff] %v1742
        %2144 = vst [vmem:[#allocation3 + $0x428] sm:$0xff] %v2034
        %2145 = vst [vmem:[#allocation3 + $0x470] sm:$0xff] %v2128
        %v2147 = vrot.slane %v1193, 5
        %v2148 = vrot.slane %v2147, 4
        %v2149 = vrot.slane %v1194, 5
        %v2150 = vsel %vm1793, %v2148, %v2149
        %v2151 = vrot.slane %v2149, 4
        %v2152 = vrot.slane %v1195, 5
        %v2153 = vsel %vm1793, %v2151, %v2152
        %v2154 = vunpack.c.l.b16 %v2150
        %v2155 = vunpack.c.l.b16 %v2153
        %v2156 = vpack.c.b16 %v2155, %v2154
        %2158 = vst [vmem:[#allocation3 + $0x40] sm:$0xff] %v1940
        %2159 = vst [vmem:[#allocation3 + $0x88] sm:$0xff] %v1941
        %2160 = vst [vmem:[#allocation3 + $0xd0] sm:$0xff] %v1942
        %2161 = vst [vmem:[#allocation3 + $0x118] sm:$0xff] %v1943
        %2162 = vst [vmem:[#allocation3 + $0x160] sm:$0xff] %v1944
        %2163 = vst [vmem:[#allocation3 + $0x1a8] sm:$0xff] %v1945
        %2164 = vst [vmem:[#allocation3 + $0x1f0] sm:$0xff] %v1946
        %2165 = vst [vmem:[#allocation3 + $0x238] sm:$0xff] %v1947
        %2166 = vst [vmem:[#allocation3 + $0x280] sm:$0xff] %v1948
        %2167 = vst [vmem:[#allocation3 + $0x2c8] sm:$0xff] %v1949
        %2168 = vst [vmem:[#allocation3 + $0x310] sm:$0xff] %v1950
        %2169 = vst [vmem:[#allocation3 + $0x358] sm:$0xff] %v1951
        %2170 = vst [vmem:[#allocation3 + $0x3a0] sm:$0xff] %v1952
        %2171 = vst [vmem:[#allocation3 + $0x3e8] sm:$0xff] %v1953
        %2172 = vst [vmem:[#allocation3 + $0x430] sm:$0xff] %v2062
        %2173 = vst [vmem:[#allocation3 + $0x478] sm:$0xff] %v2156
        %v2174 = vld [vmem:[#allocation3] sm:$0xff]
        %v2175 = vld [vmem:[#allocation3 + $0x8] sm:$0xff]
        %v2176 = vld [vmem:[#allocation3 + $0x10] sm:$0xff]
        %v2177 = vld [vmem:[#allocation3 + $0x18] sm:$0xff]
        %v2178 = vld [vmem:[#allocation3 + $0x20] sm:$0xff]
        %v2179 = vld [vmem:[#allocation3 + $0x28] sm:$0xff]
        %v2180 = vld [vmem:[#allocation3 + $0x30] sm:$0xff]
        %v2181 = vld [vmem:[#allocation3 + $0x38] sm:$0xff]
        %v2182 = vld [vmem:[#allocation3 + $0x40] sm:$0xff]
        %v2183 = vld [vmem:[#allocation3 + $0x48] sm:$0xff]
        %v2184 = vld [vmem:[#allocation3 + $0x50] sm:$0xff]
        %v2185 = vld [vmem:[#allocation3 + $0x58] sm:$0xff]
        %v2186 = vld [vmem:[#allocation3 + $0x60] sm:$0xff]
        %v2187 = vld [vmem:[#allocation3 + $0x68] sm:$0xff]
        %v2188 = vld [vmem:[#allocation3 + $0x70] sm:$0xff]
        %v2189 = vld [vmem:[#allocation3 + $0x78] sm:$0xff]
        %v2190 = vld [vmem:[#allocation3 + $0x80] sm:$0xff]
        %v2191 = vld [vmem:[#allocation3 + $0x88] sm:$0xff]
        %v2192 = vld [vmem:[#allocation3 + $0x90] sm:$0xff]
        %v2193 = vld [vmem:[#allocation3 + $0x98] sm:$0xff]
        %v2194 = vld [vmem:[#allocation3 + $0xa0] sm:$0xff]
        %v2195 = vld [vmem:[#allocation3 + $0xa8] sm:$0xff]
        %v2196 = vld [vmem:[#allocation3 + $0xb0] sm:$0xff]
        %v2197 = vld [vmem:[#allocation3 + $0xb8] sm:$0xff]
        %v2198 = vld [vmem:[#allocation3 + $0xc0] sm:$0xff]
        %v2199 = vld [vmem:[#allocation3 + $0xc8] sm:$0xff]
        %v2200 = vld [vmem:[#allocation3 + $0xd0] sm:$0xff]
        %v2201 = vld [vmem:[#allocation3 + $0xd8] sm:$0xff]
        %v2202 = vld [vmem:[#allocation3 + $0xe0] sm:$0xff]
        %v2203 = vld [vmem:[#allocation3 + $0xe8] sm:$0xff]
        %v2204 = vld [vmem:[#allocation3 + $0xf0] sm:$0xff]
        %v2205 = vld [vmem:[#allocation3 + $0xf8] sm:$0xff]
        %v2206 = vld [vmem:[#allocation3 + $0x100] sm:$0xff]
        %v2207 = vld [vmem:[#allocation3 + $0x108] sm:$0xff]
        %v2208 = vld [vmem:[#allocation3 + $0x110] sm:$0xff]
        %v2209 = vld [vmem:[#allocation3 + $0x118] sm:$0xff]
        %v2210 = vld [vmem:[#allocation3 + $0x120] sm:$0xff]
        %v2211 = vld [vmem:[#allocation3 + $0x128] sm:$0xff]
        %v2212 = vld [vmem:[#allocation3 + $0x130] sm:$0xff]
        %v2213 = vld [vmem:[#allocation3 + $0x138] sm:$0xff]
        %v2214 = vld [vmem:[#allocation3 + $0x140] sm:$0xff]
        %v2215 = vld [vmem:[#allocation3 + $0x148] sm:$0xff]
        %v2216 = vld [vmem:[#allocation3 + $0x150] sm:$0xff]
        %v2217 = vld [vmem:[#allocation3 + $0x158] sm:$0xff]
        %v2218 = vld [vmem:[#allocation3 + $0x160] sm:$0xff]
        %v2219 = vld [vmem:[#allocation3 + $0x168] sm:$0xff]
        %v2220 = vld [vmem:[#allocation3 + $0x170] sm:$0xff]
        %v2221 = vld [vmem:[#allocation3 + $0x178] sm:$0xff]
        %v2222 = vld [vmem:[#allocation3 + $0x180] sm:$0xff]
        %v2223 = vld [vmem:[#allocation3 + $0x188] sm:$0xff]
        %v2224 = vld [vmem:[#allocation3 + $0x190] sm:$0xff]
        %v2225 = vld [vmem:[#allocation3 + $0x198] sm:$0xff]
        %v2226 = vld [vmem:[#allocation3 + $0x1a0] sm:$0xff]
        %v2227 = vld [vmem:[#allocation3 + $0x1a8] sm:$0xff]
        %v2228 = vld [vmem:[#allocation3 + $0x1b0] sm:$0xff]
        %v2229 = vld [vmem:[#allocation3 + $0x1b8] sm:$0xff]
        %v2230 = vld [vmem:[#allocation3 + $0x1c0] sm:$0xff]
        %v2231 = vld [vmem:[#allocation3 + $0x1c8] sm:$0xff]
        %v2232 = vld [vmem:[#allocation3 + $0x1d0] sm:$0xff]
        %v2233 = vld [vmem:[#allocation3 + $0x1d8] sm:$0xff]
        %v2234 = vld [vmem:[#allocation3 + $0x1e0] sm:$0xff]
        %v2235 = vld [vmem:[#allocation3 + $0x1e8] sm:$0xff]
        %v2236 = vld [vmem:[#allocation3 + $0x1f0] sm:$0xff]
        %v2237 = vld [vmem:[#allocation3 + $0x1f8] sm:$0xff]
        %v2238 = vld [vmem:[#allocation3 + $0x200] sm:$0xff]
        %v2239 = vld [vmem:[#allocation3 + $0x208] sm:$0xff]
        %v2240 = vld [vmem:[#allocation3 + $0x210] sm:$0xff]
        %v2241 = vld [vmem:[#allocation3 + $0x218] sm:$0xff]
        %v2242 = vld [vmem:[#allocation3 + $0x220] sm:$0xff]
        %v2243 = vld [vmem:[#allocation3 + $0x228] sm:$0xff]
        %v2244 = vld [vmem:[#allocation3 + $0x230] sm:$0xff]
        %v2245 = vld [vmem:[#allocation3 + $0x238] sm:$0xff]
        %v2246 = vld [vmem:[#allocation3 + $0x240] sm:$0xff]
        %v2247 = vld [vmem:[#allocation3 + $0x248] sm:$0xff]
        %v2248 = vld [vmem:[#allocation3 + $0x250] sm:$0xff]
        %v2249 = vld [vmem:[#allocation3 + $0x258] sm:$0xff]
        %v2250 = vld [vmem:[#allocation3 + $0x260] sm:$0xff]
        %v2251 = vld [vmem:[#allocation3 + $0x268] sm:$0xff]
        %v2252 = vld [vmem:[#allocation3 + $0x270] sm:$0xff]
        %v2253 = vld [vmem:[#allocation3 + $0x278] sm:$0xff]
        %v2254 = vld [vmem:[#allocation3 + $0x280] sm:$0xff]
        %v2255 = vld [vmem:[#allocation3 + $0x288] sm:$0xff]
        %v2256 = vld [vmem:[#allocation3 + $0x290] sm:$0xff]
        %v2257 = vld [vmem:[#allocation3 + $0x298] sm:$0xff]
        %v2258 = vld [vmem:[#allocation3 + $0x2a0] sm:$0xff]
        %v2259 = vld [vmem:[#allocation3 + $0x2a8] sm:$0xff]
        %v2260 = vld [vmem:[#allocation3 + $0x2b0] sm:$0xff]
        %v2261 = vld [vmem:[#allocation3 + $0x2b8] sm:$0xff]
        %v2262 = vld [vmem:[#allocation3 + $0x2c0] sm:$0xff]
        %v2263 = vld [vmem:[#allocation3 + $0x2c8] sm:$0xff]
        %v2264 = vld [vmem:[#allocation3 + $0x2d0] sm:$0xff]
        %v2265 = vld [vmem:[#allocation3 + $0x2d8] sm:$0xff]
        %v2266 = vld [vmem:[#allocation3 + $0x2e0] sm:$0xff]
        %v2267 = vld [vmem:[#allocation3 + $0x2e8] sm:$0xff]
        %v2268 = vld [vmem:[#allocation3 + $0x2f0] sm:$0xff]
        %v2269 = vld [vmem:[#allocation3 + $0x2f8] sm:$0xff]
        %v2270 = vld [vmem:[#allocation3 + $0x300] sm:$0xff]
        %v2271 = vld [vmem:[#allocation3 + $0x308] sm:$0xff]
        %v2272 = vld [vmem:[#allocation3 + $0x310] sm:$0xff]
        %v2273 = vld [vmem:[#allocation3 + $0x318] sm:$0xff]
        %v2274 = vld [vmem:[#allocation3 + $0x320] sm:$0xff]
        %v2275 = vld [vmem:[#allocation3 + $0x328] sm:$0xff]
        %v2276 = vld [vmem:[#allocation3 + $0x330] sm:$0xff]
        %v2277 = vld [vmem:[#allocation3 + $0x338] sm:$0xff]
        %v2278 = vld [vmem:[#allocation3 + $0x340] sm:$0xff]
        %v2279 = vld [vmem:[#allocation3 + $0x348] sm:$0xff]
        %v2280 = vld [vmem:[#allocation3 + $0x350] sm:$0xff]
        %v2281 = vld [vmem:[#allocation3 + $0x358] sm:$0xff]
        %v2282 = vld [vmem:[#allocation3 + $0x360] sm:$0xff]
        %v2283 = vld [vmem:[#allocation3 + $0x368] sm:$0xff]
        %v2284 = vld [vmem:[#allocation3 + $0x370] sm:$0xff]
        %v2285 = vld [vmem:[#allocation3 + $0x378] sm:$0xff]
        %v2286 = vld [vmem:[#allocation3 + $0x380] sm:$0xff]
        %v2287 = vld [vmem:[#allocation3 + $0x388] sm:$0xff]
        %v2288 = vld [vmem:[#allocation3 + $0x390] sm:$0xff]
        %v2289 = vld [vmem:[#allocation3 + $0x398] sm:$0xff]
        %v2290 = vld [vmem:[#allocation3 + $0x3a0] sm:$0xff]
        %v2291 = vld [vmem:[#allocation3 + $0x3a8] sm:$0xff]
        %v2292 = vld [vmem:[#allocation3 + $0x3b0] sm:$0xff]
        %v2293 = vld [vmem:[#allocation3 + $0x3b8] sm:$0xff]
        %v2294 = vld [vmem:[#allocation3 + $0x3c0] sm:$0xff]
        %v2295 = vld [vmem:[#allocation3 + $0x3c8] sm:$0xff]
        %v2296 = vld [vmem:[#allocation3 + $0x3d0] sm:$0xff]
        %v2297 = vld [vmem:[#allocation3 + $0x3d8] sm:$0xff]
        %v2298 = vld [vmem:[#allocation3 + $0x3e0] sm:$0xff]
        %v2299 = vld [vmem:[#allocation3 + $0x3e8] sm:$0xff]
        %v2300 = vld [vmem:[#allocation3 + $0x3f0] sm:$0xff]
        %v2301 = vld [vmem:[#allocation3 + $0x3f8] sm:$0xff]
        %v2302 = vld [vmem:[#allocation3 + $0x400] sm:$0xff]
        %v2303 = vld [vmem:[#allocation3 + $0x408] sm:$0xff]
        %v2304 = vld [vmem:[#allocation3 + $0x410] sm:$0xff]
        %v2305 = vld [vmem:[#allocation3 + $0x418] sm:$0xff]
        %v2306 = vld [vmem:[#allocation3 + $0x420] sm:$0xff]
        %v2307 = vld [vmem:[#allocation3 + $0x428] sm:$0xff]
        %v2308 = vld [vmem:[#allocation3 + $0x430] sm:$0xff]
        %v2309 = vld [vmem:[#allocation3 + $0x438] sm:$0xff]
        %v2310 = vld [vmem:[#allocation3 + $0x440] sm:$0xff]
        %v2311 = vld [vmem:[#allocation3 + $0x448] sm:$0xff]
        %v2312 = vld [vmem:[#allocation3 + $0x450] sm:$0xff]
        %v2313 = vld [vmem:[#allocation3 + $0x458] sm:$0xff]
        %v2314 = vld [vmem:[#allocation3 + $0x460] sm:$0xff]
        %v2315 = vld [vmem:[#allocation3 + $0x468] sm:$0xff]
        %v2316 = vld [vmem:[#allocation3 + $0x470] sm:$0xff]
        %v2317 = vld [vmem:[#allocation3 + $0x478] sm:$0xff]
        %v2318 = vld [vmem:[#allocation10] sm:$0xf]
        %v2319 = vld [vmem:[#allocation10 + $0x4] sm:$0xf]
        %v2320 = vld [vmem:[#allocation10 + $0x8] sm:$0xf]
        %v2321 = vld [vmem:[#allocation10 + $0xc] sm:$0xf]
        %v2322 = vld [vmem:[#allocation10 + $0x10] sm:$0xf]
        %v2323 = vld [vmem:[#allocation10 + $0x14] sm:$0xf]
        %v2324 = vld [vmem:[#allocation10 + $0x18] sm:$0xf]
        %v2325 = vld [vmem:[#allocation10 + $0x1c] sm:$0xf]
        %v2326 = vld [vmem:[#allocation10 + $0x20] sm:$0xf]
        %v2327 = vld [vmem:[#allocation10 + $0x24] sm:$0xf]
        %v2328 = vld [vmem:[#allocation10 + $0x28] sm:$0xf]
        %v2329 = vld [vmem:[#allocation10 + $0x2c] sm:$0xf]
        %v2330 = vld [vmem:[#allocation10 + $0x30] sm:$0xf]
        %v2331 = vld [vmem:[#allocation10 + $0x34] sm:$0xf]
        %v2332 = vld [vmem:[#allocation10 + $0x38] sm:$0xf]
        %v2333 = vld [vmem:[#allocation10 + $0x3c] sm:$0xf]
        %v2334 = vld [vmem:[#allocation10 + $0x40] sm:$0xf]
        %v2335 = vld [vmem:[#allocation10 + $0x44] sm:$0xf]
        %v2336 = vld [vmem:[#allocation10 + $0x48] sm:$0xf]
        %v2337 = vld [vmem:[#allocation10 + $0x4c] sm:$0xf]
        %v2338 = vld [vmem:[#allocation10 + $0x50] sm:$0xf]
        %v2339 = vld [vmem:[#allocation10 + $0x54] sm:$0xf]
        %v2340 = vld [vmem:[#allocation10 + $0x58] sm:$0xf]
        %v2341 = vld [vmem:[#allocation10 + $0x5c] sm:$0xf]
        %v2342 = vld [vmem:[#allocation10 + $0x60] sm:$0xf]
        %v2343 = vld [vmem:[#allocation10 + $0x64] sm:$0xf]
        %v2344 = vld [vmem:[#allocation10 + $0x68] sm:$0xf]
        %v2345 = vld [vmem:[#allocation10 + $0x6c] sm:$0xf]
        %v2346 = vld [vmem:[#allocation10 + $0x70] sm:$0xf]
        %v2347 = vld [vmem:[#allocation10 + $0x74] sm:$0xf]
        %v2348 = vld [vmem:[#allocation10 + $0x78] sm:$0xf]
        %v2349 = vld [vmem:[#allocation10 + $0x7c] sm:$0xf]
        %v2350 = vld [vmem:[#allocation10 + $0x80] sm:$0xf]
        %v2351 = vld [vmem:[#allocation10 + $0x84] sm:$0xf]
        %v2352 = vld [vmem:[#allocation10 + $0x88] sm:$0xf]
        %v2353 = vld [vmem:[#allocation10 + $0x8c] sm:$0xf]
        %v2354 = vld [vmem:[#allocation10 + $0x90] sm:$0xf]
        %v2355 = vld [vmem:[#allocation10 + $0x94] sm:$0xf]
        %v2356 = vld [vmem:[#allocation10 + $0x98] sm:$0xf]
        %v2357 = vld [vmem:[#allocation10 + $0x9c] sm:$0xf]
        %v2358 = vld [vmem:[#allocation10 + $0xa0] sm:$0xf]
        %v2359 = vld [vmem:[#allocation10 + $0xa4] sm:$0xf]
        %v2360 = vld [vmem:[#allocation10 + $0xa8] sm:$0xf]
        %v2361 = vld [vmem:[#allocation10 + $0xac] sm:$0xf]
        %v2362 = vld [vmem:[#allocation10 + $0xb0] sm:$0xf]
        %v2363 = vld [vmem:[#allocation10 + $0xb4] sm:$0xf]
        %v2364 = vld [vmem:[#allocation10 + $0xb8] sm:$0xf]
        %v2365 = vld [vmem:[#allocation10 + $0xbc] sm:$0xf]
        %v2366 = vld [vmem:[#allocation10 + $0xc0] sm:$0xf]
        %v2367 = vld [vmem:[#allocation10 + $0xc4] sm:$0xf]
        %v2368 = vld [vmem:[#allocation10 + $0xc8] sm:$0xf]
        %v2369 = vld [vmem:[#allocation10 + $0xcc] sm:$0xf]
        %v2370 = vld [vmem:[#allocation10 + $0xd0] sm:$0xf]
        %v2371 = vld [vmem:[#allocation10 + $0xd4] sm:$0xf]
        %v2372 = vld [vmem:[#allocation10 + $0xd8] sm:$0xf]
        %v2373 = vld [vmem:[#allocation10 + $0xdc] sm:$0xf]
        %v2374 = vld [vmem:[#allocation10 + $0xe0] sm:$0xf]
        %v2375 = vld [vmem:[#allocation10 + $0xe4] sm:$0xf]
        %v2376 = vld [vmem:[#allocation10 + $0xe8] sm:$0xf]
        %v2377 = vld [vmem:[#allocation10 + $0xec] sm:$0xf]
        %v2378 = vld [vmem:[#allocation10 + $0xf0] sm:$0xf]
        %v2379 = vld [vmem:[#allocation10 + $0xf4] sm:$0xf]
        %v2380 = vld [vmem:[#allocation10 + $0xf8] sm:$0xf]
        %v2381 = vld [vmem:[#allocation10 + $0xfc] sm:$0xf]
        %v2382 = vld [vmem:[#allocation10 + $0x100] sm:$0xf]
        %v2383 = vld [vmem:[#allocation10 + $0x104] sm:$0xf]
        %v2384 = vld [vmem:[#allocation10 + $0x108] sm:$0xf]
        %v2385 = vld [vmem:[#allocation10 + $0x10c] sm:$0xf]
        %v2386 = vld [vmem:[#allocation10 + $0x110] sm:$0xf]
        %v2387 = vld [vmem:[#allocation10 + $0x114] sm:$0xf]
        %v2388 = vld [vmem:[#allocation10 + $0x118] sm:$0xf]
        %v2389 = vld [vmem:[#allocation10 + $0x11c] sm:$0xf]
        %v2390 = vld [vmem:[#allocation10 + $0x120] sm:$0xf]
        %v2391 = vld [vmem:[#allocation10 + $0x124] sm:$0xf]
        %v2392 = vld [vmem:[#allocation10 + $0x128] sm:$0xf]
        %v2393 = vld [vmem:[#allocation10 + $0x12c] sm:$0xf]
        %v2394 = vld [vmem:[#allocation10 + $0x130] sm:$0xf]
        %v2395 = vld [vmem:[#allocation10 + $0x134] sm:$0xf]
        %v2396 = vld [vmem:[#allocation10 + $0x138] sm:$0xf]
        %v2397 = vld [vmem:[#allocation10 + $0x13c] sm:$0xf]
        %v2398 = vld [vmem:[#allocation10 + $0x140] sm:$0xf]
        %v2399 = vld [vmem:[#allocation10 + $0x144] sm:$0xf]
        %v2400 = vld [vmem:[#allocation10 + $0x148] sm:$0xf]
        %v2401 = vld [vmem:[#allocation10 + $0x14c] sm:$0xf]
        %v2402 = vld [vmem:[#allocation10 + $0x150] sm:$0xf]
        %v2403 = vld [vmem:[#allocation10 + $0x154] sm:$0xf]
        %v2404 = vld [vmem:[#allocation10 + $0x158] sm:$0xf]
        %v2405 = vld [vmem:[#allocation10 + $0x15c] sm:$0xf]
        %v2406 = vld [vmem:[#allocation10 + $0x160] sm:$0xf]
        %v2407 = vld [vmem:[#allocation10 + $0x164] sm:$0xf]
        %v2408 = vld [vmem:[#allocation10 + $0x168] sm:$0xf]
        %v2409 = vld [vmem:[#allocation10 + $0x16c] sm:$0xf]
        %v2410 = vld [vmem:[#allocation10 + $0x170] sm:$0xf]
        %v2411 = vld [vmem:[#allocation10 + $0x174] sm:$0xf]
        %v2412 = vld [vmem:[#allocation10 + $0x178] sm:$0xf]
        %v2413 = vld [vmem:[#allocation10 + $0x17c] sm:$0xf]
        %v2414 = vld [vmem:[#allocation10 + $0x180] sm:$0xf]
        %v2415 = vld [vmem:[#allocation10 + $0x184] sm:$0xf]
        %v2416 = vld [vmem:[#allocation10 + $0x188] sm:$0xf]
        %v2417 = vld [vmem:[#allocation10 + $0x18c] sm:$0xf]
        %v2418 = vld [vmem:[#allocation10 + $0x190] sm:$0xf]
        %v2419 = vld [vmem:[#allocation10 + $0x194] sm:$0xf]
        %v2420 = vld [vmem:[#allocation10 + $0x198] sm:$0xf]
        %v2421 = vld [vmem:[#allocation10 + $0x19c] sm:$0xf]
        %v2422 = vld [vmem:[#allocation10 + $0x1a0] sm:$0xf]
        %v2423 = vld [vmem:[#allocation10 + $0x1a4] sm:$0xf]
        %v2424 = vld [vmem:[#allocation10 + $0x1a8] sm:$0xf]
        %v2425 = vld [vmem:[#allocation10 + $0x1ac] sm:$0xf]
        %v2426 = vld [vmem:[#allocation10 + $0x1b0] sm:$0xf]
        %v2427 = vld [vmem:[#allocation10 + $0x1b4] sm:$0xf]
        %v2428 = vld [vmem:[#allocation10 + $0x1b8] sm:$0xf]
        %v2429 = vld [vmem:[#allocation10 + $0x1bc] sm:$0xf]
        %v2430 = vld [vmem:[#allocation10 + $0x1c0] sm:$0xf]
        %v2431 = vld [vmem:[#allocation10 + $0x1c4] sm:$0xf]
        %v2432 = vld [vmem:[#allocation10 + $0x1c8] sm:$0xf]
        %v2433 = vld [vmem:[#allocation10 + $0x1cc] sm:$0xf]
        %v2434 = vld [vmem:[#allocation10 + $0x1d0] sm:$0xf]
        %v2435 = vld [vmem:[#allocation10 + $0x1d4] sm:$0xf]
        %v2436 = vld [vmem:[#allocation10 + $0x1d8] sm:$0xf]
        %v2437 = vld [vmem:[#allocation10 + $0x1dc] sm:$0xf]
        %v2438 = vld [vmem:[#allocation10 + $0x1e0] sm:$0xf]
        %v2439 = vld [vmem:[#allocation10 + $0x1e4] sm:$0xf]
        %v2440 = vld [vmem:[#allocation10 + $0x1e8] sm:$0xf]
        %v2441 = vld [vmem:[#allocation10 + $0x1ec] sm:$0xf]
        %v2442 = vld [vmem:[#allocation10 + $0x1f0] sm:$0xf]
        %v2443 = vld [vmem:[#allocation10 + $0x1f4] sm:$0xf]
        %v2444 = vld [vmem:[#allocation10 + $0x1f8] sm:$0xf]
        %v2445 = vld [vmem:[#allocation10 + $0x1fc] sm:$0xf]
        %v2446 = vld [vmem:[#allocation10 + $0x200] sm:$0xf]
        %v2447 = vld [vmem:[#allocation10 + $0x204] sm:$0xf]
        %v2448 = vld [vmem:[#allocation10 + $0x208] sm:$0xf]
        %v2449 = vld [vmem:[#allocation10 + $0x20c] sm:$0xf]
        %v2450 = vld [vmem:[#allocation10 + $0x210] sm:$0xf]
        %v2451 = vld [vmem:[#allocation10 + $0x214] sm:$0xf]
        %v2452 = vld [vmem:[#allocation10 + $0x218] sm:$0xf]
        %v2453 = vld [vmem:[#allocation10 + $0x21c] sm:$0xf]
        %v2454 = vld [vmem:[#allocation10 + $0x220] sm:$0xf]
        %v2455 = vld [vmem:[#allocation10 + $0x224] sm:$0xf]
        %v2456 = vld [vmem:[#allocation10 + $0x228] sm:$0xf]
        %v2457 = vld [vmem:[#allocation10 + $0x22c] sm:$0xf]
        %v2458 = vld [vmem:[#allocation10 + $0x230] sm:$0xf]
        %v2459 = vld [vmem:[#allocation10 + $0x234] sm:$0xf]
        %v2460 = vld [vmem:[#allocation10 + $0x238] sm:$0xf]
        %v2461 = vld [vmem:[#allocation10 + $0x23c] sm:$0xf]
        %v2606 = vunpack.c.l.b16 %v2318
        %v2607 = vunpack.c.l.b16 %v2319
        %v2608 = vunpack.c.l.b16 %v2320
        %v2609 = vunpack.c.l.b16 %v2321
        %v2610 = vunpack.c.l.b16 %v2322
        %v2611 = vunpack.c.l.b16 %v2323
        %v2612 = vunpack.c.l.b16 %v2324
        %v2613 = vunpack.c.l.b16 %v2325
        %v2614 = vunpack.c.l.b16 %v2326
        %v2615 = vunpack.c.l.b16 %v2327
        %v2616 = vunpack.c.l.b16 %v2328
        %v2617 = vunpack.c.l.b16 %v2329
        %v2618 = vunpack.c.l.b16 %v2330
        %v2619 = vunpack.c.l.b16 %v2331
        %v2620 = vunpack.c.l.b16 %v2332
        %v2621 = vunpack.c.l.b16 %v2333
        %v2622 = vunpack.c.l.b16 %v2334
        %v2623 = vunpack.c.l.b16 %v2335
        %v2624 = vunpack.c.l.b16 %v2336
        %v2625 = vunpack.c.l.b16 %v2337
        %v2626 = vunpack.c.l.b16 %v2338
        %v2627 = vunpack.c.l.b16 %v2339
        %v2628 = vunpack.c.l.b16 %v2340
        %v2629 = vunpack.c.l.b16 %v2341
        %v2630 = vunpack.c.l.b16 %v2342
        %v2631 = vunpack.c.l.b16 %v2343
        %v2632 = vunpack.c.l.b16 %v2344
        %v2633 = vunpack.c.l.b16 %v2345
        %v2634 = vunpack.c.l.b16 %v2346
        %v2635 = vunpack.c.l.b16 %v2347
        %v2636 = vunpack.c.l.b16 %v2348
        %v2637 = vunpack.c.l.b16 %v2349
        %v2638 = vunpack.c.l.b16 %v2350
        %v2639 = vunpack.c.l.b16 %v2351
        %v2640 = vunpack.c.l.b16 %v2352
        %v2641 = vunpack.c.l.b16 %v2353
        %v2642 = vunpack.c.l.b16 %v2354
        %v2643 = vunpack.c.l.b16 %v2355
        %v2644 = vunpack.c.l.b16 %v2356
        %v2645 = vunpack.c.l.b16 %v2357
        %v2646 = vunpack.c.l.b16 %v2358
        %v2647 = vunpack.c.l.b16 %v2359
        %v2648 = vunpack.c.l.b16 %v2360
        %v2649 = vunpack.c.l.b16 %v2361
        %v2650 = vunpack.c.l.b16 %v2362
        %v2651 = vunpack.c.l.b16 %v2363
        %v2652 = vunpack.c.l.b16 %v2364
        %v2653 = vunpack.c.l.b16 %v2365
        %v2654 = vunpack.c.l.b16 %v2366
        %v2655 = vunpack.c.l.b16 %v2367
        %v2656 = vunpack.c.l.b16 %v2368
        %v2657 = vunpack.c.l.b16 %v2369
        %v2658 = vunpack.c.l.b16 %v2370
        %v2659 = vunpack.c.l.b16 %v2371
        %v2660 = vunpack.c.l.b16 %v2372
        %v2661 = vunpack.c.l.b16 %v2373
        %v2662 = vunpack.c.l.b16 %v2374
        %v2663 = vunpack.c.l.b16 %v2375
        %v2664 = vunpack.c.l.b16 %v2376
        %v2665 = vunpack.c.l.b16 %v2377
        %v2666 = vunpack.c.l.b16 %v2378
        %v2667 = vunpack.c.l.b16 %v2379
        %v2668 = vunpack.c.l.b16 %v2380
        %v2669 = vunpack.c.l.b16 %v2381
        %v2670 = vunpack.c.l.b16 %v2382
        %v2671 = vunpack.c.l.b16 %v2383
        %v2672 = vunpack.c.l.b16 %v2384
        %v2673 = vunpack.c.l.b16 %v2385
        %v2674 = vunpack.c.l.b16 %v2386
        %v2675 = vunpack.c.l.b16 %v2387
        %v2676 = vunpack.c.l.b16 %v2388
        %v2677 = vunpack.c.l.b16 %v2389
        %v2678 = vunpack.c.l.b16 %v2390
        %v2679 = vunpack.c.l.b16 %v2391
        %v2680 = vunpack.c.l.b16 %v2392
        %v2681 = vunpack.c.l.b16 %v2393
        %v2682 = vunpack.c.l.b16 %v2394
        %v2683 = vunpack.c.l.b16 %v2395
        %v2684 = vunpack.c.l.b16 %v2396
        %v2685 = vunpack.c.l.b16 %v2397
        %v2686 = vunpack.c.l.b16 %v2398
        %v2687 = vunpack.c.l.b16 %v2399
        %v2688 = vunpack.c.l.b16 %v2400
        %v2689 = vunpack.c.l.b16 %v2401
        %v2690 = vunpack.c.l.b16 %v2402
        %v2691 = vunpack.c.l.b16 %v2403
        %v2692 = vunpack.c.l.b16 %v2404
        %v2693 = vunpack.c.l.b16 %v2405
        %v2694 = vunpack.c.l.b16 %v2406
        %v2695 = vunpack.c.l.b16 %v2407
        %v2696 = vunpack.c.l.b16 %v2408
        %v2697 = vunpack.c.l.b16 %v2409
        %v2698 = vunpack.c.l.b16 %v2410
        %v2699 = vunpack.c.l.b16 %v2411
        %v2700 = vunpack.c.l.b16 %v2412
        %v2701 = vunpack.c.l.b16 %v2413
        %v2702 = vunpack.c.l.b16 %v2414
        %v2703 = vunpack.c.l.b16 %v2415
        %v2704 = vunpack.c.l.b16 %v2416
        %v2705 = vunpack.c.l.b16 %v2417
        %v2706 = vunpack.c.l.b16 %v2418
        %v2707 = vunpack.c.l.b16 %v2419
        %v2708 = vunpack.c.l.b16 %v2420
        %v2709 = vunpack.c.l.b16 %v2421
        %v2710 = vunpack.c.l.b16 %v2422
        %v2711 = vunpack.c.l.b16 %v2423
        %v2712 = vunpack.c.l.b16 %v2424
        %v2713 = vunpack.c.l.b16 %v2425
        %v2714 = vunpack.c.l.b16 %v2426
        %v2715 = vunpack.c.l.b16 %v2427
        %v2716 = vunpack.c.l.b16 %v2428
        %v2717 = vunpack.c.l.b16 %v2429
        %v2718 = vunpack.c.l.b16 %v2430
        %v2719 = vunpack.c.l.b16 %v2431
        %v2720 = vunpack.c.l.b16 %v2432
        %v2721 = vunpack.c.l.b16 %v2433
        %v2722 = vunpack.c.l.b16 %v2434
        %v2723 = vunpack.c.l.b16 %v2435
        %v2724 = vunpack.c.l.b16 %v2436
        %v2725 = vunpack.c.l.b16 %v2437
        %v2726 = vunpack.c.l.b16 %v2438
        %v2727 = vunpack.c.l.b16 %v2439
        %v2728 = vunpack.c.l.b16 %v2440
        %v2729 = vunpack.c.l.b16 %v2441
        %v2730 = vunpack.c.l.b16 %v2442
        %v2731 = vunpack.c.l.b16 %v2443
        %v2732 = vunpack.c.l.b16 %v2444
        %v2733 = vunpack.c.l.b16 %v2445
        %v2734 = vunpack.c.l.b16 %v2446
        %v2735 = vunpack.c.l.b16 %v2447
        %v2736 = vunpack.c.l.b16 %v2448
        %v2737 = vunpack.c.l.b16 %v2449
        %v2738 = vunpack.c.l.b16 %v2450
        %v2739 = vunpack.c.l.b16 %v2451
        %v2740 = vunpack.c.l.b16 %v2452
        %v2741 = vunpack.c.l.b16 %v2453
        %v2742 = vunpack.c.l.b16 %v2454
        %v2743 = vunpack.c.l.b16 %v2455
        %v2744 = vunpack.c.l.b16 %v2456
        %v2745 = vunpack.c.l.b16 %v2457
        %v2746 = vunpack.c.l.b16 %v2458
        %v2747 = vunpack.c.l.b16 %v2459
        %v2748 = vunpack.c.l.b16 %v2460
        %v2749 = vunpack.c.l.b16 %v2461
        %v2750 = vpack.c.b16 %v2607, %v2606
        %v2751 = vpack.c.b16 %v2609, %v2608
        %v2752 = vpack.c.b16 %v2611, %v2610
        %v2753 = vpack.c.b16 %v2613, %v2612
        %v2754 = vpack.c.b16 %v2615, %v2614
        %v2755 = vpack.c.b16 %v2617, %v2616
        %v2756 = vpack.c.b16 %v2619, %v2618
        %v2757 = vpack.c.b16 %v2621, %v2620
        %v2758 = vpack.c.b16 %v2623, %v2622
        %v2759 = vpack.c.b16 %v2625, %v2624
        %v2760 = vpack.c.b16 %v2627, %v2626
        %v2761 = vpack.c.b16 %v2629, %v2628
        %v2762 = vpack.c.b16 %v2631, %v2630
        %v2763 = vpack.c.b16 %v2633, %v2632
        %v2764 = vpack.c.b16 %v2635, %v2634
        %v2765 = vpack.c.b16 %v2637, %v2636
        %v2766 = vpack.c.b16 %v2639, %v2638
        %v2767 = vpack.c.b16 %v2641, %v2640
        %v2768 = vpack.c.b16 %v2643, %v2642
        %v2769 = vpack.c.b16 %v2645, %v2644
        %v2770 = vpack.c.b16 %v2647, %v2646
        %v2771 = vpack.c.b16 %v2649, %v2648
        %v2772 = vpack.c.b16 %v2651, %v2650
        %v2773 = vpack.c.b16 %v2653, %v2652
        %v2774 = vpack.c.b16 %v2655, %v2654
        %v2775 = vpack.c.b16 %v2657, %v2656
        %v2776 = vpack.c.b16 %v2659, %v2658
        %v2777 = vpack.c.b16 %v2661, %v2660
        %v2778 = vpack.c.b16 %v2663, %v2662
        %v2779 = vpack.c.b16 %v2665, %v2664
        %v2780 = vpack.c.b16 %v2667, %v2666
        %v2781 = vpack.c.b16 %v2669, %v2668
        %v2782 = vpack.c.b16 %v2671, %v2670
        %v2783 = vpack.c.b16 %v2673, %v2672
        %v2784 = vpack.c.b16 %v2675, %v2674
        %v2785 = vpack.c.b16 %v2677, %v2676
        %v2786 = vpack.c.b16 %v2679, %v2678
        %v2787 = vpack.c.b16 %v2681, %v2680
        %v2788 = vpack.c.b16 %v2683, %v2682
        %v2789 = vpack.c.b16 %v2685, %v2684
        %v2790 = vpack.c.b16 %v2687, %v2686
        %v2791 = vpack.c.b16 %v2689, %v2688
        %v2792 = vpack.c.b16 %v2691, %v2690
        %v2793 = vpack.c.b16 %v2693, %v2692
        %v2794 = vpack.c.b16 %v2695, %v2694
        %v2795 = vpack.c.b16 %v2697, %v2696
        %v2796 = vpack.c.b16 %v2699, %v2698
        %v2797 = vpack.c.b16 %v2701, %v2700
        %v2798 = vpack.c.b16 %v2703, %v2702
        %v2799 = vpack.c.b16 %v2705, %v2704
        %v2800 = vpack.c.b16 %v2707, %v2706
        %v2801 = vpack.c.b16 %v2709, %v2708
        %v2802 = vpack.c.b16 %v2711, %v2710
        %v2803 = vpack.c.b16 %v2713, %v2712
        %v2804 = vpack.c.b16 %v2715, %v2714
        %v2805 = vpack.c.b16 %v2717, %v2716
        %v2806 = vpack.c.b16 %v2719, %v2718
        %v2807 = vpack.c.b16 %v2721, %v2720
        %v2808 = vpack.c.b16 %v2723, %v2722
        %v2809 = vpack.c.b16 %v2725, %v2724
        %v2810 = vpack.c.b16 %v2727, %v2726
        %v2811 = vpack.c.b16 %v2729, %v2728
        %v2812 = vpack.c.b16 %v2731, %v2730
        %v2813 = vpack.c.b16 %v2733, %v2732
        %v2814 = vpack.c.b16 %v2735, %v2734
        %v2815 = vpack.c.b16 %v2737, %v2736
        %v2816 = vpack.c.b16 %v2739, %v2738
        %v2817 = vpack.c.b16 %v2741, %v2740
        %v2818 = vpack.c.b16 %v2743, %v2742
        %v2819 = vpack.c.b16 %v2745, %v2744
        %v2820 = vpack.c.b16 %v2747, %v2746
        %v2821 = vpack.c.b16 %v2749, %v2748
        %2894 = vmatprep.subr.bf16.mxu0 0
        %2895 = vmatpush1.bf16.msra.mxu0 %v2750
        %2896 = vmatprep.subr.bf16.mxu0 0
        %2897 = vmatpush1.bf16.msra.mxu0 %v2751
        %2898 = vmatprep.subr.bf16.mxu0 0
        %2899 = vmatpush1.bf16.msra.mxu0 %v2752
        %2900 = vmatprep.subr.bf16.mxu0 0
        %2901 = vmatpush1.bf16.msra.mxu0 %v2753
        %2902 = vmatprep.subr.bf16.mxu0 0
        %2903 = vmatpush1.bf16.msra.mxu0 %v2754
        %2904 = vmatprep.subr.bf16.mxu0 0
        %2905 = vmatpush1.bf16.msra.mxu0 %v2755
        %2906 = vmatprep.subr.bf16.mxu0 0
        %2907 = vmatpush1.bf16.msra.mxu0 %v2756
        %2908 = vmatprep.subr.bf16.mxu0 0
        %2909 = vmatpush1.bf16.msra.mxu0 %v2757
        %2910 = vmatprep.subr.bf16.mxu0 0
        %2911 = vmatpush1.bf16.msra.mxu0 %v2758
        %2912 = vmatprep.subr.bf16.mxu0 0
        %2913 = vmatpush1.bf16.msra.mxu0 %v2759
        %2914 = vmatprep.subr.bf16.mxu0 0
        %2915 = vmatpush1.bf16.msra.mxu0 %v2760
        %2916 = vmatprep.subr.bf16.mxu0 0
        %2917 = vmatpush1.bf16.msra.mxu0 %v2761
        %2918 = vmatprep.subr.bf16.mxu0 0
        %2919 = vmatpush1.bf16.msra.mxu0 %v2762
        %2920 = vmatprep.subr.bf16.mxu0 0
        %2921 = vmatpush1.bf16.msra.mxu0 %v2763
        %2922 = vmatprep.subr.bf16.mxu0 0
        %2923 = vmatpush1.bf16.msra.mxu0 %v2764
        %2924 = vmatprep.subr.bf16.mxu0 0
        %2925 = vmatpush1.bf16.msra.mxu0 %v2765
        %2926 = vmatprep.mubr.bf16.mxu0 %v2175
        %2927 = vmatmul.mubr.bf16.gmra.mrb[0].mxu0 %v2174
        %v2928 = vpop.f32.mrb[0].mxu0
        %v2929 = vadd.f32 0.0, %v2928
        %v2930 = vpop.f32.mrb[0].mxu0
        %v2931 = vpop.f32.mrb[0].mxu0
        %v2932 = vadd.f32 0.0, %v2931
        %v2933 = vpop.f32.mrb[0].mxu0
        %2934 = vmatprep.mubr.bf16.mxu0 %v2184
        %2935 = vmatmul.mubr.bf16.gmra.mrb[0].mxu0 %v2183
        %v2936 = vpop.f32.mrb[0].mxu0
        %v2937 = vadd.f32 0.0, %v2936
        %v2938 = vpop.f32.mrb[0].mxu0
        %v2939 = vpop.f32.mrb[0].mxu0
        %v2940 = vadd.f32 0.0, %v2939
        %v2941 = vpop.f32.mrb[0].mxu0
        %2942 = vmatprep.mubr.bf16.mxu0 %v2193
        %2943 = vmatmul.mubr.bf16.gmra.mrb[0].mxu0 %v2192
        %v2944 = vpop.f32.mrb[0].mxu0
        %v2945 = vadd.f32 0.0, %v2944
        %v2946 = vpop.f32.mrb[0].mxu0
        %v2947 = vpop.f32.mrb[0].mxu0
        %v2948 = vadd.f32 0.0, %v2947
        %v2949 = vpop.f32.mrb[0].mxu0
        %2950 = vmatprep.mubr.bf16.mxu0 %v2202
        %2951 = vmatmul.mubr.bf16.gmra.mrb[0].mxu0 %v2201
        %v2952 = vpop.f32.mrb[0].mxu0
        %v2953 = vadd.f32 0.0, %v2952
        %v2954 = vpop.f32.mrb[0].mxu0
        %v2955 = vpop.f32.mrb[0].mxu0
        %v2956 = vadd.f32 0.0, %v2955
        %v2957 = vpop.f32.mrb[0].mxu0
        %2958 = vmatprep.mubr.bf16.mxu0 %v2211
        %2959 = vmatmul.mubr.bf16.gmra.mrb[0].mxu0 %v2210
        %v2960 = vpop.f32.mrb[0].mxu0
        %v2961 = vadd.f32 0.0, %v2960
        %v2962 = vpop.f32.mrb[0].mxu0
        %v2963 = vpop.f32.mrb[0].mxu0
        %v2964 = vadd.f32 0.0, %v2963
        %v2965 = vpop.f32.mrb[0].mxu0
        %2966 = vmatprep.mubr.bf16.mxu0 %v2220
        %2967 = vmatmul.mubr.bf16.gmra.mrb[0].mxu0 %v2219
        %v2968 = vpop.f32.mrb[0].mxu0
        %v2969 = vadd.f32 0.0, %v2968
        %v2970 = vpop.f32.mrb[0].mxu0
        %v2971 = vpop.f32.mrb[0].mxu0
        %v2972 = vadd.f32 0.0, %v2971
        %v2973 = vpop.f32.mrb[0].mxu0
        %2974 = vmatprep.mubr.bf16.mxu0 %v2229
        %2975 = vmatmul.mubr.bf16.gmra.mrb[0].mxu0 %v2228
        %v2976 = vpop.f32.mrb[0].mxu0
        %v2977 = vadd.f32 0.0, %v2976
        %v2978 = vpop.f32.mrb[0].mxu0
        %v2979 = vpop.f32.mrb[0].mxu0
        %v2980 = vadd.f32 0.0, %v2979
        %v2981 = vpop.f32.mrb[0].mxu0
        %2982 = vmatprep.mubr.bf16.mxu0 %v2238
        %2983 = vmatmul.mubr.bf16.gmra.mrb[0].mxu0 %v2237
        %v2984 = vpop.f32.mrb[0].mxu0
        %v2985 = vadd.f32 0.0, %v2984
        %v2986 = vpop.f32.mrb[0].mxu0
        %v2987 = vpop.f32.mrb[0].mxu0
        %v2988 = vadd.f32 0.0, %v2987
        %v2989 = vpop.f32.mrb[0].mxu0
        %2990 = vmatprep.mubr.bf16.mxu0 %v2247
        %2991 = vmatmul.mubr.bf16.gmra.mrb[0].mxu0 %v2246
        %v2992 = vpop.f32.mrb[0].mxu0
        %v2993 = vadd.f32 0.0, %v2992
        %v2994 = vpop.f32.mrb[0].mxu0
        %v2995 = vpop.f32.mrb[0].mxu0
        %v2996 = vadd.f32 0.0, %v2995
        %v2997 = vpop.f32.mrb[0].mxu0
        %2998 = vmatprep.mubr.bf16.mxu0 %v2256
        %2999 = vmatmul.mubr.bf16.gmra.mrb[0].mxu0 %v2255
        %v3000 = vpop.f32.mrb[0].mxu0
        %v3001 = vadd.f32 0.0, %v3000
        %v3002 = vpop.f32.mrb[0].mxu0
        %v3003 = vpop.f32.mrb[0].mxu0
        %v3004 = vadd.f32 0.0, %v3003
        %v3005 = vpop.f32.mrb[0].mxu0
        %3006 = vmatprep.mubr.bf16.mxu0 %v2265
        %3007 = vmatmul.mubr.bf16.gmra.mrb[0].mxu0 %v2264
        %v3008 = vpop.f32.mrb[0].mxu0
        %v3009 = vadd.f32 0.0, %v3008
        %v3010 = vpop.f32.mrb[0].mxu0
        %v3011 = vpop.f32.mrb[0].mxu0
        %v3012 = vadd.f32 0.0, %v3011
        %v3013 = vpop.f32.mrb[0].mxu0
        %3014 = vmatprep.mubr.bf16.mxu0 %v2274
        %3015 = vmatmul.mubr.bf16.gmra.mrb[0].mxu0 %v2273
        %v3016 = vpop.f32.mrb[0].mxu0
        %v3017 = vadd.f32 0.0, %v3016
        %v3018 = vpop.f32.mrb[0].mxu0
        %v3019 = vpop.f32.mrb[0].mxu0
        %v3020 = vadd.f32 0.0, %v3019
        %v3021 = vpop.f32.mrb[0].mxu0
        %3022 = vmatprep.mubr.bf16.mxu0 %v2283
        %3023 = vmatmul.mubr.bf16.gmra.mrb[0].mxu0 %v2282
        %v3024 = vpop.f32.mrb[0].mxu0
        %v3025 = vadd.f32 0.0, %v3024
        %v3026 = vpop.f32.mrb[0].mxu0
        %v3027 = vpop.f32.mrb[0].mxu0
        %v3028 = vadd.f32 0.0, %v3027
        %v3029 = vpop.f32.mrb[0].mxu0
        %3030 = vmatprep.mubr.bf16.mxu0 %v2292
        %3031 = vmatmul.mubr.bf16.gmra.mrb[0].mxu0 %v2291
        %v3032 = vpop.f32.mrb[0].mxu0
        %v3033 = vadd.f32 0.0, %v3032
        %v3034 = vpop.f32.mrb[0].mxu0
        %v3035 = vpop.f32.mrb[0].mxu0
        %v3036 = vadd.f32 0.0, %v3035
        %v3037 = vpop.f32.mrb[0].mxu0
        %3038 = vmatprep.mubr.bf16.mxu0 %v2301
        %3039 = vmatmul.mubr.bf16.gmra.mrb[0].mxu0 %v2300
        %v3040 = vpop.f32.mrb[0].mxu0
        %v3041 = vadd.f32 0.0, %v3040
        %v3042 = vpop.f32.mrb[0].mxu0
        %v3043 = vpop.f32.mrb[0].mxu0
        %v3044 = vadd.f32 0.0, %v3043
        %v3045 = vpop.f32.mrb[0].mxu0
        %3046 = vmatprep.mubr.bf16.mxu0 %v2310
        %3047 = vmatmul.mubr.bf16.gmra.mrb[0].mxu0 %v2309
        %v3048 = vpop.f32.mrb[0].mxu0
        %v3049 = vadd.f32 0.0, %v3048
        %v3050 = vpop.f32.mrb[0].mxu0
        %v3051 = vpop.f32.mrb[0].mxu0
        %v3052 = vadd.f32 0.0, %v3051
        %v3053 = vpop.f32.mrb[0].mxu0
        %3054 = vdwg.mxu0
        %3055 = vmatprep.subr.bf16.mxu0 0
        %3056 = vmatpush1.bf16.msra.mxu0 %v2766
        %3057 = vmatprep.subr.bf16.mxu0 0
        %3058 = vmatpush1.bf16.msra.mxu0 %v2767
        %3059 = vmatprep.subr.bf16.mxu0 0
        %3060 = vmatpush1.bf16.msra.mxu0 %v2768
        %3061 = vmatprep.subr.bf16.mxu0 0
        %3062 = vmatpush1.bf16.msra.mxu0 %v2769
        %3063 = vmatprep.subr.bf16.mxu0 0
        %3064 = vmatpush1.bf16.msra.mxu0 %v2770
        %3065 = vmatprep.subr.bf16.mxu0 0
        %3066 = vmatpush1.bf16.msra.mxu0 %v2771
        %3067 = vmatprep.subr.bf16.mxu0 0
        %3068 = vmatpush1.bf16.msra.mxu0 %v2772
        %3069 = vmatprep.subr.bf16.mxu0 0
        %3070 = vmatpush1.bf16.msra.mxu0 %v2773
        %3071 = vmatprep.subr.bf16.mxu0 0
        %3072 = vmatpush1.bf16.msra.mxu0 %v2774
        %3073 = vmatprep.subr.bf16.mxu0 0
        %3074 = vmatpush1.bf16.msra.mxu0 %v2775
        %3075 = vmatprep.subr.bf16.mxu0 0
        %3076 = vmatpush1.bf16.msra.mxu0 %v2776
        %3077 = vmatprep.subr.bf16.mxu0 0
        %3078 = vmatpush1.bf16.msra.mxu0 %v2777
        %3079 = vmatprep.subr.bf16.mxu0 0
        %3080 = vmatpush1.bf16.msra.mxu0 %v2778
        %3081 = vmatprep.subr.bf16.mxu0 0
        %3082 = vmatpush1.bf16.msra.mxu0 %v2779
        %3083 = vmatprep.subr.bf16.mxu0 0
        %3084 = vmatpush1.bf16.msra.mxu0 %v2780
        %3085 = vmatprep.subr.bf16.mxu0 0
        %3086 = vmatpush1.bf16.msra.mxu0 %v2781
        %3087 = vmatprep.mubr.bf16.mxu0 %v2177
        %3088 = vmatmul.mubr.bf16.gmra.mrb[0].mxu0 %v2176
        %v3089 = vpop.f32.mrb[0].mxu0
        %v3090 = vadd.f32 %v2929, %v3089
        %v3091 = vpop.f32.mrb[0].mxu0
        %v3092 = vpop.f32.mrb[0].mxu0
        %v3093 = vadd.f32 %v2932, %v3092
        %v3094 = vpop.f32.mrb[0].mxu0
        %3095 = vmatprep.mubr.bf16.mxu0 %v2186
        %3096 = vmatmul.mubr.bf16.gmra.mrb[0].mxu0 %v2185
        %v3097 = vpop.f32.mrb[0].mxu0
        %v3098 = vadd.f32 %v2937, %v3097
        %v3099 = vpop.f32.mrb[0].mxu0
        %v3100 = vpop.f32.mrb[0].mxu0
        %v3101 = vadd.f32 %v2940, %v3100
        %v3102 = vpop.f32.mrb[0].mxu0
        %3103 = vmatprep.mubr.bf16.mxu0 %v2195
        %3104 = vmatmul.mubr.bf16.gmra.mrb[0].mxu0 %v2194
        %v3105 = vpop.f32.mrb[0].mxu0
        %v3106 = vadd.f32 %v2945, %v3105
        %v3107 = vpop.f32.mrb[0].mxu0
        %v3108 = vpop.f32.mrb[0].mxu0
        %v3109 = vadd.f32 %v2948, %v3108
        %v3110 = vpop.f32.mrb[0].mxu0
        %3111 = vmatprep.mubr.bf16.mxu0 %v2204
        %3112 = vmatmul.mubr.bf16.gmra.mrb[0].mxu0 %v2203
        %v3113 = vpop.f32.mrb[0].mxu0
        %v3114 = vadd.f32 %v2953, %v3113
        %v3115 = vpop.f32.mrb[0].mxu0
        %v3116 = vpop.f32.mrb[0].mxu0
        %v3117 = vadd.f32 %v2956, %v3116
        %v3118 = vpop.f32.mrb[0].mxu0
        %3119 = vmatprep.mubr.bf16.mxu0 %v2213
        %3120 = vmatmul.mubr.bf16.gmra.mrb[0].mxu0 %v2212
        %v3121 = vpop.f32.mrb[0].mxu0
        %v3122 = vadd.f32 %v2961, %v3121
        %v3123 = vpop.f32.mrb[0].mxu0
        %v3124 = vpop.f32.mrb[0].mxu0
        %v3125 = vadd.f32 %v2964, %v3124
        %v3126 = vpop.f32.mrb[0].mxu0
        %3127 = vmatprep.mubr.bf16.mxu0 %v2222
        %3128 = vmatmul.mubr.bf16.gmra.mrb[0].mxu0 %v2221
        %v3129 = vpop.f32.mrb[0].mxu0
        %v3130 = vadd.f32 %v2969, %v3129
        %v3131 = vpop.f32.mrb[0].mxu0
        %v3132 = vpop.f32.mrb[0].mxu0
        %v3133 = vadd.f32 %v2972, %v3132
        %v3134 = vpop.f32.mrb[0].mxu0
        %3135 = vmatprep.mubr.bf16.mxu0 %v2231
        %3136 = vmatmul.mubr.bf16.gmra.mrb[0].mxu0 %v2230
        %v3137 = vpop.f32.mrb[0].mxu0
        %v3138 = vadd.f32 %v2977, %v3137
        %v3139 = vpop.f32.mrb[0].mxu0
        %v3140 = vpop.f32.mrb[0].mxu0
        %v3141 = vadd.f32 %v2980, %v3140
        %v3142 = vpop.f32.mrb[0].mxu0
        %3143 = vmatprep.mubr.bf16.mxu0 %v2240
        %3144 = vmatmul.mubr.bf16.gmra.mrb[0].mxu0 %v2239
        %v3145 = vpop.f32.mrb[0].mxu0
        %v3146 = vadd.f32 %v2985, %v3145
        %v3147 = vpop.f32.mrb[0].mxu0
        %v3148 = vpop.f32.mrb[0].mxu0
        %v3149 = vadd.f32 %v2988, %v3148
        %v3150 = vpop.f32.mrb[0].mxu0
        %3151 = vmatprep.mubr.bf16.mxu0 %v2249
        %3152 = vmatmul.mubr.bf16.gmra.mrb[0].mxu0 %v2248
        %v3153 = vpop.f32.mrb[0].mxu0
        %v3154 = vadd.f32 %v2993, %v3153
        %v3155 = vpop.f32.mrb[0].mxu0
        %v3156 = vpop.f32.mrb[0].mxu0
        %v3157 = vadd.f32 %v2996, %v3156
        %v3158 = vpop.f32.mrb[0].mxu0
        %3159 = vmatprep.mubr.bf16.mxu0 %v2258
        %3160 = vmatmul.mubr.bf16.gmra.mrb[0].mxu0 %v2257
        %v3161 = vpop.f32.mrb[0].mxu0
        %v3162 = vadd.f32 %v3001, %v3161
        %v3163 = vpop.f32.mrb[0].mxu0
        %v3164 = vpop.f32.mrb[0].mxu0
        %v3165 = vadd.f32 %v3004, %v3164
        %v3166 = vpop.f32.mrb[0].mxu0
        %3167 = vmatprep.mubr.bf16.mxu0 %v2267
        %3168 = vmatmul.mubr.bf16.gmra.mrb[0].mxu0 %v2266
        %v3169 = vpop.f32.mrb[0].mxu0
        %v3170 = vadd.f32 %v3009, %v3169
        %v3171 = vpop.f32.mrb[0].mxu0
        %v3172 = vpop.f32.mrb[0].mxu0
        %v3173 = vadd.f32 %v3012, %v3172
        %v3174 = vpop.f32.mrb[0].mxu0
        %3175 = vmatprep.mubr.bf16.mxu0 %v2276
        %3176 = vmatmul.mubr.bf16.gmra.mrb[0].mxu0 %v2275
        %v3177 = vpop.f32.mrb[0].mxu0
        %v3178 = vadd.f32 %v3017, %v3177
        %v3179 = vpop.f32.mrb[0].mxu0
        %v3180 = vpop.f32.mrb[0].mxu0
        %v3181 = vadd.f32 %v3020, %v3180
        %v3182 = vpop.f32.mrb[0].mxu0
        %3183 = vmatprep.mubr.bf16.mxu0 %v2285
        %3184 = vmatmul.mubr.bf16.gmra.mrb[0].mxu0 %v2284
        %v3185 = vpop.f32.mrb[0].mxu0
        %v3186 = vadd.f32 %v3025, %v3185
        %v3187 = vpop.f32.mrb[0].mxu0
        %v3188 = vpop.f32.mrb[0].mxu0
        %v3189 = vadd.f32 %v3028, %v3188
        %v3190 = vpop.f32.mrb[0].mxu0
        %3191 = vmatprep.mubr.bf16.mxu0 %v2294
        %3192 = vmatmul.mubr.bf16.gmra.mrb[0].mxu0 %v2293
        %v3193 = vpop.f32.mrb[0].mxu0
        %v3194 = vadd.f32 %v3033, %v3193
        %v3195 = vpop.f32.mrb[0].mxu0
        %v3196 = vpop.f32.mrb[0].mxu0
        %v3197 = vadd.f32 %v3036, %v3196
        %v3198 = vpop.f32.mrb[0].mxu0
        %3199 = vmatprep.mubr.bf16.mxu0 %v2303
        %3200 = vmatmul.mubr.bf16.gmra.mrb[0].mxu0 %v2302
        %v3201 = vpop.f32.mrb[0].mxu0
        %v3202 = vadd.f32 %v3041, %v3201
        %v3203 = vpop.f32.mrb[0].mxu0
        %v3204 = vpop.f32.mrb[0].mxu0
        %v3205 = vadd.f32 %v3044, %v3204
        %v3206 = vpop.f32.mrb[0].mxu0
        %3207 = vmatprep.mubr.bf16.mxu0 %v2312
        %3208 = vmatmul.mubr.bf16.gmra.mrb[0].mxu0 %v2311
        %v3209 = vpop.f32.mrb[0].mxu0
        %v3210 = vadd.f32 %v3049, %v3209
        %v3211 = vpop.f32.mrb[0].mxu0
        %v3212 = vpop.f32.mrb[0].mxu0
        %v3213 = vadd.f32 %v3052, %v3212
        %v3214 = vpop.f32.mrb[0].mxu0
        %3215 = vdwg.mxu0
        %3216 = vmatprep.subr.bf16.mxu0 0
        %3217 = vmatpush1.bf16.msra.mxu0 %v2782
        %3218 = vmatprep.subr.bf16.mxu0 0
        %3219 = vmatpush1.bf16.msra.mxu0 %v2783
        %3220 = vmatprep.subr.bf16.mxu0 0
        %3221 = vmatpush1.bf16.msra.mxu0 %v2784
        %3222 = vmatprep.subr.bf16.mxu0 0
        %3223 = vmatpush1.bf16.msra.mxu0 %v2785
        %3224 = vmatprep.subr.bf16.mxu0 0
        %3225 = vmatpush1.bf16.msra.mxu0 %v2786
        %3226 = vmatprep.subr.bf16.mxu0 0
        %3227 = vmatpush1.bf16.msra.mxu0 %v2787
        %3228 = vmatprep.subr.bf16.mxu0 0
        %3229 = vmatpush1.bf16.msra.mxu0 %v2788
        %3230 = vmatprep.subr.bf16.mxu0 0
        %3231 = vmatpush1.bf16.msra.mxu0 %v2789
        %3232 = vmatprep.subr.bf16.mxu0 0
        %3233 = vmatpush1.bf16.msra.mxu0 %v2790
        %3234 = vmatprep.subr.bf16.mxu0 0
        %3235 = vmatpush1.bf16.msra.mxu0 %v2791
        %3236 = vmatprep.subr.bf16.mxu0 0
        %3237 = vmatpush1.bf16.msra.mxu0 %v2792
        %3238 = vmatprep.subr.bf16.mxu0 0
        %3239 = vmatpush1.bf16.msra.mxu0 %v2793
        %3240 = vmatprep.subr.bf16.mxu0 0
        %3241 = vmatpush1.bf16.msra.mxu0 %v2794
        %3242 = vmatprep.subr.bf16.mxu0 0
        %3243 = vmatpush1.bf16.msra.mxu0 %v2795
        %3244 = vmatprep.subr.bf16.mxu0 0
        %3245 = vmatpush1.bf16.msra.mxu0 %v2796
        %3246 = vmatprep.subr.bf16.mxu0 0
        %3247 = vmatpush1.bf16.msra.mxu0 %v2797
        %3248 = vmatprep.mubr.bf16.mxu0 %v2179
        %3249 = vmatmul.mubr.bf16.gmra.mrb[0].mxu0 %v2178
        %v3250 = vpop.f32.mrb[0].mxu0
        %v3251 = vadd.f32 %v3090, %v3250
        %v3252 = vpop.f32.mrb[0].mxu0
        %v3253 = vpop.f32.mrb[0].mxu0
        %v3254 = vadd.f32 %v3093, %v3253
        %v3255 = vpop.f32.mrb[0].mxu0
        %3256 = vmatprep.mubr.bf16.mxu0 %v2188
        %3257 = vmatmul.mubr.bf16.gmra.mrb[0].mxu0 %v2187
        %v3258 = vpop.f32.mrb[0].mxu0
        %v3259 = vadd.f32 %v3098, %v3258
        %v3260 = vpop.f32.mrb[0].mxu0
        %v3261 = vpop.f32.mrb[0].mxu0
        %v3262 = vadd.f32 %v3101, %v3261
        %v3263 = vpop.f32.mrb[0].mxu0
        %3264 = vmatprep.mubr.bf16.mxu0 %v2197
        %3265 = vmatmul.mubr.bf16.gmra.mrb[0].mxu0 %v2196
        %v3266 = vpop.f32.mrb[0].mxu0
        %v3267 = vadd.f32 %v3106, %v3266
        %v3268 = vpop.f32.mrb[0].mxu0
        %v3269 = vpop.f32.mrb[0].mxu0
        %v3270 = vadd.f32 %v3109, %v3269
        %v3271 = vpop.f32.mrb[0].mxu0
        %3272 = vmatprep.mubr.bf16.mxu0 %v2206
        %3273 = vmatmul.mubr.bf16.gmra.mrb[0].mxu0 %v2205
        %v3274 = vpop.f32.mrb[0].mxu0
        %v3275 = vadd.f32 %v3114, %v3274
        %v3276 = vpop.f32.mrb[0].mxu0
        %v3277 = vpop.f32.mrb[0].mxu0
        %v3278 = vadd.f32 %v3117, %v3277
        %v3279 = vpop.f32.mrb[0].mxu0
        %3280 = vmatprep.mubr.bf16.mxu0 %v2215
        %3281 = vmatmul.mubr.bf16.gmra.mrb[0].mxu0 %v2214
        %v3282 = vpop.f32.mrb[0].mxu0
        %v3283 = vadd.f32 %v3122, %v3282
        %v3284 = vpop.f32.mrb[0].mxu0
        %v3285 = vpop.f32.mrb[0].mxu0
        %v3286 = vadd.f32 %v3125, %v3285
        %v3287 = vpop.f32.mrb[0].mxu0
        %3288 = vmatprep.mubr.bf16.mxu0 %v2224
        %3289 = vmatmul.mubr.bf16.gmra.mrb[0].mxu0 %v2223
        %v3290 = vpop.f32.mrb[0].mxu0
        %v3291 = vadd.f32 %v3130, %v3290
        %v3292 = vpop.f32.mrb[0].mxu0
        %v3293 = vpop.f32.mrb[0].mxu0
        %v3294 = vadd.f32 %v3133, %v3293
        %v3295 = vpop.f32.mrb[0].mxu0
        %3296 = vmatprep.mubr.bf16.mxu0 %v2233
        %3297 = vmatmul.mubr.bf16.gmra.mrb[0].mxu0 %v2232
        %v3298 = vpop.f32.mrb[0].mxu0
        %v3299 = vadd.f32 %v3138, %v3298
        %v3300 = vpop.f32.mrb[0].mxu0
        %v3301 = vpop.f32.mrb[0].mxu0
        %v3302 = vadd.f32 %v3141, %v3301
        %v3303 = vpop.f32.mrb[0].mxu0
        %3304 = vmatprep.mubr.bf16.mxu0 %v2242
        %3305 = vmatmul.mubr.bf16.gmra.mrb[0].mxu0 %v2241
        %v3306 = vpop.f32.mrb[0].mxu0
        %v3307 = vadd.f32 %v3146, %v3306
        %v3308 = vpop.f32.mrb[0].mxu0
        %v3309 = vpop.f32.mrb[0].mxu0
        %v3310 = vadd.f32 %v3149, %v3309
        %v3311 = vpop.f32.mrb[0].mxu0
        %3312 = vmatprep.mubr.bf16.mxu0 %v2251
        %3313 = vmatmul.mubr.bf16.gmra.mrb[0].mxu0 %v2250
        %v3314 = vpop.f32.mrb[0].mxu0
        %v3315 = vadd.f32 %v3154, %v3314
        %v3316 = vpop.f32.mrb[0].mxu0
        %v3317 = vpop.f32.mrb[0].mxu0
        %v3318 = vadd.f32 %v3157, %v3317
        %v3319 = vpop.f32.mrb[0].mxu0
        %3320 = vmatprep.mubr.bf16.mxu0 %v2260
        %3321 = vmatmul.mubr.bf16.gmra.mrb[0].mxu0 %v2259
        %v3322 = vpop.f32.mrb[0].mxu0
        %v3323 = vadd.f32 %v3162, %v3322
        %v3324 = vpop.f32.mrb[0].mxu0
        %v3325 = vpop.f32.mrb[0].mxu0
        %v3326 = vadd.f32 %v3165, %v3325
        %v3327 = vpop.f32.mrb[0].mxu0
        %3328 = vmatprep.mubr.bf16.mxu0 %v2269
        %3329 = vmatmul.mubr.bf16.gmra.mrb[0].mxu0 %v2268
        %v3330 = vpop.f32.mrb[0].mxu0
        %v3331 = vadd.f32 %v3170, %v3330
        %v3332 = vpop.f32.mrb[0].mxu0
        %v3333 = vpop.f32.mrb[0].mxu0
        %v3334 = vadd.f32 %v3173, %v3333
        %v3335 = vpop.f32.mrb[0].mxu0
        %3336 = vmatprep.mubr.bf16.mxu0 %v2278
        %3337 = vmatmul.mubr.bf16.gmra.mrb[0].mxu0 %v2277
        %v3338 = vpop.f32.mrb[0].mxu0
        %v3339 = vadd.f32 %v3178, %v3338
        %v3340 = vpop.f32.mrb[0].mxu0
        %v3341 = vpop.f32.mrb[0].mxu0
        %v3342 = vadd.f32 %v3181, %v3341
        %v3343 = vpop.f32.mrb[0].mxu0
        %3344 = vmatprep.mubr.bf16.mxu0 %v2287
        %3345 = vmatmul.mubr.bf16.gmra.mrb[0].mxu0 %v2286
        %v3346 = vpop.f32.mrb[0].mxu0
        %v3347 = vadd.f32 %v3186, %v3346
        %v3348 = vpop.f32.mrb[0].mxu0
        %v3349 = vpop.f32.mrb[0].mxu0
        %v3350 = vadd.f32 %v3189, %v3349
        %v3351 = vpop.f32.mrb[0].mxu0
        %3352 = vmatprep.mubr.bf16.mxu0 %v2296
        %3353 = vmatmul.mubr.bf16.gmra.mrb[0].mxu0 %v2295
        %v3354 = vpop.f32.mrb[0].mxu0
        %v3355 = vadd.f32 %v3194, %v3354
        %v3356 = vpop.f32.mrb[0].mxu0
        %v3357 = vpop.f32.mrb[0].mxu0
        %v3358 = vadd.f32 %v3197, %v3357
        %v3359 = vpop.f32.mrb[0].mxu0
        %3360 = vmatprep.mubr.bf16.mxu0 %v2305
        %3361 = vmatmul.mubr.bf16.gmra.mrb[0].mxu0 %v2304
        %v3362 = vpop.f32.mrb[0].mxu0
        %v3363 = vadd.f32 %v3202, %v3362
        %v3364 = vpop.f32.mrb[0].mxu0
        %v3365 = vpop.f32.mrb[0].mxu0
        %v3366 = vadd.f32 %v3205, %v3365
        %v3367 = vpop.f32.mrb[0].mxu0
        %3368 = vmatprep.mubr.bf16.mxu0 %v2314
        %3369 = vmatmul.mubr.bf16.gmra.mrb[0].mxu0 %v2313
        %v3370 = vpop.f32.mrb[0].mxu0
        %v3371 = vadd.f32 %v3210, %v3370
        %v3372 = vpop.f32.mrb[0].mxu0
        %v3373 = vpop.f32.mrb[0].mxu0
        %v3374 = vadd.f32 %v3213, %v3373
        %v3375 = vpop.f32.mrb[0].mxu0
        %3376 = vdwg.mxu0
        %3377 = vmatprep.subr.bf16.mxu0 0
        %3378 = vmatpush1.bf16.msra.mxu0 %v2798
        %3379 = vmatprep.subr.bf16.mxu0 0
        %3380 = vmatpush1.bf16.msra.mxu0 %v2799
        %3381 = vmatprep.subr.bf16.mxu0 0
        %3382 = vmatpush1.bf16.msra.mxu0 %v2800
        %3383 = vmatprep.subr.bf16.mxu0 0
        %3384 = vmatpush1.bf16.msra.mxu0 %v2801
        %3385 = vmatprep.subr.bf16.mxu0 0
        %3386 = vmatpush1.bf16.msra.mxu0 %v2802
        %3387 = vmatprep.subr.bf16.mxu0 0
        %3388 = vmatpush1.bf16.msra.mxu0 %v2803
        %3389 = vmatprep.subr.bf16.mxu0 0
        %3390 = vmatpush1.bf16.msra.mxu0 %v2804
        %3391 = vmatprep.subr.bf16.mxu0 0
        %3392 = vmatpush1.bf16.msra.mxu0 %v2805
        %3393 = vmatprep.subr.bf16.mxu0 0
        %3394 = vmatpush1.bf16.msra.mxu0 %v2806
        %3395 = vmatprep.subr.bf16.mxu0 0
        %3396 = vmatpush1.bf16.msra.mxu0 %v2807
        %3397 = vmatprep.subr.bf16.mxu0 0
        %3398 = vmatpush1.bf16.msra.mxu0 %v2808
        %3399 = vmatprep.subr.bf16.mxu0 0
        %3400 = vmatpush1.bf16.msra.mxu0 %v2809
        %3401 = vmatprep.subr.bf16.mxu0 0
        %3402 = vmatpush1.bf16.msra.mxu0 %v2810
        %3403 = vmatprep.subr.bf16.mxu0 0
        %3404 = vmatpush1.bf16.msra.mxu0 %v2811
        %3405 = vmatprep.subr.bf16.mxu0 0
        %3406 = vmatpush1.bf16.msra.mxu0 %v2812
        %3407 = vmatprep.subr.bf16.mxu0 0
        %3408 = vmatpush1.bf16.msra.mxu0 %v2813
        %3409 = vmatprep.mubr.bf16.mxu0 %v2181
        %3410 = vmatmul.mubr.bf16.gmra.mrb[0].mxu0 %v2180
        %v3411 = vpop.f32.mrb[0].mxu0
        %v3412 = vadd.f32 %v3251, %v3411
        %v3413 = vpop.f32.mrb[0].mxu0
        %v3414 = vpop.f32.mrb[0].mxu0
        %v3415 = vadd.f32 %v3254, %v3414
        %v3416 = vpop.f32.mrb[0].mxu0
        %3417 = vmatprep.mubr.bf16.mxu0 %v2190
        %3418 = vmatmul.mubr.bf16.gmra.mrb[0].mxu0 %v2189
        %v3419 = vpop.f32.mrb[0].mxu0
        %v3420 = vadd.f32 %v3259, %v3419
        %v3421 = vpop.f32.mrb[0].mxu0
        %v3422 = vpop.f32.mrb[0].mxu0
        %v3423 = vadd.f32 %v3262, %v3422
        %v3424 = vpop.f32.mrb[0].mxu0
        %3425 = vmatprep.mubr.bf16.mxu0 %v2199
        %3426 = vmatmul.mubr.bf16.gmra.mrb[0].mxu0 %v2198
        %v3427 = vpop.f32.mrb[0].mxu0
        %v3428 = vadd.f32 %v3267, %v3427
        %v3429 = vpop.f32.mrb[0].mxu0
        %v3430 = vpop.f32.mrb[0].mxu0
        %v3431 = vadd.f32 %v3270, %v3430
        %v3432 = vpop.f32.mrb[0].mxu0
        %3433 = vmatprep.mubr.bf16.mxu0 %v2208
        %3434 = vmatmul.mubr.bf16.gmra.mrb[0].mxu0 %v2207
        %v3435 = vpop.f32.mrb[0].mxu0
        %v3436 = vadd.f32 %v3275, %v3435
        %v3437 = vpop.f32.mrb[0].mxu0
        %v3438 = vpop.f32.mrb[0].mxu0
        %v3439 = vadd.f32 %v3278, %v3438
        %v3440 = vpop.f32.mrb[0].mxu0
        %3441 = vmatprep.mubr.bf16.mxu0 %v2217
        %3442 = vmatmul.mubr.bf16.gmra.mrb[0].mxu0 %v2216
        %v3443 = vpop.f32.mrb[0].mxu0
        %v3444 = vadd.f32 %v3283, %v3443
        %v3445 = vpop.f32.mrb[0].mxu0
        %v3446 = vpop.f32.mrb[0].mxu0
        %v3447 = vadd.f32 %v3286, %v3446
        %v3448 = vpop.f32.mrb[0].mxu0
        %3449 = vmatprep.mubr.bf16.mxu0 %v2226
        %3450 = vmatmul.mubr.bf16.gmra.mrb[0].mxu0 %v2225
        %v3451 = vpop.f32.mrb[0].mxu0
        %v3452 = vadd.f32 %v3291, %v3451
        %v3453 = vpop.f32.mrb[0].mxu0
        %v3454 = vpop.f32.mrb[0].mxu0
        %v3455 = vadd.f32 %v3294, %v3454
        %v3456 = vpop.f32.mrb[0].mxu0
        %3457 = vmatprep.mubr.bf16.mxu0 %v2235
        %3458 = vmatmul.mubr.bf16.gmra.mrb[0].mxu0 %v2234
        %v3459 = vpop.f32.mrb[0].mxu0
        %v3460 = vadd.f32 %v3299, %v3459
        %v3461 = vpop.f32.mrb[0].mxu0
        %v3462 = vpop.f32.mrb[0].mxu0
        %v3463 = vadd.f32 %v3302, %v3462
        %v3464 = vpop.f32.mrb[0].mxu0
        %3465 = vmatprep.mubr.bf16.mxu0 %v2244
        %3466 = vmatmul.mubr.bf16.gmra.mrb[0].mxu0 %v2243
        %v3467 = vpop.f32.mrb[0].mxu0
        %v3468 = vadd.f32 %v3307, %v3467
        %v3469 = vpop.f32.mrb[0].mxu0
        %v3470 = vpop.f32.mrb[0].mxu0
        %v3471 = vadd.f32 %v3310, %v3470
        %v3472 = vpop.f32.mrb[0].mxu0
        %3473 = vmatprep.mubr.bf16.mxu0 %v2253
        %3474 = vmatmul.mubr.bf16.gmra.mrb[0].mxu0 %v2252
        %v3475 = vpop.f32.mrb[0].mxu0
        %v3476 = vadd.f32 %v3315, %v3475
        %v3477 = vpop.f32.mrb[0].mxu0
        %v3478 = vpop.f32.mrb[0].mxu0
        %v3479 = vadd.f32 %v3318, %v3478
        %v3480 = vpop.f32.mrb[0].mxu0
        %3481 = vmatprep.mubr.bf16.mxu0 %v2262
        %3482 = vmatmul.mubr.bf16.gmra.mrb[0].mxu0 %v2261
        %v3483 = vpop.f32.mrb[0].mxu0
        %v3484 = vadd.f32 %v3323, %v3483
        %v3485 = vpop.f32.mrb[0].mxu0
        %v3486 = vpop.f32.mrb[0].mxu0
        %v3487 = vadd.f32 %v3326, %v3486
        %v3488 = vpop.f32.mrb[0].mxu0
        %3489 = vmatprep.mubr.bf16.mxu0 %v2271
        %3490 = vmatmul.mubr.bf16.gmra.mrb[0].mxu0 %v2270
        %v3491 = vpop.f32.mrb[0].mxu0
        %v3492 = vadd.f32 %v3331, %v3491
        %v3493 = vpop.f32.mrb[0].mxu0
        %v3494 = vpop.f32.mrb[0].mxu0
        %v3495 = vadd.f32 %v3334, %v3494
        %v3496 = vpop.f32.mrb[0].mxu0
        %3497 = vmatprep.mubr.bf16.mxu0 %v2280
        %3498 = vmatmul.mubr.bf16.gmra.mrb[0].mxu0 %v2279
        %v3499 = vpop.f32.mrb[0].mxu0
        %v3500 = vadd.f32 %v3339, %v3499
        %v3501 = vpop.f32.mrb[0].mxu0
        %v3502 = vpop.f32.mrb[0].mxu0
        %v3503 = vadd.f32 %v3342, %v3502
        %v3504 = vpop.f32.mrb[0].mxu0
        %3505 = vmatprep.mubr.bf16.mxu0 %v2289
        %3506 = vmatmul.mubr.bf16.gmra.mrb[0].mxu0 %v2288
        %v3507 = vpop.f32.mrb[0].mxu0
        %v3508 = vadd.f32 %v3347, %v3507
        %v3509 = vpop.f32.mrb[0].mxu0
        %v3510 = vpop.f32.mrb[0].mxu0
        %v3511 = vadd.f32 %v3350, %v3510
        %v3512 = vpop.f32.mrb[0].mxu0
        %3513 = vmatprep.mubr.bf16.mxu0 %v2298
        %3514 = vmatmul.mubr.bf16.gmra.mrb[0].mxu0 %v2297
        %v3515 = vpop.f32.mrb[0].mxu0
        %v3516 = vadd.f32 %v3355, %v3515
        %v3517 = vpop.f32.mrb[0].mxu0
        %v3518 = vpop.f32.mrb[0].mxu0
        %v3519 = vadd.f32 %v3358, %v3518
        %v3520 = vpop.f32.mrb[0].mxu0
        %3521 = vmatprep.mubr.bf16.mxu0 %v2307
        %3522 = vmatmul.mubr.bf16.gmra.mrb[0].mxu0 %v2306
        %v3523 = vpop.f32.mrb[0].mxu0
        %v3524 = vadd.f32 %v3363, %v3523
        %v3525 = vpop.f32.mrb[0].mxu0
        %v3526 = vpop.f32.mrb[0].mxu0
        %v3527 = vadd.f32 %v3366, %v3526
        %v3528 = vpop.f32.mrb[0].mxu0
        %3529 = vmatprep.mubr.bf16.mxu0 %v2316
        %3530 = vmatmul.mubr.bf16.gmra.mrb[0].mxu0 %v2315
        %v3531 = vpop.f32.mrb[0].mxu0
        %v3532 = vadd.f32 %v3371, %v3531
        %v3533 = vpop.f32.mrb[0].mxu0
        %v3534 = vpop.f32.mrb[0].mxu0
        %v3535 = vadd.f32 %v3374, %v3534
        %v3536 = vpop.f32.mrb[0].mxu0
        %3537 = vdwg.mxu0
        %3538 = vmatprep.subr.bf16.mxu0 0
        %3539 = vmatpush1.bf16.msra.mxu0 %v2814
        %3540 = vmatprep.subr.bf16.mxu0 0
        %3541 = vmatpush1.bf16.msra.mxu0 %v2815
        %3542 = vmatprep.subr.bf16.mxu0 0
        %3543 = vmatpush1.bf16.msra.mxu0 %v2816
        %3544 = vmatprep.subr.bf16.mxu0 0
        %3545 = vmatpush1.bf16.msra.mxu0 %v2817
        %3546 = vmatprep.subr.bf16.mxu0 0
        %3547 = vmatpush1.bf16.msra.mxu0 %v2818
        %3548 = vmatprep.subr.bf16.mxu0 0
        %3549 = vmatpush1.bf16.msra.mxu0 %v2819
        %3550 = vmatprep.subr.bf16.mxu0 0
        %3551 = vmatpush1.bf16.msra.mxu0 %v2820
        %3552 = vmatprep.subr.bf16.mxu0 0
        %3553 = vmatpush1.bf16.msra.mxu0 %v2821
        %3554 = vmatprep.subr.bf16.mxu0 0
        %3555 = vmatpush1.bf16.msra.mxu0 0
        %3556 = vmatprep.subr.bf16.mxu0 0
        %3557 = vmatpush1.bf16.msra.mxu0 0
        %3558 = vmatprep.subr.bf16.mxu0 0
        %3559 = vmatpush1.bf16.msra.mxu0 0
        %3560 = vmatprep.subr.bf16.mxu0 0
        %3561 = vmatpush1.bf16.msra.mxu0 0
        %3562 = vmatprep.subr.bf16.mxu0 0
        %3563 = vmatpush1.bf16.msra.mxu0 0
        %3564 = vmatprep.subr.bf16.mxu0 0
        %3565 = vmatpush1.bf16.msra.mxu0 0
        %3566 = vmatprep.subr.bf16.mxu0 0
        %3567 = vmatpush1.bf16.msra.mxu0 0
        %3568 = vmatprep.subr.bf16.mxu0 0
        %3569 = vmatpush1.bf16.msra.mxu0 0
        %3570 = vmatprep.mubr.bf16.mxu0 0
        %3571 = vmatmul.mubr.bf16.gmra.mrb[0].mxu0 %v2182
        %v3572 = vpop.f32.mrb[0].mxu0
        %v3573 = vadd.f32 %v3412, %v3572
        %v3574 = vpop.f32.mrb[0].mxu0
        %v3575 = vpop.f32.mrb[0].mxu0
        %v3576 = vadd.f32 %v3415, %v3575
        %v3577 = vpop.f32.mrb[0].mxu0
        %3578 = vmatprep.mubr.bf16.mxu0 0
        %3579 = vmatmul.mubr.bf16.gmra.mrb[0].mxu0 %v2191
        %v3580 = vpop.f32.mrb[0].mxu0
        %v3581 = vadd.f32 %v3420, %v3580
        %v3582 = vpop.f32.mrb[0].mxu0
        %v3583 = vpop.f32.mrb[0].mxu0
        %v3584 = vadd.f32 %v3423, %v3583
        %v3585 = vpop.f32.mrb[0].mxu0
        %3586 = vmatprep.mubr.bf16.mxu0 0
        %3587 = vmatmul.mubr.bf16.gmra.mrb[0].mxu0 %v2200
        %v3588 = vpop.f32.mrb[0].mxu0
        %v3589 = vadd.f32 %v3428, %v3588
        %v3590 = vpop.f32.mrb[0].mxu0
        %v3591 = vpop.f32.mrb[0].mxu0
        %v3592 = vadd.f32 %v3431, %v3591
        %v3593 = vpop.f32.mrb[0].mxu0
        %3594 = vmatprep.mubr.bf16.mxu0 0
        %3595 = vmatmul.mubr.bf16.gmra.mrb[0].mxu0 %v2209
        %v3596 = vpop.f32.mrb[0].mxu0
        %v3597 = vadd.f32 %v3436, %v3596
        %v3598 = vpop.f32.mrb[0].mxu0
        %v3599 = vpop.f32.mrb[0].mxu0
        %v3600 = vadd.f32 %v3439, %v3599
        %v3601 = vpop.f32.mrb[0].mxu0
        %3602 = vmatprep.mubr.bf16.mxu0 0
        %3603 = vmatmul.mubr.bf16.gmra.mrb[0].mxu0 %v2218
        %v3604 = vpop.f32.mrb[0].mxu0
        %v3605 = vadd.f32 %v3444, %v3604
        %v3606 = vpop.f32.mrb[0].mxu0
        %v3607 = vpop.f32.mrb[0].mxu0
        %v3608 = vadd.f32 %v3447, %v3607
        %v3609 = vpop.f32.mrb[0].mxu0
        %3610 = vmatprep.mubr.bf16.mxu0 0
        %3611 = vmatmul.mubr.bf16.gmra.mrb[0].mxu0 %v2227
        %v3612 = vpop.f32.mrb[0].mxu0
        %v3613 = vadd.f32 %v3452, %v3612
        %v3614 = vpop.f32.mrb[0].mxu0
        %v3615 = vpop.f32.mrb[0].mxu0
        %v3616 = vadd.f32 %v3455, %v3615
        %v3617 = vpop.f32.mrb[0].mxu0
        %3618 = vmatprep.mubr.bf16.mxu0 0
        %3619 = vmatmul.mubr.bf16.gmra.mrb[0].mxu0 %v2236
        %v3620 = vpop.f32.mrb[0].mxu0
        %v3621 = vadd.f32 %v3460, %v3620
        %v3622 = vpop.f32.mrb[0].mxu0
        %v3623 = vpop.f32.mrb[0].mxu0
        %v3624 = vadd.f32 %v3463, %v3623
        %v3625 = vpop.f32.mrb[0].mxu0
        %3626 = vmatprep.mubr.bf16.mxu0 0
        %3627 = vmatmul.mubr.bf16.gmra.mrb[0].mxu0 %v2245
        %v3628 = vpop.f32.mrb[0].mxu0
        %v3629 = vadd.f32 %v3468, %v3628
        %v3630 = vpop.f32.mrb[0].mxu0
        %v3631 = vpop.f32.mrb[0].mxu0
        %v3632 = vadd.f32 %v3471, %v3631
        %v3633 = vpop.f32.mrb[0].mxu0
        %3634 = vmatprep.mubr.bf16.mxu0 0
        %3635 = vmatmul.mubr.bf16.gmra.mrb[0].mxu0 %v2254
        %v3636 = vpop.f32.mrb[0].mxu0
        %v3637 = vadd.f32 %v3476, %v3636
        %v3638 = vpop.f32.mrb[0].mxu0
        %v3639 = vpop.f32.mrb[0].mxu0
        %v3640 = vadd.f32 %v3479, %v3639
        %v3641 = vpop.f32.mrb[0].mxu0
        %3642 = vmatprep.mubr.bf16.mxu0 0
        %3643 = vmatmul.mubr.bf16.gmra.mrb[0].mxu0 %v2263
        %v3644 = vpop.f32.mrb[0].mxu0
        %v3645 = vadd.f32 %v3484, %v3644
        %v3646 = vpop.f32.mrb[0].mxu0
        %v3647 = vpop.f32.mrb[0].mxu0
        %v3648 = vadd.f32 %v3487, %v3647
        %v3649 = vpop.f32.mrb[0].mxu0
        %3650 = vmatprep.mubr.bf16.mxu0 0
        %3651 = vmatmul.mubr.bf16.gmra.mrb[0].mxu0 %v2272
        %v3652 = vpop.f32.mrb[0].mxu0
        %v3653 = vadd.f32 %v3492, %v3652
        %v3654 = vpop.f32.mrb[0].mxu0
        %v3655 = vpop.f32.mrb[0].mxu0
        %v3656 = vadd.f32 %v3495, %v3655
        %v3657 = vpop.f32.mrb[0].mxu0
        %3658 = vmatprep.mubr.bf16.mxu0 0
        %3659 = vmatmul.mubr.bf16.gmra.mrb[0].mxu0 %v2281
        %v3660 = vpop.f32.mrb[0].mxu0
        %v3661 = vadd.f32 %v3500, %v3660
        %v3662 = vpop.f32.mrb[0].mxu0
        %v3663 = vpop.f32.mrb[0].mxu0
        %v3664 = vadd.f32 %v3503, %v3663
        %v3665 = vpop.f32.mrb[0].mxu0
        %3666 = vmatprep.mubr.bf16.mxu0 0
        %3667 = vmatmul.mubr.bf16.gmra.mrb[0].mxu0 %v2290
        %v3668 = vpop.f32.mrb[0].mxu0
        %v3669 = vadd.f32 %v3508, %v3668
        %v3670 = vpop.f32.mrb[0].mxu0
        %v3671 = vpop.f32.mrb[0].mxu0
        %v3672 = vadd.f32 %v3511, %v3671
        %v3673 = vpop.f32.mrb[0].mxu0
        %3674 = vmatprep.mubr.bf16.mxu0 0
        %3675 = vmatmul.mubr.bf16.gmra.mrb[0].mxu0 %v2299
        %v3676 = vpop.f32.mrb[0].mxu0
        %v3677 = vadd.f32 %v3516, %v3676
        %v3678 = vpop.f32.mrb[0].mxu0
        %v3679 = vpop.f32.mrb[0].mxu0
        %v3680 = vadd.f32 %v3519, %v3679
        %v3681 = vpop.f32.mrb[0].mxu0
        %3682 = vmatprep.mubr.bf16.mxu0 0
        %3683 = vmatmul.mubr.bf16.gmra.mrb[0].mxu0 %v2308
        %v3684 = vpop.f32.mrb[0].mxu0
        %v3685 = vadd.f32 %v3524, %v3684
        %v3686 = vpop.f32.mrb[0].mxu0
        %v3687 = vpop.f32.mrb[0].mxu0
        %v3688 = vadd.f32 %v3527, %v3687
        %v3689 = vpop.f32.mrb[0].mxu0
        %3690 = vmatprep.mubr.bf16.mxu0 0
        %3691 = vmatmul.mubr.bf16.gmra.mrb[0].mxu0 %v2317
        %v3692 = vpop.f32.mrb[0].mxu0
        %v3693 = vadd.f32 %v3532, %v3692
        %v3694 = vpop.f32.mrb[0].mxu0
        %v3695 = vpop.f32.mrb[0].mxu0
        %v3696 = vadd.f32 %v3535, %v3695
        %v3697 = vpop.f32.mrb[0].mxu0
        %3698 = vdwg.mxu0
        %v3699 = vpack.c.bf16 %v3576, %v3573
        %v3700 = vpack.c.bf16 %v3584, %v3581
        %v3701 = vpack.c.bf16 %v3592, %v3589
        %v3702 = vpack.c.bf16 %v3600, %v3597
        %v3703 = vpack.c.bf16 %v3608, %v3605
        %v3704 = vpack.c.bf16 %v3616, %v3613
        %v3705 = vpack.c.bf16 %v3624, %v3621
        %v3706 = vpack.c.bf16 %v3632, %v3629
        %v3707 = vpack.c.bf16 %v3640, %v3637
        %v3708 = vpack.c.bf16 %v3648, %v3645
        %v3709 = vpack.c.bf16 %v3656, %v3653
        %v3710 = vpack.c.bf16 %v3664, %v3661
        %v3711 = vpack.c.bf16 %v3672, %v3669
        %v3712 = vpack.c.bf16 %v3680, %v3677
        %v3713 = vpack.c.bf16 %v3688, %v3685
        %v3714 = vpack.c.bf16 %v3696, %v3693
        %v3731 = vunpack.c.l.b16 %v3699
        %v3732 = vunpack.c.h.b16 %v3699
        %v3733 = vunpack.c.l.b16 %v3700
        %v3734 = vunpack.c.h.b16 %v3700
        %v3735 = vunpack.c.l.b16 %v3701
        %v3736 = vunpack.c.h.b16 %v3701
        %v3737 = vunpack.c.l.b16 %v3702
        %v3738 = vunpack.c.h.b16 %v3702
        %v3739 = vunpack.c.l.b16 %v3703
        %v3740 = vunpack.c.h.b16 %v3703
        %v3741 = vunpack.c.l.b16 %v3704
        %v3742 = vunpack.c.h.b16 %v3704
        %v3743 = vunpack.c.l.b16 %v3705
        %v3744 = vunpack.c.h.b16 %v3705
        %v3745 = vunpack.c.l.b16 %v3706
        %v3746 = vunpack.c.h.b16 %v3706
        %v3747 = vunpack.c.l.b16 %v3707
        %v3748 = vunpack.c.h.b16 %v3707
        %v3749 = vunpack.c.l.b16 %v3708
        %v3750 = vunpack.c.h.b16 %v3708
        %v3751 = vunpack.c.l.b16 %v3709
        %v3752 = vunpack.c.h.b16 %v3709
        %v3753 = vunpack.c.l.b16 %v3710
        %v3754 = vunpack.c.h.b16 %v3710
        %v3755 = vunpack.c.l.b16 %v3711
        %v3756 = vunpack.c.h.b16 %v3711
        %v3757 = vunpack.c.l.b16 %v3712
        %v3758 = vunpack.c.h.b16 %v3712
        %v3759 = vunpack.c.l.b16 %v3713
        %v3760 = vunpack.c.h.b16 %v3713
        %v3761 = vunpack.c.l.b16 %v3714
        %v3762 = vunpack.c.h.b16 %v3714
        %v3763 = vpack.c.b16 %v3731, %v3731
        %v3764 = vpack.c.b16 %v3732, %v3732
        %v3765 = vpack.c.b16 %v3733, %v3733
        %v3766 = vpack.c.b16 %v3734, %v3734
        %v3767 = vpack.c.b16 %v3735, %v3735
        %v3768 = vpack.c.b16 %v3736, %v3736
        %v3769 = vpack.c.b16 %v3737, %v3737
        %v3770 = vpack.c.b16 %v3738, %v3738
        %v3771 = vpack.c.b16 %v3739, %v3739
        %v3772 = vpack.c.b16 %v3740, %v3740
        %v3773 = vpack.c.b16 %v3741, %v3741
        %v3774 = vpack.c.b16 %v3742, %v3742
        %v3775 = vpack.c.b16 %v3743, %v3743
        %v3776 = vpack.c.b16 %v3744, %v3744
        %v3777 = vpack.c.b16 %v3745, %v3745
        %v3778 = vpack.c.b16 %v3746, %v3746
        %v3779 = vpack.c.b16 %v3747, %v3747
        %v3780 = vpack.c.b16 %v3748, %v3748
        %v3781 = vpack.c.b16 %v3749, %v3749
        %v3782 = vpack.c.b16 %v3750, %v3750
        %v3783 = vpack.c.b16 %v3751, %v3751
        %v3784 = vpack.c.b16 %v3752, %v3752
        %v3785 = vpack.c.b16 %v3753, %v3753
        %v3786 = vpack.c.b16 %v3754, %v3754
        %v3787 = vpack.c.b16 %v3755, %v3755
        %v3788 = vpack.c.b16 %v3756, %v3756
        %v3789 = vpack.c.b16 %v3757, %v3757
        %v3790 = vpack.c.b16 %v3758, %v3758
        %v3791 = vpack.c.b16 %v3759, %v3759
        %v3792 = vpack.c.b16 %v3760, %v3760
        %v3793 = vpack.c.b16 %v3761, %v3761
        %v3794 = vpack.c.b16 %v3762, %v3762
        %3827 = vst [vmem:[%s313] sm:$0xf] %v3763
        %3828 = vst [vmem:[%s313 + $0x4] sm:$0xf] %v3764
        %3829 = vst [vmem:[%s313 + $0x8] sm:$0xf] %v3765
        %3830 = vst [vmem:[%s313 + $0xc] sm:$0xf] %v3766
        %3831 = vst [vmem:[%s313 + $0x10] sm:$0xf] %v3767
        %3832 = vst [vmem:[%s313 + $0x14] sm:$0xf] %v3768
        %3833 = vst [vmem:[%s313 + $0x18] sm:$0xf] %v3769
        %3834 = vst [vmem:[%s313 + $0x1c] sm:$0xf] %v3770
        %3835 = vst [vmem:[%s313 + $0x20] sm:$0xf] %v3771
        %3836 = vst [vmem:[%s313 + $0x24] sm:$0xf] %v3772
        %3837 = vst [vmem:[%s313 + $0x28] sm:$0xf] %v3773
        %3838 = vst [vmem:[%s313 + $0x2c] sm:$0xf] %v3774
        %3839 = vst [vmem:[%s313 + $0x30] sm:$0xf] %v3775
        %3840 = vst [vmem:[%s313 + $0x34] sm:$0xf] %v3776
        %3841 = vst [vmem:[%s313 + $0x38] sm:$0xf] %v3777
        %3842 = vst [vmem:[%s313 + $0x3c] sm:$0xf] %v3778
        %3843 = vst [vmem:[%s313 + $0x40] sm:$0xf] %v3779
        %3844 = vst [vmem:[%s313 + $0x44] sm:$0xf] %v3780
        %3845 = vst [vmem:[%s313 + $0x48] sm:$0xf] %v3781
        %3846 = vst [vmem:[%s313 + $0x4c] sm:$0xf] %v3782
        %3847 = vst [vmem:[%s313 + $0x50] sm:$0xf] %v3783
        %3848 = vst [vmem:[%s313 + $0x54] sm:$0xf] %v3784
        %3849 = vst [vmem:[%s313 + $0x58] sm:$0xf] %v3785
        %3850 = vst [vmem:[%s313 + $0x5c] sm:$0xf] %v3786
        %3851 = vst [vmem:[%s313 + $0x60] sm:$0xf] %v3787
        %3852 = vst [vmem:[%s313 + $0x64] sm:$0xf] %v3788
        %3853 = vst [vmem:[%s313 + $0x68] sm:$0xf] %v3789
        %3854 = vst [vmem:[%s313 + $0x6c] sm:$0xf] %v3790
        %3855 = vst [vmem:[%s313 + $0x70] sm:$0xf] %v3791
        %3856 = vst [vmem:[%s313 + $0x74] sm:$0xf] %v3792
        %3857 = vst [vmem:[%s313 + $0x78] sm:$0xf] %v3793
        %3858 = vst [vmem:[%s313 + $0x7c] sm:$0xf] %v3794
        %v3859 = vunpack.c.l.bf16 %v3699
        %v3860 = vunpack.c.h.bf16 %v3699
        %v3861 = vunpack.c.l.bf16 %v3700
        %v3862 = vunpack.c.h.bf16 %v3700
        %v3863 = vunpack.c.l.bf16 %v3701
        %v3864 = vunpack.c.h.bf16 %v3701
        %v3865 = vunpack.c.l.bf16 %v3702
        %v3866 = vunpack.c.h.bf16 %v3702
        %v3867 = vunpack.c.l.bf16 %v3703
        %v3868 = vunpack.c.h.bf16 %v3703
        %v3869 = vunpack.c.l.bf16 %v3704
        %v3870 = vunpack.c.h.bf16 %v3704
        %v3871 = vunpack.c.l.bf16 %v3705
        %v3872 = vunpack.c.h.bf16 %v3705
        %v3873 = vunpack.c.l.bf16 %v3706
        %v3874 = vunpack.c.h.bf16 %v3706
        %v3875 = vunpack.c.l.bf16 %v3707
        %v3876 = vunpack.c.h.bf16 %v3707
        %v3877 = vunpack.c.l.bf16 %v3708
        %v3878 = vunpack.c.h.bf16 %v3708
        %v3879 = vunpack.c.l.bf16 %v3709
        %v3880 = vunpack.c.h.bf16 %v3709
        %v3881 = vunpack.c.l.bf16 %v3710
        %v3882 = vunpack.c.h.bf16 %v3710
        %v3883 = vunpack.c.l.bf16 %v3711
        %v3884 = vunpack.c.h.bf16 %v3711
        %v3885 = vunpack.c.l.bf16 %v3712
        %v3886 = vunpack.c.h.bf16 %v3712
        %v3887 = vunpack.c.l.bf16 %v3713
        %v3888 = vunpack.c.h.bf16 %v3713
        %v3889 = vunpack.c.l.bf16 %v3714
        %v3890 = vunpack.c.h.bf16 %v3714
        %v3891 = vadd.f32 %v3859, %v3860
        %v3892 = vadd.f32 %v3891, %v3861
        %v3893 = vadd.f32 %v3892, %v3862
        %v3894 = vadd.f32 %v3893, %v3863
        %v3895 = vadd.f32 %v3894, %v3864
        %v3896 = vadd.f32 %v3895, %v3865
        %v3897 = vadd.f32 %v3896, %v3866
        %v3898 = vadd.f32 %v3897, %v3867
        %v3899 = vadd.f32 %v3898, %v3868
        %v3900 = vadd.f32 %v3899, %v3869
        %v3901 = vadd.f32 %v3900, %v3870
        %v3902 = vadd.f32 %v3901, %v3871
        %v3903 = vadd.f32 %v3902, %v3872
        %v3904 = vadd.f32 %v3903, %v3873
        %v3905 = vadd.f32 %v3904, %v3874
        %v3906 = vadd.f32 %v3905, %v3875
        %v3907 = vadd.f32 %v3906, %v3876
        %v3908 = vadd.f32 %v3907, %v3877
        %v3909 = vadd.f32 %v3908, %v3878
        %v3910 = vadd.f32 %v3909, %v3879
        %v3911 = vadd.f32 %v3910, %v3880
        %v3912 = vadd.f32 %v3911, %v3881
        %v3913 = vadd.f32 %v3912, %v3882
        %v3914 = vadd.f32 %v3913, %v3883
        %v3915 = vadd.f32 %v3914, %v3884
        %v3916 = vadd.f32 %v3915, %v3885
        %v3917 = vadd.f32 %v3916, %v3886
        %v3918 = vadd.f32 %v3917, %v3887
        %v3919 = vadd.f32 %v3918, %v3888
        %v3920 = vadd.f32 %v3919, %v3889
        %v3921 = vadd.f32 %v3920, %v3890
        %v3922 = vrot.slane %v3921, 4
        %v3923 = vadd.f32 %v3921, %v3922
        %v3924 = vrot.slane %v3923, 2
        %v3925 = vadd.f32 %v3923, %v3924
        %v3926 = vrot.slane %v3925, 1
        %v3927 = vadd.f32 %v3925, %v3926
        %3928 = vst [vmem:[%s319] sm:$0x1] %v3927
        %v3929 = vmul.f32 %v3859, %v3859
        %v3930 = vmul.f32 %v3860, %v3860
        %v3931 = vmul.f32 %v3861, %v3861
        %v3932 = vmul.f32 %v3862, %v3862
        %v3933 = vmul.f32 %v3863, %v3863
        %v3934 = vmul.f32 %v3864, %v3864
        %v3935 = vmul.f32 %v3865, %v3865
        %v3936 = vmul.f32 %v3866, %v3866
        %v3937 = vmul.f32 %v3867, %v3867
        %v3938 = vmul.f32 %v3868, %v3868
        %v3939 = vmul.f32 %v3869, %v3869
        %v3940 = vmul.f32 %v3870, %v3870
        %v3941 = vmul.f32 %v3871, %v3871
        %v3942 = vmul.f32 %v3872, %v3872
        %v3943 = vmul.f32 %v3873, %v3873
        %v3944 = vmul.f32 %v3874, %v3874
        %v3945 = vmul.f32 %v3875, %v3875
        %v3946 = vmul.f32 %v3876, %v3876
        %v3947 = vmul.f32 %v3877, %v3877
        %v3948 = vmul.f32 %v3878, %v3878
        %v3949 = vmul.f32 %v3879, %v3879
        %v3950 = vmul.f32 %v3880, %v3880
        %v3951 = vmul.f32 %v3881, %v3881
        %v3952 = vmul.f32 %v3882, %v3882
        %v3953 = vmul.f32 %v3883, %v3883
        %v3954 = vmul.f32 %v3884, %v3884
        %v3955 = vmul.f32 %v3885, %v3885
        %v3956 = vmul.f32 %v3886, %v3886
        %v3957 = vmul.f32 %v3887, %v3887
        %v3958 = vmul.f32 %v3888, %v3888
        %v3959 = vmul.f32 %v3889, %v3889
        %v3960 = vmul.f32 %v3890, %v3890
        %v3961 = vadd.f32 %v3929, %v3930
        %v3962 = vadd.f32 %v3961, %v3931
        %v3963 = vadd.f32 %v3962, %v3932
        %v3964 = vadd.f32 %v3963, %v3933
        %v3965 = vadd.f32 %v3964, %v3934
        %v3966 = vadd.f32 %v3965, %v3935
        %v3967 = vadd.f32 %v3966, %v3936
        %v3968 = vadd.f32 %v3967, %v3937
        %v3969 = vadd.f32 %v3968, %v3938
        %v3970 = vadd.f32 %v3969, %v3939
        %v3971 = vadd.f32 %v3970, %v3940
        %v3972 = vadd.f32 %v3971, %v3941
        %v3973 = vadd.f32 %v3972, %v3942
        %v3974 = vadd.f32 %v3973, %v3943
        %v3975 = vadd.f32 %v3974, %v3944
        %v3976 = vadd.f32 %v3975, %v3945
        %v3977 = vadd.f32 %v3976, %v3946
        %v3978 = vadd.f32 %v3977, %v3947
        %v3979 = vadd.f32 %v3978, %v3948
        %v3980 = vadd.f32 %v3979, %v3949
        %v3981 = vadd.f32 %v3980, %v3950
        %v3982 = vadd.f32 %v3981, %v3951
        %v3983 = vadd.f32 %v3982, %v3952
        %v3984 = vadd.f32 %v3983, %v3953
        %v3985 = vadd.f32 %v3984, %v3954
        %v3986 = vadd.f32 %v3985, %v3955
        %v3987 = vadd.f32 %v3986, %v3956
        %v3988 = vadd.f32 %v3987, %v3957
        %v3989 = vadd.f32 %v3988, %v3958
        %v3990 = vadd.f32 %v3989, %v3959
        %v3991 = vadd.f32 %v3990, %v3960
        %v3992 = vrot.slane %v3991, 4
        %v3993 = vadd.f32 %v3991, %v3992
        %v3994 = vrot.slane %v3993, 2
        %v3995 = vadd.f32 %v3993, %v3994
        %v3996 = vrot.slane %v3995, 1
        %v3997 = vadd.f32 %v3995, %v3996
        %3998 = vst [vmem:[%s325] sm:$0x1] %v3997
        %s3999 = sand.u32 %s126, 1
        %s4000 = scalar_lea.sflag [#allocation6], %s3999
        %s4001 = sand.u32 %s126, 1
        %s4002 = smul.addr %s4001, 128
        %s4003 = scalar_lea.vmem [#allocation12], %s4002
        %s4004 = sand.u32 %s29, 1
        %s4005 = scalar_lea.sflag [#allocation14], %s4004
        %s4006 = sand.u32 %s152, 1
        %s4007 = scalar_lea.vmem [#allocation13], %s4006
        %s4008 = sand.u32 %s29, 1
        %s4009 = scalar_lea.sflag [#allocation14], %s4008
        %s4010 = sand.u32 %s178, 1
        %s4011 = scalar_lea.vmem [#allocation15], %s4010
        // Predicated region
        $region53: #{_double_conv.4} parent=35 // pred_check
          %p4012 = pneg %p136
        $region54: #{_double_conv.4} parent=35 // pred_check_branch
          %4014 = sbr.rel (%p4012) target = $region56
        $region55: #{_double_conv.4} parent=35 // pred_region
          %s4016 = ssub.s32 2048, 2048
          %4017 = vsyncadd %s4000, %s4016
          %s4018 = smul.addr %s29, 32
          %s4019 = smul.addr %s4018, 64
          %s4020 = scalar_lea.hbm %s4, %s4019
          %s4021 = sshll.u32 %s4003, 4
          %s4022 = int_to_ptr.vmem [resolvable:$true] %s4021
          %4027 = dma.vmem_to_hbm [thread:$0]  %s4022, 2048, %s4020, %s4000, 64, 64, 4
        $region56: #{_double_conv.4} parent=35 // pred_fallthru
          _
        // Predicated region
        $region57: #{_double_conv.4} parent=35 // pred_check
          %p4028 = pneg %p162
        $region58: #{_double_conv.4} parent=35 // pred_check_branch
          %4030 = sbr.rel (%p4028) target = $region60
        $region59: #{_double_conv.4} parent=35 // pred_region
          %s4032 = ssub.s32 16, 16
          %4033 = vsyncadd %s4005, %s4032
          %s4034 = smul.addr %s29, 16
          %s4035 = scalar_lea.hbm %s5, %s4034
          %s4037 = sshll.u32 %s4007, 4
          %s4038 = int_to_ptr.vmem [resolvable:$true] %s4037
          %4040 = dma.vmem_to_hbm [thread:$0]  %s4038, 16, %s4035, %s4005
        $region60: #{_double_conv.4} parent=35 // pred_fallthru
          _
        // Predicated region
        $region61: #{_double_conv.4} parent=35 // pred_check
          %p4041 = pneg %p188
        $region62: #{_double_conv.4} parent=35 // pred_check_branch
          %4043 = sbr.rel (%p4041) target = $region64
        $region63: #{_double_conv.4} parent=35 // pred_region
          %s4045 = ssub.s32 16, 16
          %4046 = vsyncadd %s4009, %s4045
          %s4047 = smul.addr %s29, 16
          %s4048 = scalar_lea.hbm %s6, %s4047
          %s4050 = sshll.u32 %s4011, 4
          %s4051 = int_to_ptr.vmem [resolvable:$true] %s4050
          %4053 = dma.vmem_to_hbm [thread:$0]  %s4051, 16, %s4048, %s4009
        $region64: #{_double_conv.4} parent=35 // pred_fallthru
          _
      $region36: #{_double_conv.4} parent=5 // pred_fallthru
        _
      %p4054 = scmp.le.s32.totalorder 2, %s24
      // Predicated region
      $region65: #{_double_conv.4} parent=5 // pred_check
        %p4055 = pneg %p4054
      $region66: #{_double_conv.4} parent=5 // pred_check_branch
        %4057 = sbr.rel (%p4055) target = $region68
      $region67: #{_double_conv.4} parent=5 // pred_region
        %s4058 = ssub.s32 %s24, 2
        // Predicated region
        $region69: #{_double_conv.4} parent=67 // pred_check
          %p4059 = pneg %p142
        $region70: #{_double_conv.4} parent=67 // pred_check_branch
          %4061 = sbr.rel (%p4059) target = $region72
        $region71: #{_double_conv.4} parent=67 // pred_region
          %s4062 = sand.u32 %s127, 1
          %s4063 = scalar_lea.sflag [#allocation6], %s4062
          %s4064 = sand.u32 %s127, 1
          %s4065 = smul.addr %s4064, 128
          %s4066 = scalar_lea.vmem [#allocation12], %s4065
          %4067 = dma.done %s4063, 2048
        $region72: #{_double_conv.4} parent=67 // pred_fallthru
          _
        // Predicated region
        $region73: #{_double_conv.4} parent=67 // pred_check
          %p4068 = pneg %p168
        $region74: #{_double_conv.4} parent=67 // pred_check_branch
          %4070 = sbr.rel (%p4068) target = $region76
        $region75: #{_double_conv.4} parent=67 // pred_region
          %s4071 = sand.u32 %s30, 1
          %s4072 = scalar_lea.sflag [#allocation14], %s4071
          %s4073 = sand.u32 %s153, 1
          %s4074 = scalar_lea.vmem [#allocation13], %s4073
          %4075 = dma.done %s4072, 16
        $region76: #{_double_conv.4} parent=67 // pred_fallthru
          _
        // Predicated region
        $region77: #{_double_conv.4} parent=67 // pred_check
          %p4076 = pneg %p194
        $region78: #{_double_conv.4} parent=67 // pred_check_branch
          %4078 = sbr.rel (%p4076) target = $region80
        $region79: #{_double_conv.4} parent=67 // pred_region
          %s4079 = sand.u32 %s30, 1
          %s4080 = scalar_lea.sflag [#allocation14], %s4079
          %s4081 = sand.u32 %s179, 1
          %s4082 = scalar_lea.vmem [#allocation15], %s4081
          %4083 = dma.done %s4080, 16
        $region80: #{_double_conv.4} parent=67 // pred_fallthru
          _
      $region68: #{_double_conv.4} parent=5 // pred_fallthru
        _
    $region6: #{_double_conv.4} parent=1 // loop_footer
      %s28 = sadd.s32 1, %s24
    $region7: #{_double_conv.4} parent=1 // loop_footer_branch
      %23 = sbr.rel target = $region3
    $region8: #{_double_conv.4} parent=1 // loop_exit
      _
    %4084 = vsyncpa [#allocation5], 1
    %s4085 = scalar_lea.sflag [#allocation5], 1
    %4086 = vsyncpa %s4085, 1
    %4087 = vsyncpa [#allocation8], 1
    %4088 = vsyncpa [#allocation11], 1
    %4089 = vsyncpa [#allocation6], 1
    %s4090 = scalar_lea.sflag [#allocation6], 1
    %4091 = vsyncpa %s4090, 1
    %4092 = vsyncpa [#allocation14], 1
    %s4093 = scalar_lea.sflag [#allocation14], 1
    %4094 = vsyncpa %s4093, 1

</llo_original>
